<compile_context>
chip_gen: v7x
topology: tpu7x:2x2x1
jax: 0.10.0
libtpu: 0.0.40
codegen_flags: <defaults>
</compile_context>

<pallas_src>
import functools
import math

import jax
import jax.numpy as jnp
import numpy as np
from jax.experimental import pallas as pl
from jax.experimental.pallas import tpu as pltpu  # noqa: F401  (kept for TPU-specific tuning hooks)

D_MODEL = 32
NHEAD = 4
DIM_FF = 64
HEAD_DIM = D_MODEL // NHEAD
LN_EPS = 1e-5

# Kernel-side parameter order (matches the kernel signature).
_PARAM_ORDER = (
    'sa_wq', 'sa_wk', 'sa_wv', 'sa_bq', 'sa_bk', 'sa_bv', 'sa_wo', 'sa_bo',
    'ca_wq', 'ca_wk', 'ca_wv', 'ca_bq', 'ca_bk', 'ca_bv', 'ca_wo', 'ca_bo',
    'w1t', 'b1', 'w2t', 'b2',
    'g1', 'be1', 'g2', 'be2', 'g3', 'be3',
)


# ----------------------------------------------------------------------------
# In-kernel helpers (operate on values / refs, everything stays in VMEM)
# ----------------------------------------------------------------------------
def _batch_mask(nq, nk, batch):
    """True where query row and key row belong to the same batch element.

    Rows are the flattened (seq, batch) axis: row = t * batch + b.
    """
    if batch == 1:
        return None
    qb = jax.lax.broadcasted_iota(jnp.int32, (nq, nk), 0) % batch
    kb = jax.lax.broadcasted_iota(jnp.int32, (nq, nk), 1) % batch
    return qb == kb


def _mha_block(xq, xk, xv, wq_ref, wk_ref, wv_ref, bq_ref, bk_ref, bv_ref,
               wo_ref, bo_ref, mask):
    """Multi-head attention on flattened (rows, D) activations.

    Host-prepared weights (no in-kernel slicing / transposes):
      wq/wk/wv : (NHEAD, D, HEAD_DIM)  already transposed  -> qh = xq @ wq[h]
      bq/bk/bv : (NHEAD, 1, HEAD_DIM)
      wo       : (NHEAD, HEAD_DIM, D)  already transposed
      bo       : (1, D)
    """
    scale = 1.0 / math.sqrt(HEAD_DIM)
    out = jnp.zeros((xq.shape[0], D_MODEL), jnp.float32)
    for h in range(NHEAD):  # static unroll (NHEAD = 4)
        qh = jnp.dot(xq, wq_ref[h], preferred_element_type=jnp.float32) + bq_ref[h]
        kh = jnp.dot(xk, wk_ref[h], preferred_element_type=jnp.float32) + bk_ref[h]
        vh = jnp.dot(xv, wv_ref[h], preferred_element_type=jnp.float32) + bv_ref[h]
        # Contract last dims of both operands: Q @ K^T without an explicit transpose.
        s = jax.lax.dot_general(qh, kh, (((1,), (1,)), ((), ())),
                                preferred_element_type=jnp.float32) * scale
        if mask is not None:
            s = jnp.where(mask, s, -jnp.inf)
        s = s - jnp.max(s, axis=-1, keepdims=True)
        p = jnp.exp(s)
        # Softmax denominator on the EUP (approximate reciprocal -> free slot).
        p = p * pl.reciprocal(jnp.sum(p, axis=-1, keepdims=True), approx=True)
        oh = jnp.dot(p, vh, preferred_element_type=jnp.float32)
        # cat(heads) @ Wo.T == sum_h head_h @ Wo_h  (Wo_h pre-sliced + pre-transposed)
        out = out + jnp.dot(oh, wo_ref[h], preferred_element_type=jnp.float32)
    return out + bo_ref[...]


def _add_ln(x, y, g_ref, b_ref):
    """Residual add + LayerNorm over the last dim (no runtime divides)."""
    z = x + y
    mu = jnp.sum(z, axis=-1, keepdims=True) * (1.0 / D_MODEL)
    zc = z - mu
    var = jnp.sum(zc * zc, axis=-1, keepdims=True) * (1.0 / D_MODEL)
    return zc * jax.lax.rsqrt(var + LN_EPS) * g_ref[...] + b_ref[...]


# ----------------------------------------------------------------------------
# Fused kernel: the whole decoder layer in one pallas_call
# ----------------------------------------------------------------------------
def _interactor_kernel(
        tgt_ref, mem_ref, qpos_ref, pos_ref,
        sa_wq, sa_wk, sa_wv, sa_bq, sa_bk, sa_bv, sa_wo, sa_bo,
        ca_wq, ca_wk, ca_wv, ca_bq, ca_bk, ca_bv, ca_wo, ca_bo,
        w1t_ref, b1_ref, w2t_ref, b2_ref,
        g1_ref, be1_ref, g2_ref, be2_ref, g3_ref, be3_ref,
        out_ref, *, batch):
    tgt = tgt_ref[...].astype(jnp.float32)     # (T*B, D), rows interleaved t*B+b
    mem = mem_ref[...].astype(jnp.float32)     # (S*B, D)
    qpos = qpos_ref[...].astype(jnp.float32)
    pos = pos_ref[...].astype(jnp.float32)

    nq, nk = tgt.shape[0], mem.shape[0]
    self_mask = _batch_mask(nq, nq, batch)
    cross_mask = _batch_mask(nq, nk, batch)

    # --- self attention + add & norm ---
    qk = tgt + qpos
    t2 = _mha_block(qk, qk, tgt,
                    sa_wq, sa_wk, sa_wv, sa_bq, sa_bk, sa_bv, sa_wo, sa_bo,
                    self_mask)
    x = _add_ln(tgt, t2, g1_ref, be1_ref)

    # --- cross attention + add & norm ---
    t2 = _mha_block(x + qpos, mem + pos, mem,
                    ca_wq, ca_wk, ca_wv, ca_bq, ca_bk, ca_bv, ca_wo, ca_bo,
                    cross_mask)
    x = _add_ln(x, t2, g2_ref, be2_ref)

    # --- feed forward + add & norm ---
    h = jnp.dot(x, w1t_ref[...], preferred_element_type=jnp.float32) + b1_ref[...]
    h = jnp.maximum(h, 0.0)
    t2 = jnp.dot(h, w2t_ref[...], preferred_element_type=jnp.float32) + b2_ref[...]
    x = _add_ln(x, t2, g3_ref, be3_ref)

    out_ref[...] = x.astype(out_ref.dtype)


# ----------------------------------------------------------------------------
# Wrapper
# ----------------------------------------------------------------------------
def interactor_forward(kp, tgt, memory, pos=None, query_pos=None):
    """tgt: (T, B, D), memory: (S, B, D) -> (T, B, D)  (PyTorch MHA layout).

    Single fused pallas_call; the (T,B,D)->(T*B,D) reshapes are free
    (contiguous, metadata-only) and replace the old per-call transposes.
    """
    T, B, D = tgt.shape
    S = memory.shape[0]
    tgt_f = tgt.reshape(T * B, D)
    mem_f = memory.reshape(S * B, D)
    qpos_f = jnp.zeros_like(tgt_f) if query_pos is None else query_pos.reshape(T * B, D)
    pos_f = jnp.zeros_like(mem_f) if pos is None else pos.reshape(S * B, D)

    operands = (tgt_f, mem_f, qpos_f, pos_f) + tuple(kp[n] for n in _PARAM_ORDER)

    # Advisory cost estimate so XLA schedules the custom call tightly.
    nq, nk = T * B, S * B
    flops = (8 * nq * D * D + 4 * nq * nq * D                 # self-attn
             + 4 * nq * D * D + 4 * nk * D * D + 4 * nq * nk * D  # cross-attn
             + 4 * nq * D * DIM_FF                            # FFN
             + 40 * nq * D)                                   # residuals / LNs
    transcendentals = NHEAD * (nq * nq + nq * nk) + 6 * nq
    bytes_accessed = (sum(int(np.prod(a.shape)) * a.dtype.itemsize for a in operands)
                      + nq * D * tgt.dtype.itemsize)

    # NOTE: no grid -> no pipelining overhead; all operands land in VMEM once.
    # TODO(synk): output last dim is D=32 (<128 lanes); a lane-dense (1, T*B*D)
    # slab would need an in-VMEM relayout that costs more than the single
    # masked store it saves at these shapes, so it is intentionally skipped.
    out = pl.pallas_call(
        functools.partial(_interactor_kernel, batch=B),
        out_shape=jax.ShapeDtypeStruct((T * B, D), tgt.dtype),
        cost_estimate=pl.CostEstimate(flops=flops,
                                      transcendentals=transcendentals,
                                      bytes_accessed=bytes_accessed),
    )(*operands)
    return out.reshape(T, B, D)


# ----------------------------------------------------------------------------
# One-time host-side parameter re-layout (hoisted out of the hot path)
# ----------------------------------------------------------------------------
def prepare_params(p):
    def heads_in(w):   # (D, D) -> (NHEAD, D, HEAD_DIM), pre-transposed
        return jnp.stack([w[h * HEAD_DIM:(h + 1) * HEAD_DIM, :].T
                          for h in range(NHEAD)], axis=0)

    def heads_b(b):    # (D,) -> (NHEAD, 1, HEAD_DIM)
        return b.reshape(NHEAD, 1, HEAD_DIM)

    def heads_out(w):  # (D, D) -> (NHEAD, HEAD_DIM, D), pre-sliced + transposed
        return jnp.stack([w[:, h * HEAD_DIM:(h + 1) * HEAD_DIM].T
                          for h in range(NHEAD)], axis=0)

    kp = {}
    for pre in ('sa', 'ca'):
        kp[f'{pre}_wq'] = heads_in(p[f'{pre}_wq'])
        kp[f'{pre}_wk'] = heads_in(p[f'{pre}_wk'])
        kp[f'{pre}_wv'] = heads_in(p[f'{pre}_wv'])
        kp[f'{pre}_bq'] = heads_b(p[f'{pre}_bq'])
        kp[f'{pre}_bk'] = heads_b(p[f'{pre}_bk'])
        kp[f'{pre}_bv'] = heads_b(p[f'{pre}_bv'])
        kp[f'{pre}_wo'] = heads_out(p[f'{pre}_wo'])
        kp[f'{pre}_bo'] = p[f'{pre}_bo'].reshape(1, D_MODEL)
    kp['w1t'] = p['w1'].T                      # (D, FF)
    kp['b1'] = p['b1'].reshape(1, DIM_FF)
    kp['w2t'] = p['w2'].T                      # (FF, D)
    kp['b2'] = p['b2'].reshape(1, D_MODEL)
    for i in (1, 2, 3):
        kp[f'g{i}'] = p[f'g{i}'].reshape(1, D_MODEL)
        kp[f'be{i}'] = p[f'be{i}'].reshape(1, D_MODEL)
    return kp


# ----------------------------------------------------------------------------
# Pure-JAX reference (for correctness check)
# ----------------------------------------------------------------------------
def _mha_ref(q, k, v, wq, wk, wv, bq, bk, bv, wo, bo):
    B, T, D = q.shape
    S = k.shape[1]
    Q = q @ wq.T + bq
    K = k @ wk.T + bk
    V = v @ wv.T + bv
    Qh = Q.reshape(B, T, NHEAD, HEAD_DIM).transpose(0, 2, 1, 3)
    Kh = K.reshape(B, S, NHEAD, HEAD_DIM).transpose(0, 2, 1, 3)
    Vh = V.reshape(B, S, NHEAD, HEAD_DIM).transpose(0, 2, 1, 3)
    s = jnp.einsum('bhtd,bhsd->bhts', Qh, Kh) / math.sqrt(HEAD_DIM)
    a = jax.nn.softmax(s, axis=-1)
    o = jnp.einsum('bhts,bhsd->bhtd', a, Vh)
    o = o.transpose(0, 2, 1, 3).reshape(B, T, D)
    return o @ wo.T + bo


def _add_ln_ref(x, y, g, b):
    z = x + y
    mu = jnp.mean(z, axis=-1, keepdims=True)
    var = jnp.mean((z - mu) ** 2, axis=-1, keepdims=True)
    return (z - mu) * jax.lax.rsqrt(var + LN_EPS) * g + b


def interactor_ref(p, tgt, memory, pos=None, query_pos=None):
    tgt_b = jnp.transpose(tgt, (1, 0, 2))
    mem_b = jnp.transpose(memory, (1, 0, 2))
    qpos_b = None if query_pos is None else jnp.transpose(query_pos, (1, 0, 2))
    pos_b = None if pos is None else jnp.transpose(pos, (1, 0, 2))
    wpe = lambda x, pe: x if pe is None else x + pe

    q = k = wpe(tgt_b, qpos_b)
    t2 = _mha_ref(q, k, tgt_b, p['sa_wq'], p['sa_wk'], p['sa_wv'],
                  p['sa_bq'], p['sa_bk'], p['sa_bv'], p['sa_wo'], p['sa_bo'])
    x = _add_ln_ref(tgt_b, t2, p['g1'], p['be1'])

    t2 = _mha_ref(wpe(x, qpos_b), wpe(mem_b, pos_b), mem_b,
                  p['ca_wq'], p['ca_wk'], p['ca_wv'],
                  p['ca_bq'], p['ca_bk'], p['ca_bv'], p['ca_wo'], p['ca_bo'])
    x = _add_ln_ref(x, t2, p['g2'], p['be2'])

    h = jnp.maximum(x @ p['w1'].T + p['b1'], 0.0)
    t2 = h @ p['w2'].T + p['b2']
    x = _add_ln_ref(x, t2, p['g3'], p['be3'])
    return jnp.transpose(x, (1, 0, 2))


# ----------------------------------------------------------------------------
# Deterministic parameter init (synthetic; matches nn.Module shapes)
# ----------------------------------------------------------------------------
def init_params(key):
    ks = jax.random.split(key, 10)
    w = lambda k, shape: 0.05 * jax.random.normal(k, shape, jnp.float32)
    p = {}
    sa_w = w(ks[0], (3 * D_MODEL, D_MODEL))
    sa_b = w(ks[1], (3 * D_MODEL,))
    p['sa_wq'], p['sa_wk'], p['sa_wv'] = jnp.split(sa_w, 3, axis=0)
    p['sa_bq'], p['sa_bk'], p['sa_bv'] = jnp.split(sa_b, 3)
    p['sa_wo'] = w(ks[2], (D_MODEL, D_MODEL))
    p['sa_bo'] = w(ks[3], (D_MODEL,))
    ca_w = w(ks[4], (3 * D_MODEL, D_MODEL))
    ca_b = w(ks[5], (3 * D_MODEL,))
    p['ca_wq'], p['ca_wk'], p['ca_wv'] = jnp.split(ca_w, 3, axis=0)
    p['ca_bq'], p['ca_bk'], p['ca_bv'] = jnp.split(ca_b, 3)
    p['ca_wo'] = w(ks[6], (D_MODEL, D_MODEL))
    p['ca_bo'] = w(ks[7], (D_MODEL,))
    p['w1'] = w(ks[8], (DIM_FF, D_MODEL)); p['b1'] = jnp.zeros((DIM_FF,), jnp.float32)
    p['w2'] = w(ks[9], (D_MODEL, DIM_FF)); p['b2'] = jnp.zeros((D_MODEL,), jnp.float32)
    for i in (1, 2, 3):
        p[f'g{i}'] = jnp.ones((D_MODEL,), jnp.float32)
        p[f'be{i}'] = jnp.zeros((D_MODEL,), jnp.float32)
    return p


if __name__ == "__main__":
    key = jax.random.PRNGKey(0)
    k_p, k_t, k_m, k_qp, k_pos = jax.random.split(key, 5)

    T, S, B = 8, 12, 2
    raw_params = init_params(k_p)
    kparams = prepare_params(raw_params)   # one-time host-side weight re-layout
    tgt = jax.random.normal(k_t, (T, B, D_MODEL), jnp.float32)
    memory = jax.random.normal(k_m, (S, B, D_MODEL), jnp.float32)
    query_pos = jax.random.normal(k_qp, (T, B, D_MODEL), jnp.float32)
    pos = jax.random.normal(k_pos, (S, B, D_MODEL), jnp.float32)

    fwd = jax.jit(interactor_forward)
    out = jax.block_until_ready(fwd(kparams, tgt, memory, pos, query_pos))

    ref = interactor_ref(raw_params, tgt, memory, pos=pos, query_pos=query_pos)
    # Tolerance 2e-3: softmax denominator uses the EUP approximate reciprocal.
    np.testing.assert_allclose(np.asarray(out), np.asarray(ref),
                               rtol=2e-3, atol=2e-3)
    print("KERNEL_OK")
</pallas_src>

<mosaic_0001>
module attributes {stable_mosaic.version = 11 : i64} {
  func.func @_interactor_kernel(%arg0: memref<16x32xf32, #tpu.memory_space<vmem>>, %arg1: memref<24x32xf32, #tpu.memory_space<vmem>>, %arg2: memref<16x32xf32, #tpu.memory_space<vmem>>, %arg3: memref<24x32xf32, #tpu.memory_space<vmem>>, %arg4: memref<4x32x8xf32, #tpu.memory_space<vmem>>, %arg5: memref<4x32x8xf32, #tpu.memory_space<vmem>>, %arg6: memref<4x32x8xf32, #tpu.memory_space<vmem>>, %arg7: memref<4x1x8xf32, #tpu.memory_space<vmem>>, %arg8: memref<4x1x8xf32, #tpu.memory_space<vmem>>, %arg9: memref<4x1x8xf32, #tpu.memory_space<vmem>>, %arg10: memref<4x8x32xf32, #tpu.memory_space<vmem>>, %arg11: memref<1x32xf32, #tpu.memory_space<vmem>>, %arg12: memref<4x32x8xf32, #tpu.memory_space<vmem>>, %arg13: memref<4x32x8xf32, #tpu.memory_space<vmem>>, %arg14: memref<4x32x8xf32, #tpu.memory_space<vmem>>, %arg15: memref<4x1x8xf32, #tpu.memory_space<vmem>>, %arg16: memref<4x1x8xf32, #tpu.memory_space<vmem>>, %arg17: memref<4x1x8xf32, #tpu.memory_space<vmem>>, %arg18: memref<4x8x32xf32, #tpu.memory_space<vmem>>, %arg19: memref<1x32xf32, #tpu.memory_space<vmem>>, %arg20: memref<32x64xf32, #tpu.memory_space<vmem>>, %arg21: memref<1x64xf32, #tpu.memory_space<vmem>>, %arg22: memref<64x32xf32, #tpu.memory_space<vmem>>, %arg23: memref<1x32xf32, #tpu.memory_space<vmem>>, %arg24: memref<1x32xf32, #tpu.memory_space<vmem>>, %arg25: memref<1x32xf32, #tpu.memory_space<vmem>>, %arg26: memref<1x32xf32, #tpu.memory_space<vmem>>, %arg27: memref<1x32xf32, #tpu.memory_space<vmem>>, %arg28: memref<1x32xf32, #tpu.memory_space<vmem>>, %arg29: memref<1x32xf32, #tpu.memory_space<vmem>>, %arg30: memref<16x32xf32, #tpu.memory_space<vmem>>) attributes {dimension_semantics = [], scalar_prefetch = 0 : i64, scratch_operands = 0 : i64, tpu.core_type = #tpu.core_type<tc>} {
    %c0 = arith.constant 0 : index
    %c0_0 = arith.constant 0 : index
    %0 = vector.load %arg0[%c0, %c0_0] : memref<16x32xf32, #tpu.memory_space<vmem>>, vector<16x32xf32>
    %c0_1 = arith.constant 0 : index
    %c0_2 = arith.constant 0 : index
    %1 = vector.load %arg1[%c0_1, %c0_2] : memref<24x32xf32, #tpu.memory_space<vmem>>, vector<24x32xf32>
    %c0_3 = arith.constant 0 : index
    %c0_4 = arith.constant 0 : index
    %2 = vector.load %arg2[%c0_3, %c0_4] : memref<16x32xf32, #tpu.memory_space<vmem>>, vector<16x32xf32>
    %c0_5 = arith.constant 0 : index
    %c0_6 = arith.constant 0 : index
    %3 = vector.load %arg3[%c0_5, %c0_6] : memref<24x32xf32, #tpu.memory_space<vmem>>, vector<24x32xf32>
    %4 = tpu.iota {dimensions = array<i32: 0>} : vector<16x16xi32>
    %c2_i32 = arith.constant 2 : i32
    %c0_i32 = arith.constant 0 : i32
    %5 = arith.cmpi eq, %c2_i32, %c0_i32 : i32
    %c1_i32 = arith.constant 1 : i32
    %6 = arith.select %5, %c1_i32, %c2_i32 : i32
    %7 = vector.broadcast %6 : i32 to vector<16x16xi32>
    %8 = arith.remsi %4, %7 : vector<16x16xi32>
    %c0_i32_7 = arith.constant 0 : i32
    %9 = vector.broadcast %c0_i32_7 : i32 to vector<16x16xi32>
    %10 = arith.cmpi ne, %8, %9 : vector<16x16xi32>
    %c0_i32_8 = arith.constant 0 : i32
    %11 = vector.broadcast %c0_i32_8 : i32 to vector<16x16xi32>
    %12 = arith.cmpi slt, %8, %11 : vector<16x16xi32>
    %c0_i32_9 = arith.constant 0 : i32
    %13 = arith.cmpi slt, %6, %c0_i32_9 : i32
    %14 = vector.broadcast %13 : i1 to vector<16x16xi1>
    %15 = vector.broadcast %14 : vector<16x16xi1> to vector<16x16xi1>
    %16 = arith.xori %12, %15 : vector<16x16xi1>
    %17 = arith.andi %16, %10 : vector<16x16xi1>
    %18 = vector.broadcast %6 : i32 to vector<16x16xi32>
    %19 = arith.addi %8, %18 : vector<16x16xi32>
    %20 = arith.select %17, %19, %8 : vector<16x16xi1>, vector<16x16xi32>
    %21 = tpu.iota {dimensions = array<i32: 1>} : vector<16x16xi32>
    %c2_i32_10 = arith.constant 2 : i32
    %c0_i32_11 = arith.constant 0 : i32
    %22 = arith.cmpi eq, %c2_i32_10, %c0_i32_11 : i32
    %c1_i32_12 = arith.constant 1 : i32
    %23 = arith.select %22, %c1_i32_12, %c2_i32_10 : i32
    %24 = vector.broadcast %23 : i32 to vector<16x16xi32>
    %25 = arith.remsi %21, %24 : vector<16x16xi32>
    %c0_i32_13 = arith.constant 0 : i32
    %26 = vector.broadcast %c0_i32_13 : i32 to vector<16x16xi32>
    %27 = arith.cmpi ne, %25, %26 : vector<16x16xi32>
    %c0_i32_14 = arith.constant 0 : i32
    %28 = vector.broadcast %c0_i32_14 : i32 to vector<16x16xi32>
    %29 = arith.cmpi slt, %25, %28 : vector<16x16xi32>
    %c0_i32_15 = arith.constant 0 : i32
    %30 = arith.cmpi slt, %23, %c0_i32_15 : i32
    %31 = vector.broadcast %30 : i1 to vector<16x16xi1>
    %32 = vector.broadcast %31 : vector<16x16xi1> to vector<16x16xi1>
    %33 = arith.xori %29, %32 : vector<16x16xi1>
    %34 = arith.andi %33, %27 : vector<16x16xi1>
    %35 = vector.broadcast %23 : i32 to vector<16x16xi32>
    %36 = arith.addi %25, %35 : vector<16x16xi32>
    %37 = arith.select %34, %36, %25 : vector<16x16xi1>, vector<16x16xi32>
    %38 = arith.cmpi eq, %20, %37 : vector<16x16xi32>
    %39 = tpu.iota {dimensions = array<i32: 0>} : vector<16x24xi32>
    %c2_i32_16 = arith.constant 2 : i32
    %c0_i32_17 = arith.constant 0 : i32
    %40 = arith.cmpi eq, %c2_i32_16, %c0_i32_17 : i32
    %c1_i32_18 = arith.constant 1 : i32
    %41 = arith.select %40, %c1_i32_18, %c2_i32_16 : i32
    %42 = vector.broadcast %41 : i32 to vector<16x24xi32>
    %43 = arith.remsi %39, %42 : vector<16x24xi32>
    %c0_i32_19 = arith.constant 0 : i32
    %44 = vector.broadcast %c0_i32_19 : i32 to vector<16x24xi32>
    %45 = arith.cmpi ne, %43, %44 : vector<16x24xi32>
    %c0_i32_20 = arith.constant 0 : i32
    %46 = vector.broadcast %c0_i32_20 : i32 to vector<16x24xi32>
    %47 = arith.cmpi slt, %43, %46 : vector<16x24xi32>
    %c0_i32_21 = arith.constant 0 : i32
    %48 = arith.cmpi slt, %41, %c0_i32_21 : i32
    %49 = vector.broadcast %48 : i1 to vector<16x24xi1>
    %50 = vector.broadcast %49 : vector<16x24xi1> to vector<16x24xi1>
    %51 = arith.xori %47, %50 : vector<16x24xi1>
    %52 = arith.andi %51, %45 : vector<16x24xi1>
    %53 = vector.broadcast %41 : i32 to vector<16x24xi32>
    %54 = arith.addi %43, %53 : vector<16x24xi32>
    %55 = arith.select %52, %54, %43 : vector<16x24xi1>, vector<16x24xi32>
    %56 = tpu.iota {dimensions = array<i32: 1>} : vector<16x24xi32>
    %c2_i32_22 = arith.constant 2 : i32
    %c0_i32_23 = arith.constant 0 : i32
    %57 = arith.cmpi eq, %c2_i32_22, %c0_i32_23 : i32
    %c1_i32_24 = arith.constant 1 : i32
    %58 = arith.select %57, %c1_i32_24, %c2_i32_22 : i32
    %59 = vector.broadcast %58 : i32 to vector<16x24xi32>
    %60 = arith.remsi %56, %59 : vector<16x24xi32>
    %c0_i32_25 = arith.constant 0 : i32
    %61 = vector.broadcast %c0_i32_25 : i32 to vector<16x24xi32>
    %62 = arith.cmpi ne, %60, %61 : vector<16x24xi32>
    %c0_i32_26 = arith.constant 0 : i32
    %63 = vector.broadcast %c0_i32_26 : i32 to vector<16x24xi32>
    %64 = arith.cmpi slt, %60, %63 : vector<16x24xi32>
    %c0_i32_27 = arith.constant 0 : i32
    %65 = arith.cmpi slt, %58, %c0_i32_27 : i32
    %66 = vector.broadcast %65 : i1 to vector<16x24xi1>
    %67 = vector.broadcast %66 : vector<16x24xi1> to vector<16x24xi1>
    %68 = arith.xori %64, %67 : vector<16x24xi1>
    %69 = arith.andi %68, %62 : vector<16x24xi1>
    %70 = vector.broadcast %58 : i32 to vector<16x24xi32>
    %71 = arith.addi %60, %70 : vector<16x24xi32>
    %72 = arith.select %69, %71, %60 : vector<16x24xi1>, vector<16x24xi32>
    %73 = arith.cmpi eq, %55, %72 : vector<16x24xi32>
    %74 = arith.addf %0, %2 : vector<16x32xf32>
    %cst = arith.constant 0.000000e+00 : f32
    %75 = vector.broadcast %cst : f32 to vector<16x32xf32>
    %c0_28 = arith.constant 0 : index
    %c0_29 = arith.constant 0 : index
    %c0_30 = arith.constant 0 : index
    %76 = vector.load %arg4[%c0_28, %c0_29, %c0_30] : memref<4x32x8xf32, #tpu.memory_space<vmem>>, vector<1x32x8xf32>
    %77 = vector.shape_cast %76 : vector<1x32x8xf32> to vector<32x8xf32>
    %cst_31 = arith.constant dense<0.000000e+00> : vector<16x8xf32>
    %78 = tpu.matmul %74, %77, %cst_31 {dimension_numbers = #tpu.dot_dimension_numbers<[1], [0], [0], [1], [0, 0, 1, 1], [], []>} : vector<16x32xf32>, vector<32x8xf32>, vector<16x8xf32> -> vector<16x8xf32>
    %c0_32 = arith.constant 0 : index
    %c0_33 = arith.constant 0 : index
    %c0_34 = arith.constant 0 : index
    %79 = vector.load %arg7[%c0_32, %c0_33, %c0_34] : memref<4x1x8xf32, #tpu.memory_space<vmem>>, vector<1x1x8xf32>
    %80 = vector.shape_cast %79 : vector<1x1x8xf32> to vector<1x8xf32>
    %81 = vector.broadcast %80 : vector<1x8xf32> to vector<16x8xf32>
    %82 = arith.addf %78, %81 : vector<16x8xf32>
    %c0_35 = arith.constant 0 : index
    %c0_36 = arith.constant 0 : index
    %c0_37 = arith.constant 0 : index
    %83 = vector.load %arg5[%c0_35, %c0_36, %c0_37] : memref<4x32x8xf32, #tpu.memory_space<vmem>>, vector<1x32x8xf32>
    %84 = vector.shape_cast %83 : vector<1x32x8xf32> to vector<32x8xf32>
    %cst_38 = arith.constant dense<0.000000e+00> : vector<16x8xf32>
    %85 = tpu.matmul %74, %84, %cst_38 {dimension_numbers = #tpu.dot_dimension_numbers<[1], [0], [0], [1], [0, 0, 1, 1], [], []>} : vector<16x32xf32>, vector<32x8xf32>, vector<16x8xf32> -> vector<16x8xf32>
    %c0_39 = arith.constant 0 : index
    %c0_40 = arith.constant 0 : index
    %c0_41 = arith.constant 0 : index
    %86 = vector.load %arg8[%c0_39, %c0_40, %c0_41] : memref<4x1x8xf32, #tpu.memory_space<vmem>>, vector<1x1x8xf32>
    %87 = vector.shape_cast %86 : vector<1x1x8xf32> to vector<1x8xf32>
    %88 = vector.broadcast %87 : vector<1x8xf32> to vector<16x8xf32>
    %89 = arith.addf %85, %88 : vector<16x8xf32>
    %c0_42 = arith.constant 0 : index
    %c0_43 = arith.constant 0 : index
    %c0_44 = arith.constant 0 : index
    %90 = vector.load %arg6[%c0_42, %c0_43, %c0_44] : memref<4x32x8xf32, #tpu.memory_space<vmem>>, vector<1x32x8xf32>
    %91 = vector.shape_cast %90 : vector<1x32x8xf32> to vector<32x8xf32>
    %cst_45 = arith.constant dense<0.000000e+00> : vector<16x8xf32>
    %92 = tpu.matmul %0, %91, %cst_45 {dimension_numbers = #tpu.dot_dimension_numbers<[1], [0], [0], [1], [0, 0, 1, 1], [], []>} : vector<16x32xf32>, vector<32x8xf32>, vector<16x8xf32> -> vector<16x8xf32>
    %c0_46 = arith.constant 0 : index
    %c0_47 = arith.constant 0 : index
    %c0_48 = arith.constant 0 : index
    %93 = vector.load %arg9[%c0_46, %c0_47, %c0_48] : memref<4x1x8xf32, #tpu.memory_space<vmem>>, vector<1x1x8xf32>
    %94 = vector.shape_cast %93 : vector<1x1x8xf32> to vector<1x8xf32>
    %95 = vector.broadcast %94 : vector<1x8xf32> to vector<16x8xf32>
    %96 = arith.addf %92, %95 : vector<16x8xf32>
    %cst_49 = arith.constant dense<0.000000e+00> : vector<16x16xf32>
    %97 = tpu.matmul %82, %89, %cst_49 {dimension_numbers = #tpu.dot_dimension_numbers<[1], [1], [0], [0], [0, 0, 1, 0], [], []>} : vector<16x8xf32>, vector<16x8xf32>, vector<16x16xf32> -> vector<16x16xf32>
    %cst_50 = arith.constant 0.353553385 : f32
    %98 = vector.broadcast %cst_50 : f32 to vector<16x16xf32>
    %99 = arith.mulf %97, %98 : vector<16x16xf32>
    %cst_51 = arith.constant 0xFF800000 : f32
    %100 = vector.broadcast %cst_51 : f32 to vector<16x16xf32>
    %101 = arith.select %38, %99, %100 : vector<16x16xi1>, vector<16x16xf32>
    %cst_52 = arith.constant dense<0xFF800000> : vector<16xf32>
    %102 = vector.multi_reduction <maximumf>, %101, %cst_52 [1] : vector<16x16xf32> to vector<16xf32>
    %103 = vector.shape_cast %102 : vector<16xf32> to vector<16x1xf32>
    %104 = vector.broadcast %103 : vector<16x1xf32> to vector<16x16xf32>
    %105 = arith.subf %101, %104 : vector<16x16xf32>
    %106 = math.exp %105 : vector<16x16xf32>
    %cst_53 = arith.constant dense<0.000000e+00> : vector<16xf32>
    %107 = vector.multi_reduction <add>, %106, %cst_53 [1] : vector<16x16xf32> to vector<16xf32>
    %108 = vector.shape_cast %107 : vector<16xf32> to vector<16x1xf32>
    %109 = tpu.reciprocal %108 {approx = true} : vector<16x1xf32> -> vector<16x1xf32>
    %110 = vector.broadcast %109 : vector<16x1xf32> to vector<16x16xf32>
    %111 = arith.mulf %106, %110 : vector<16x16xf32>
    %cst_54 = arith.constant dense<0.000000e+00> : vector<16x8xf32>
    %112 = tpu.matmul %111, %96, %cst_54 {dimension_numbers = #tpu.dot_dimension_numbers<[1], [0], [0], [1], [0, 0, 1, 1], [], []>} : vector<16x16xf32>, vector<16x8xf32>, vector<16x8xf32> -> vector<16x8xf32>
    %c0_55 = arith.constant 0 : index
    %c0_56 = arith.constant 0 : index
    %c0_57 = arith.constant 0 : index
    %113 = vector.load %arg10[%c0_55, %c0_56, %c0_57] : memref<4x8x32xf32, #tpu.memory_space<vmem>>, vector<1x8x32xf32>
    %114 = vector.shape_cast %113 : vector<1x8x32xf32> to vector<8x32xf32>
    %cst_58 = arith.constant dense<0.000000e+00> : vector<16x32xf32>
    %115 = tpu.matmul %112, %114, %cst_58 {dimension_numbers = #tpu.dot_dimension_numbers<[1], [0], [0], [1], [0, 0, 1, 1], [], []>} : vector<16x8xf32>, vector<8x32xf32>, vector<16x32xf32> -> vector<16x32xf32>
    %116 = arith.addf %75, %115 : vector<16x32xf32>
    %c1 = arith.constant 1 : index
    %c0_59 = arith.constant 0 : index
    %c0_60 = arith.constant 0 : index
    %117 = vector.load %arg4[%c1, %c0_59, %c0_60] : memref<4x32x8xf32, #tpu.memory_space<vmem>>, vector<1x32x8xf32>
    %118 = vector.shape_cast %117 : vector<1x32x8xf32> to vector<32x8xf32>
    %cst_61 = arith.constant dense<0.000000e+00> : vector<16x8xf32>
    %119 = tpu.matmul %74, %118, %cst_61 {dimension_numbers = #tpu.dot_dimension_numbers<[1], [0], [0], [1], [0, 0, 1, 1], [], []>} : vector<16x32xf32>, vector<32x8xf32>, vector<16x8xf32> -> vector<16x8xf32>
    %c1_62 = arith.constant 1 : index
    %c0_63 = arith.constant 0 : index
    %c0_64 = arith.constant 0 : index
    %120 = vector.load %arg7[%c1_62, %c0_63, %c0_64] : memref<4x1x8xf32, #tpu.memory_space<vmem>>, vector<1x1x8xf32>
    %121 = vector.shape_cast %120 : vector<1x1x8xf32> to vector<1x8xf32>
    %122 = vector.broadcast %121 : vector<1x8xf32> to vector<16x8xf32>
    %123 = arith.addf %119, %122 : vector<16x8xf32>
    %c1_65 = arith.constant 1 : index
    %c0_66 = arith.constant 0 : index
    %c0_67 = arith.constant 0 : index
    %124 = vector.load %arg5[%c1_65, %c0_66, %c0_67] : memref<4x32x8xf32, #tpu.memory_space<vmem>>, vector<1x32x8xf32>
    %125 = vector.shape_cast %124 : vector<1x32x8xf32> to vector<32x8xf32>
    %cst_68 = arith.constant dense<0.000000e+00> : vector<16x8xf32>
    %126 = tpu.matmul %74, %125, %cst_68 {dimension_numbers = #tpu.dot_dimension_numbers<[1], [0], [0], [1], [0, 0, 1, 1], [], []>} : vector<16x32xf32>, vector<32x8xf32>, vector<16x8xf32> -> vector<16x8xf32>
    %c1_69 = arith.constant 1 : index
    %c0_70 = arith.constant 0 : index
    %c0_71 = arith.constant 0 : index
    %127 = vector.load %arg8[%c1_69, %c0_70, %c0_71] : memref<4x1x8xf32, #tpu.memory_space<vmem>>, vector<1x1x8xf32>
    %128 = vector.shape_cast %127 : vector<1x1x8xf32> to vector<1x8xf32>
    %129 = vector.broadcast %128 : vector<1x8xf32> to vector<16x8xf32>
    %130 = arith.addf %126, %129 : vector<16x8xf32>
    %c1_72 = arith.constant 1 : index
    %c0_73 = arith.constant 0 : index
    %c0_74 = arith.constant 0 : index
    %131 = vector.load %arg6[%c1_72, %c0_73, %c0_74] : memref<4x32x8xf32, #tpu.memory_space<vmem>>, vector<1x32x8xf32>
    %132 = vector.shape_cast %131 : vector<1x32x8xf32> to vector<32x8xf32>
    %cst_75 = arith.constant dense<0.000000e+00> : vector<16x8xf32>
    %133 = tpu.matmul %0, %132, %cst_75 {dimension_numbers = #tpu.dot_dimension_numbers<[1], [0], [0], [1], [0, 0, 1, 1], [], []>} : vector<16x32xf32>, vector<32x8xf32>, vector<16x8xf32> -> vector<16x8xf32>
    %c1_76 = arith.constant 1 : index
    %c0_77 = arith.constant 0 : index
    %c0_78 = arith.constant 0 : index
    %134 = vector.load %arg9[%c1_76, %c0_77, %c0_78] : memref<4x1x8xf32, #tpu.memory_space<vmem>>, vector<1x1x8xf32>
    %135 = vector.shape_cast %134 : vector<1x1x8xf32> to vector<1x8xf32>
    %136 = vector.broadcast %135 : vector<1x8xf32> to vector<16x8xf32>
    %137 = arith.addf %133, %136 : vector<16x8xf32>
    %cst_79 = arith.constant dense<0.000000e+00> : vector<16x16xf32>
    %138 = tpu.matmul %123, %130, %cst_79 {dimension_numbers = #tpu.dot_dimension_numbers<[1], [1], [0], [0], [0, 0, 1, 0], [], []>} : vector<16x8xf32>, vector<16x8xf32>, vector<16x16xf32> -> vector<16x16xf32>
    %cst_80 = arith.constant 0.353553385 : f32
    %139 = vector.broadcast %cst_80 : f32 to vector<16x16xf32>
    %140 = arith.mulf %138, %139 : vector<16x16xf32>
    %cst_81 = arith.constant 0xFF800000 : f32
    %141 = vector.broadcast %cst_81 : f32 to vector<16x16xf32>
    %142 = arith.select %38, %140, %141 : vector<16x16xi1>, vector<16x16xf32>
    %cst_82 = arith.constant dense<0xFF800000> : vector<16xf32>
    %143 = vector.multi_reduction <maximumf>, %142, %cst_82 [1] : vector<16x16xf32> to vector<16xf32>
    %144 = vector.shape_cast %143 : vector<16xf32> to vector<16x1xf32>
    %145 = vector.broadcast %144 : vector<16x1xf32> to vector<16x16xf32>
    %146 = arith.subf %142, %145 : vector<16x16xf32>
    %147 = math.exp %146 : vector<16x16xf32>
    %cst_83 = arith.constant dense<0.000000e+00> : vector<16xf32>
    %148 = vector.multi_reduction <add>, %147, %cst_83 [1] : vector<16x16xf32> to vector<16xf32>
    %149 = vector.shape_cast %148 : vector<16xf32> to vector<16x1xf32>
    %150 = tpu.reciprocal %149 {approx = true} : vector<16x1xf32> -> vector<16x1xf32>
    %151 = vector.broadcast %150 : vector<16x1xf32> to vector<16x16xf32>
    %152 = arith.mulf %147, %151 : vector<16x16xf32>
    %cst_84 = arith.constant dense<0.000000e+00> : vector<16x8xf32>
    %153 = tpu.matmul %152, %137, %cst_84 {dimension_numbers = #tpu.dot_dimension_numbers<[1], [0], [0], [1], [0, 0, 1, 1], [], []>} : vector<16x16xf32>, vector<16x8xf32>, vector<16x8xf32> -> vector<16x8xf32>
    %c1_85 = arith.constant 1 : index
    %c0_86 = arith.constant 0 : index
    %c0_87 = arith.constant 0 : index
    %154 = vector.load %arg10[%c1_85, %c0_86, %c0_87] : memref<4x8x32xf32, #tpu.memory_space<vmem>>, vector<1x8x32xf32>
    %155 = vector.shape_cast %154 : vector<1x8x32xf32> to vector<8x32xf32>
    %cst_88 = arith.constant dense<0.000000e+00> : vector<16x32xf32>
    %156 = tpu.matmul %153, %155, %cst_88 {dimension_numbers = #tpu.dot_dimension_numbers<[1], [0], [0], [1], [0, 0, 1, 1], [], []>} : vector<16x8xf32>, vector<8x32xf32>, vector<16x32xf32> -> vector<16x32xf32>
    %157 = arith.addf %116, %156 : vector<16x32xf32>
    %c2 = arith.constant 2 : index
    %c0_89 = arith.constant 0 : index
    %c0_90 = arith.constant 0 : index
    %158 = vector.load %arg4[%c2, %c0_89, %c0_90] : memref<4x32x8xf32, #tpu.memory_space<vmem>>, vector<1x32x8xf32>
    %159 = vector.shape_cast %158 : vector<1x32x8xf32> to vector<32x8xf32>
    %cst_91 = arith.constant dense<0.000000e+00> : vector<16x8xf32>
    %160 = tpu.matmul %74, %159, %cst_91 {dimension_numbers = #tpu.dot_dimension_numbers<[1], [0], [0], [1], [0, 0, 1, 1], [], []>} : vector<16x32xf32>, vector<32x8xf32>, vector<16x8xf32> -> vector<16x8xf32>
    %c2_92 = arith.constant 2 : index
    %c0_93 = arith.constant 0 : index
    %c0_94 = arith.constant 0 : index
    %161 = vector.load %arg7[%c2_92, %c0_93, %c0_94] : memref<4x1x8xf32, #tpu.memory_space<vmem>>, vector<1x1x8xf32>
    %162 = vector.shape_cast %161 : vector<1x1x8xf32> to vector<1x8xf32>
    %163 = vector.broadcast %162 : vector<1x8xf32> to vector<16x8xf32>
    %164 = arith.addf %160, %163 : vector<16x8xf32>
    %c2_95 = arith.constant 2 : index
    %c0_96 = arith.constant 0 : index
    %c0_97 = arith.constant 0 : index
    %165 = vector.load %arg5[%c2_95, %c0_96, %c0_97] : memref<4x32x8xf32, #tpu.memory_space<vmem>>, vector<1x32x8xf32>
    %166 = vector.shape_cast %165 : vector<1x32x8xf32> to vector<32x8xf32>
    %cst_98 = arith.constant dense<0.000000e+00> : vector<16x8xf32>
    %167 = tpu.matmul %74, %166, %cst_98 {dimension_numbers = #tpu.dot_dimension_numbers<[1], [0], [0], [1], [0, 0, 1, 1], [], []>} : vector<16x32xf32>, vector<32x8xf32>, vector<16x8xf32> -> vector<16x8xf32>
    %c2_99 = arith.constant 2 : index
    %c0_100 = arith.constant 0 : index
    %c0_101 = arith.constant 0 : index
    %168 = vector.load %arg8[%c2_99, %c0_100, %c0_101] : memref<4x1x8xf32, #tpu.memory_space<vmem>>, vector<1x1x8xf32>
    %169 = vector.shape_cast %168 : vector<1x1x8xf32> to vector<1x8xf32>
    %170 = vector.broadcast %169 : vector<1x8xf32> to vector<16x8xf32>
    %171 = arith.addf %167, %170 : vector<16x8xf32>
    %c2_102 = arith.constant 2 : index
    %c0_103 = arith.constant 0 : index
    %c0_104 = arith.constant 0 : index
    %172 = vector.load %arg6[%c2_102, %c0_103, %c0_104] : memref<4x32x8xf32, #tpu.memory_space<vmem>>, vector<1x32x8xf32>
    %173 = vector.shape_cast %172 : vector<1x32x8xf32> to vector<32x8xf32>
    %cst_105 = arith.constant dense<0.000000e+00> : vector<16x8xf32>
    %174 = tpu.matmul %0, %173, %cst_105 {dimension_numbers = #tpu.dot_dimension_numbers<[1], [0], [0], [1], [0, 0, 1, 1], [], []>} : vector<16x32xf32>, vector<32x8xf32>, vector<16x8xf32> -> vector<16x8xf32>
    %c2_106 = arith.constant 2 : index
    %c0_107 = arith.constant 0 : index
    %c0_108 = arith.constant 0 : index
    %175 = vector.load %arg9[%c2_106, %c0_107, %c0_108] : memref<4x1x8xf32, #tpu.memory_space<vmem>>, vector<1x1x8xf32>
    %176 = vector.shape_cast %175 : vector<1x1x8xf32> to vector<1x8xf32>
    %177 = vector.broadcast %176 : vector<1x8xf32> to vector<16x8xf32>
    %178 = arith.addf %174, %177 : vector<16x8xf32>
    %cst_109 = arith.constant dense<0.000000e+00> : vector<16x16xf32>
    %179 = tpu.matmul %164, %171, %cst_109 {dimension_numbers = #tpu.dot_dimension_numbers<[1], [1], [0], [0], [0, 0, 1, 0], [], []>} : vector<16x8xf32>, vector<16x8xf32>, vector<16x16xf32> -> vector<16x16xf32>
    %cst_110 = arith.constant 0.353553385 : f32
    %180 = vector.broadcast %cst_110 : f32 to vector<16x16xf32>
    %181 = arith.mulf %179, %180 : vector<16x16xf32>
    %cst_111 = arith.constant 0xFF800000 : f32
    %182 = vector.broadcast %cst_111 : f32 to vector<16x16xf32>
    %183 = arith.select %38, %181, %182 : vector<16x16xi1>, vector<16x16xf32>
    %cst_112 = arith.constant dense<0xFF800000> : vector<16xf32>
    %184 = vector.multi_reduction <maximumf>, %183, %cst_112 [1] : vector<16x16xf32> to vector<16xf32>
    %185 = vector.shape_cast %184 : vector<16xf32> to vector<16x1xf32>
    %186 = vector.broadcast %185 : vector<16x1xf32> to vector<16x16xf32>
    %187 = arith.subf %183, %186 : vector<16x16xf32>
    %188 = math.exp %187 : vector<16x16xf32>
    %cst_113 = arith.constant dense<0.000000e+00> : vector<16xf32>
    %189 = vector.multi_reduction <add>, %188, %cst_113 [1] : vector<16x16xf32> to vector<16xf32>
    %190 = vector.shape_cast %189 : vector<16xf32> to vector<16x1xf32>
    %191 = tpu.reciprocal %190 {approx = true} : vector<16x1xf32> -> vector<16x1xf32>
    %192 = vector.broadcast %191 : vector<16x1xf32> to vector<16x16xf32>
    %193 = arith.mulf %188, %192 : vector<16x16xf32>
    %cst_114 = arith.constant dense<0.000000e+00> : vector<16x8xf32>
    %194 = tpu.matmul %193, %178, %cst_114 {dimension_numbers = #tpu.dot_dimension_numbers<[1], [0], [0], [1], [0, 0, 1, 1], [], []>} : vector<16x16xf32>, vector<16x8xf32>, vector<16x8xf32> -> vector<16x8xf32>
    %c2_115 = arith.constant 2 : index
    %c0_116 = arith.constant 0 : index
    %c0_117 = arith.constant 0 : index
    %195 = vector.load %arg10[%c2_115, %c0_116, %c0_117] : memref<4x8x32xf32, #tpu.memory_space<vmem>>, vector<1x8x32xf32>
    %196 = vector.shape_cast %195 : vector<1x8x32xf32> to vector<8x32xf32>
    %cst_118 = arith.constant dense<0.000000e+00> : vector<16x32xf32>
    %197 = tpu.matmul %194, %196, %cst_118 {dimension_numbers = #tpu.dot_dimension_numbers<[1], [0], [0], [1], [0, 0, 1, 1], [], []>} : vector<16x8xf32>, vector<8x32xf32>, vector<16x32xf32> -> vector<16x32xf32>
    %198 = arith.addf %157, %197 : vector<16x32xf32>
    %c3 = arith.constant 3 : index
    %c0_119 = arith.constant 0 : index
    %c0_120 = arith.constant 0 : index
    %199 = vector.load %arg4[%c3, %c0_119, %c0_120] : memref<4x32x8xf32, #tpu.memory_space<vmem>>, vector<1x32x8xf32>
    %200 = vector.shape_cast %199 : vector<1x32x8xf32> to vector<32x8xf32>
    %cst_121 = arith.constant dense<0.000000e+00> : vector<16x8xf32>
    %201 = tpu.matmul %74, %200, %cst_121 {dimension_numbers = #tpu.dot_dimension_numbers<[1], [0], [0], [1], [0, 0, 1, 1], [], []>} : vector<16x32xf32>, vector<32x8xf32>, vector<16x8xf32> -> vector<16x8xf32>
    %c3_122 = arith.constant 3 : index
    %c0_123 = arith.constant 0 : index
    %c0_124 = arith.constant 0 : index
    %202 = vector.load %arg7[%c3_122, %c0_123, %c0_124] : memref<4x1x8xf32, #tpu.memory_space<vmem>>, vector<1x1x8xf32>
    %203 = vector.shape_cast %202 : vector<1x1x8xf32> to vector<1x8xf32>
    %204 = vector.broadcast %203 : vector<1x8xf32> to vector<16x8xf32>
    %205 = arith.addf %201, %204 : vector<16x8xf32>
    %c3_125 = arith.constant 3 : index
    %c0_126 = arith.constant 0 : index
    %c0_127 = arith.constant 0 : index
    %206 = vector.load %arg5[%c3_125, %c0_126, %c0_127] : memref<4x32x8xf32, #tpu.memory_space<vmem>>, vector<1x32x8xf32>
    %207 = vector.shape_cast %206 : vector<1x32x8xf32> to vector<32x8xf32>
    %cst_128 = arith.constant dense<0.000000e+00> : vector<16x8xf32>
    %208 = tpu.matmul %74, %207, %cst_128 {dimension_numbers = #tpu.dot_dimension_numbers<[1], [0], [0], [1], [0, 0, 1, 1], [], []>} : vector<16x32xf32>, vector<32x8xf32>, vector<16x8xf32> -> vector<16x8xf32>
    %c3_129 = arith.constant 3 : index
    %c0_130 = arith.constant 0 : index
    %c0_131 = arith.constant 0 : index
    %209 = vector.load %arg8[%c3_129, %c0_130, %c0_131] : memref<4x1x8xf32, #tpu.memory_space<vmem>>, vector<1x1x8xf32>
    %210 = vector.shape_cast %209 : vector<1x1x8xf32> to vector<1x8xf32>
    %211 = vector.broadcast %210 : vector<1x8xf32> to vector<16x8xf32>
    %212 = arith.addf %208, %211 : vector<16x8xf32>
    %c3_132 = arith.constant 3 : index
    %c0_133 = arith.constant 0 : index
    %c0_134 = arith.constant 0 : index
    %213 = vector.load %arg6[%c3_132, %c0_133, %c0_134] : memref<4x32x8xf32, #tpu.memory_space<vmem>>, vector<1x32x8xf32>
    %214 = vector.shape_cast %213 : vector<1x32x8xf32> to vector<32x8xf32>
    %cst_135 = arith.constant dense<0.000000e+00> : vector<16x8xf32>
    %215 = tpu.matmul %0, %214, %cst_135 {dimension_numbers = #tpu.dot_dimension_numbers<[1], [0], [0], [1], [0, 0, 1, 1], [], []>} : vector<16x32xf32>, vector<32x8xf32>, vector<16x8xf32> -> vector<16x8xf32>
    %c3_136 = arith.constant 3 : index
    %c0_137 = arith.constant 0 : index
    %c0_138 = arith.constant 0 : index
    %216 = vector.load %arg9[%c3_136, %c0_137, %c0_138] : memref<4x1x8xf32, #tpu.memory_space<vmem>>, vector<1x1x8xf32>
    %217 = vector.shape_cast %216 : vector<1x1x8xf32> to vector<1x8xf32>
    %218 = vector.broadcast %217 : vector<1x8xf32> to vector<16x8xf32>
    %219 = arith.addf %215, %218 : vector<16x8xf32>
    %cst_139 = arith.constant dense<0.000000e+00> : vector<16x16xf32>
    %220 = tpu.matmul %205, %212, %cst_139 {dimension_numbers = #tpu.dot_dimension_numbers<[1], [1], [0], [0], [0, 0, 1, 0], [], []>} : vector<16x8xf32>, vector<16x8xf32>, vector<16x16xf32> -> vector<16x16xf32>
    %cst_140 = arith.constant 0.353553385 : f32
    %221 = vector.broadcast %cst_140 : f32 to vector<16x16xf32>
    %222 = arith.mulf %220, %221 : vector<16x16xf32>
    %cst_141 = arith.constant 0xFF800000 : f32
    %223 = vector.broadcast %cst_141 : f32 to vector<16x16xf32>
    %224 = arith.select %38, %222, %223 : vector<16x16xi1>, vector<16x16xf32>
    %cst_142 = arith.constant dense<0xFF800000> : vector<16xf32>
    %225 = vector.multi_reduction <maximumf>, %224, %cst_142 [1] : vector<16x16xf32> to vector<16xf32>
    %226 = vector.shape_cast %225 : vector<16xf32> to vector<16x1xf32>
    %227 = vector.broadcast %226 : vector<16x1xf32> to vector<16x16xf32>
    %228 = arith.subf %224, %227 : vector<16x16xf32>
    %229 = math.exp %228 : vector<16x16xf32>
    %cst_143 = arith.constant dense<0.000000e+00> : vector<16xf32>
    %230 = vector.multi_reduction <add>, %229, %cst_143 [1] : vector<16x16xf32> to vector<16xf32>
    %231 = vector.shape_cast %230 : vector<16xf32> to vector<16x1xf32>
    %232 = tpu.reciprocal %231 {approx = true} : vector<16x1xf32> -> vector<16x1xf32>
    %233 = vector.broadcast %232 : vector<16x1xf32> to vector<16x16xf32>
    %234 = arith.mulf %229, %233 : vector<16x16xf32>
    %cst_144 = arith.constant dense<0.000000e+00> : vector<16x8xf32>
    %235 = tpu.matmul %234, %219, %cst_144 {dimension_numbers = #tpu.dot_dimension_numbers<[1], [0], [0], [1], [0, 0, 1, 1], [], []>} : vector<16x16xf32>, vector<16x8xf32>, vector<16x8xf32> -> vector<16x8xf32>
    %c3_145 = arith.constant 3 : index
    %c0_146 = arith.constant 0 : index
    %c0_147 = arith.constant 0 : index
    %236 = vector.load %arg10[%c3_145, %c0_146, %c0_147] : memref<4x8x32xf32, #tpu.memory_space<vmem>>, vector<1x8x32xf32>
    %237 = vector.shape_cast %236 : vector<1x8x32xf32> to vector<8x32xf32>
    %cst_148 = arith.constant dense<0.000000e+00> : vector<16x32xf32>
    %238 = tpu.matmul %235, %237, %cst_148 {dimension_numbers = #tpu.dot_dimension_numbers<[1], [0], [0], [1], [0, 0, 1, 1], [], []>} : vector<16x8xf32>, vector<8x32xf32>, vector<16x32xf32> -> vector<16x32xf32>
    %239 = arith.addf %198, %238 : vector<16x32xf32>
    %c0_149 = arith.constant 0 : index
    %c0_150 = arith.constant 0 : index
    %240 = vector.load %arg11[%c0_149, %c0_150] : memref<1x32xf32, #tpu.memory_space<vmem>>, vector<1x32xf32>
    %241 = vector.broadcast %240 : vector<1x32xf32> to vector<16x32xf32>
    %242 = arith.addf %239, %241 : vector<16x32xf32>
    %243 = arith.addf %0, %242 : vector<16x32xf32>
    %cst_151 = arith.constant dense<0.000000e+00> : vector<16xf32>
    %244 = vector.multi_reduction <add>, %243, %cst_151 [1] : vector<16x32xf32> to vector<16xf32>
    %245 = vector.shape_cast %244 : vector<16xf32> to vector<16x1xf32>
    %cst_152 = arith.constant 3.125000e-02 : f32
    %246 = vector.broadcast %cst_152 : f32 to vector<16x1xf32>
    %247 = arith.mulf %245, %246 : vector<16x1xf32>
    %248 = vector.broadcast %247 : vector<16x1xf32> to vector<16x32xf32>
    %249 = arith.subf %243, %248 : vector<16x32xf32>
    %250 = arith.mulf %249, %249 : vector<16x32xf32>
    %cst_153 = arith.constant dense<0.000000e+00> : vector<16xf32>
    %251 = vector.multi_reduction <add>, %250, %cst_153 [1] : vector<16x32xf32> to vector<16xf32>
    %252 = vector.shape_cast %251 : vector<16xf32> to vector<16x1xf32>
    %cst_154 = arith.constant 3.125000e-02 : f32
    %253 = vector.broadcast %cst_154 : f32 to vector<16x1xf32>
    %254 = arith.mulf %252, %253 : vector<16x1xf32>
    %cst_155 = arith.constant 9.99999974E-6 : f32
    %255 = vector.broadcast %cst_155 : f32 to vector<16x1xf32>
    %256 = arith.addf %254, %255 : vector<16x1xf32>
    %257 = math.rsqrt %256 : vector<16x1xf32>
    %258 = vector.broadcast %257 : vector<16x1xf32> to vector<16x32xf32>
    %259 = arith.mulf %249, %258 : vector<16x32xf32>
    %c0_156 = arith.constant 0 : index
    %c0_157 = arith.constant 0 : index
    %260 = vector.load %arg24[%c0_156, %c0_157] : memref<1x32xf32, #tpu.memory_space<vmem>>, vector<1x32xf32>
    %261 = vector.broadcast %260 : vector<1x32xf32> to vector<16x32xf32>
    %262 = arith.mulf %259, %261 : vector<16x32xf32>
    %c0_158 = arith.constant 0 : index
    %c0_159 = arith.constant 0 : index
    %263 = vector.load %arg25[%c0_158, %c0_159] : memref<1x32xf32, #tpu.memory_space<vmem>>, vector<1x32xf32>
    %264 = vector.broadcast %263 : vector<1x32xf32> to vector<16x32xf32>
    %265 = arith.addf %262, %264 : vector<16x32xf32>
    %266 = arith.addf %265, %2 : vector<16x32xf32>
    %267 = arith.addf %1, %3 : vector<24x32xf32>
    %cst_160 = arith.constant 0.000000e+00 : f32
    %268 = vector.broadcast %cst_160 : f32 to vector<16x32xf32>
    %c0_161 = arith.constant 0 : index
    %c0_162 = arith.constant 0 : index
    %c0_163 = arith.constant 0 : index
    %269 = vector.load %arg12[%c0_161, %c0_162, %c0_163] : memref<4x32x8xf32, #tpu.memory_space<vmem>>, vector<1x32x8xf32>
    %270 = vector.shape_cast %269 : vector<1x32x8xf32> to vector<32x8xf32>
    %cst_164 = arith.constant dense<0.000000e+00> : vector<16x8xf32>
    %271 = tpu.matmul %266, %270, %cst_164 {dimension_numbers = #tpu.dot_dimension_numbers<[1], [0], [0], [1], [0, 0, 1, 1], [], []>} : vector<16x32xf32>, vector<32x8xf32>, vector<16x8xf32> -> vector<16x8xf32>
    %c0_165 = arith.constant 0 : index
    %c0_166 = arith.constant 0 : index
    %c0_167 = arith.constant 0 : index
    %272 = vector.load %arg15[%c0_165, %c0_166, %c0_167] : memref<4x1x8xf32, #tpu.memory_space<vmem>>, vector<1x1x8xf32>
    %273 = vector.shape_cast %272 : vector<1x1x8xf32> to vector<1x8xf32>
    %274 = vector.broadcast %273 : vector<1x8xf32> to vector<16x8xf32>
    %275 = arith.addf %271, %274 : vector<16x8xf32>
    %c0_168 = arith.constant 0 : index
    %c0_169 = arith.constant 0 : index
    %c0_170 = arith.constant 0 : index
    %276 = vector.load %arg13[%c0_168, %c0_169, %c0_170] : memref<4x32x8xf32, #tpu.memory_space<vmem>>, vector<1x32x8xf32>
    %277 = vector.shape_cast %276 : vector<1x32x8xf32> to vector<32x8xf32>
    %cst_171 = arith.constant dense<0.000000e+00> : vector<24x8xf32>
    %278 = tpu.matmul %267, %277, %cst_171 {dimension_numbers = #tpu.dot_dimension_numbers<[1], [0], [0], [1], [0, 0, 1, 1], [], []>} : vector<24x32xf32>, vector<32x8xf32>, vector<24x8xf32> -> vector<24x8xf32>
    %c0_172 = arith.constant 0 : index
    %c0_173 = arith.constant 0 : index
    %c0_174 = arith.constant 0 : index
    %279 = vector.load %arg16[%c0_172, %c0_173, %c0_174] : memref<4x1x8xf32, #tpu.memory_space<vmem>>, vector<1x1x8xf32>
    %280 = vector.shape_cast %279 : vector<1x1x8xf32> to vector<1x8xf32>
    %281 = vector.broadcast %280 : vector<1x8xf32> to vector<24x8xf32>
    %282 = arith.addf %278, %281 : vector<24x8xf32>
    %c0_175 = arith.constant 0 : index
    %c0_176 = arith.constant 0 : index
    %c0_177 = arith.constant 0 : index
    %283 = vector.load %arg14[%c0_175, %c0_176, %c0_177] : memref<4x32x8xf32, #tpu.memory_space<vmem>>, vector<1x32x8xf32>
    %284 = vector.shape_cast %283 : vector<1x32x8xf32> to vector<32x8xf32>
    %cst_178 = arith.constant dense<0.000000e+00> : vector<24x8xf32>
    %285 = tpu.matmul %1, %284, %cst_178 {dimension_numbers = #tpu.dot_dimension_numbers<[1], [0], [0], [1], [0, 0, 1, 1], [], []>} : vector<24x32xf32>, vector<32x8xf32>, vector<24x8xf32> -> vector<24x8xf32>
    %c0_179 = arith.constant 0 : index
    %c0_180 = arith.constant 0 : index
    %c0_181 = arith.constant 0 : index
    %286 = vector.load %arg17[%c0_179, %c0_180, %c0_181] : memref<4x1x8xf32, #tpu.memory_space<vmem>>, vector<1x1x8xf32>
    %287 = vector.shape_cast %286 : vector<1x1x8xf32> to vector<1x8xf32>
    %288 = vector.broadcast %287 : vector<1x8xf32> to vector<24x8xf32>
    %289 = arith.addf %285, %288 : vector<24x8xf32>
    %cst_182 = arith.constant dense<0.000000e+00> : vector<16x24xf32>
    %290 = tpu.matmul %275, %282, %cst_182 {dimension_numbers = #tpu.dot_dimension_numbers<[1], [1], [0], [0], [0, 0, 1, 0], [], []>} : vector<16x8xf32>, vector<24x8xf32>, vector<16x24xf32> -> vector<16x24xf32>
    %cst_183 = arith.constant 0.353553385 : f32
    %291 = vector.broadcast %cst_183 : f32 to vector<16x24xf32>
    %292 = arith.mulf %290, %291 : vector<16x24xf32>
    %cst_184 = arith.constant 0xFF800000 : f32
    %293 = vector.broadcast %cst_184 : f32 to vector<16x24xf32>
    %294 = arith.select %73, %292, %293 : vector<16x24xi1>, vector<16x24xf32>
    %cst_185 = arith.constant dense<0xFF800000> : vector<16xf32>
    %295 = vector.multi_reduction <maximumf>, %294, %cst_185 [1] : vector<16x24xf32> to vector<16xf32>
    %296 = vector.shape_cast %295 : vector<16xf32> to vector<16x1xf32>
    %297 = vector.broadcast %296 : vector<16x1xf32> to vector<16x24xf32>
    %298 = arith.subf %294, %297 : vector<16x24xf32>
    %299 = math.exp %298 : vector<16x24xf32>
    %cst_186 = arith.constant dense<0.000000e+00> : vector<16xf32>
    %300 = vector.multi_reduction <add>, %299, %cst_186 [1] : vector<16x24xf32> to vector<16xf32>
    %301 = vector.shape_cast %300 : vector<16xf32> to vector<16x1xf32>
    %302 = tpu.reciprocal %301 {approx = true} : vector<16x1xf32> -> vector<16x1xf32>
    %303 = vector.broadcast %302 : vector<16x1xf32> to vector<16x24xf32>
    %304 = arith.mulf %299, %303 : vector<16x24xf32>
    %cst_187 = arith.constant dense<0.000000e+00> : vector<16x8xf32>
    %305 = tpu.matmul %304, %289, %cst_187 {dimension_numbers = #tpu.dot_dimension_numbers<[1], [0], [0], [1], [0, 0, 1, 1], [], []>} : vector<16x24xf32>, vector<24x8xf32>, vector<16x8xf32> -> vector<16x8xf32>
    %c0_188 = arith.constant 0 : index
    %c0_189 = arith.constant 0 : index
    %c0_190 = arith.constant 0 : index
    %306 = vector.load %arg18[%c0_188, %c0_189, %c0_190] : memref<4x8x32xf32, #tpu.memory_space<vmem>>, vector<1x8x32xf32>
    %307 = vector.shape_cast %306 : vector<1x8x32xf32> to vector<8x32xf32>
    %cst_191 = arith.constant dense<0.000000e+00> : vector<16x32xf32>
    %308 = tpu.matmul %305, %307, %cst_191 {dimension_numbers = #tpu.dot_dimension_numbers<[1], [0], [0], [1], [0, 0, 1, 1], [], []>} : vector<16x8xf32>, vector<8x32xf32>, vector<16x32xf32> -> vector<16x32xf32>
    %309 = arith.addf %268, %308 : vector<16x32xf32>
    %c1_192 = arith.constant 1 : index
    %c0_193 = arith.constant 0 : index
    %c0_194 = arith.constant 0 : index
    %310 = vector.load %arg12[%c1_192, %c0_193, %c0_194] : memref<4x32x8xf32, #tpu.memory_space<vmem>>, vector<1x32x8xf32>
    %311 = vector.shape_cast %310 : vector<1x32x8xf32> to vector<32x8xf32>
    %cst_195 = arith.constant dense<0.000000e+00> : vector<16x8xf32>
    %312 = tpu.matmul %266, %311, %cst_195 {dimension_numbers = #tpu.dot_dimension_numbers<[1], [0], [0], [1], [0, 0, 1, 1], [], []>} : vector<16x32xf32>, vector<32x8xf32>, vector<16x8xf32> -> vector<16x8xf32>
    %c1_196 = arith.constant 1 : index
    %c0_197 = arith.constant 0 : index
    %c0_198 = arith.constant 0 : index
    %313 = vector.load %arg15[%c1_196, %c0_197, %c0_198] : memref<4x1x8xf32, #tpu.memory_space<vmem>>, vector<1x1x8xf32>
    %314 = vector.shape_cast %313 : vector<1x1x8xf32> to vector<1x8xf32>
    %315 = vector.broadcast %314 : vector<1x8xf32> to vector<16x8xf32>
    %316 = arith.addf %312, %315 : vector<16x8xf32>
    %c1_199 = arith.constant 1 : index
    %c0_200 = arith.constant 0 : index
    %c0_201 = arith.constant 0 : index
    %317 = vector.load %arg13[%c1_199, %c0_200, %c0_201] : memref<4x32x8xf32, #tpu.memory_space<vmem>>, vector<1x32x8xf32>
    %318 = vector.shape_cast %317 : vector<1x32x8xf32> to vector<32x8xf32>
    %cst_202 = arith.constant dense<0.000000e+00> : vector<24x8xf32>
    %319 = tpu.matmul %267, %318, %cst_202 {dimension_numbers = #tpu.dot_dimension_numbers<[1], [0], [0], [1], [0, 0, 1, 1], [], []>} : vector<24x32xf32>, vector<32x8xf32>, vector<24x8xf32> -> vector<24x8xf32>
    %c1_203 = arith.constant 1 : index
    %c0_204 = arith.constant 0 : index
    %c0_205 = arith.constant 0 : index
    %320 = vector.load %arg16[%c1_203, %c0_204, %c0_205] : memref<4x1x8xf32, #tpu.memory_space<vmem>>, vector<1x1x8xf32>
    %321 = vector.shape_cast %320 : vector<1x1x8xf32> to vector<1x8xf32>
    %322 = vector.broadcast %321 : vector<1x8xf32> to vector<24x8xf32>
    %323 = arith.addf %319, %322 : vector<24x8xf32>
    %c1_206 = arith.constant 1 : index
    %c0_207 = arith.constant 0 : index
    %c0_208 = arith.constant 0 : index
    %324 = vector.load %arg14[%c1_206, %c0_207, %c0_208] : memref<4x32x8xf32, #tpu.memory_space<vmem>>, vector<1x32x8xf32>
    %325 = vector.shape_cast %324 : vector<1x32x8xf32> to vector<32x8xf32>
    %cst_209 = arith.constant dense<0.000000e+00> : vector<24x8xf32>
    %326 = tpu.matmul %1, %325, %cst_209 {dimension_numbers = #tpu.dot_dimension_numbers<[1], [0], [0], [1], [0, 0, 1, 1], [], []>} : vector<24x32xf32>, vector<32x8xf32>, vector<24x8xf32> -> vector<24x8xf32>
    %c1_210 = arith.constant 1 : index
    %c0_211 = arith.constant 0 : index
    %c0_212 = arith.constant 0 : index
    %327 = vector.load %arg17[%c1_210, %c0_211, %c0_212] : memref<4x1x8xf32, #tpu.memory_space<vmem>>, vector<1x1x8xf32>
    %328 = vector.shape_cast %327 : vector<1x1x8xf32> to vector<1x8xf32>
    %329 = vector.broadcast %328 : vector<1x8xf32> to vector<24x8xf32>
    %330 = arith.addf %326, %329 : vector<24x8xf32>
    %cst_213 = arith.constant dense<0.000000e+00> : vector<16x24xf32>
    %331 = tpu.matmul %316, %323, %cst_213 {dimension_numbers = #tpu.dot_dimension_numbers<[1], [1], [0], [0], [0, 0, 1, 0], [], []>} : vector<16x8xf32>, vector<24x8xf32>, vector<16x24xf32> -> vector<16x24xf32>
    %cst_214 = arith.constant 0.353553385 : f32
    %332 = vector.broadcast %cst_214 : f32 to vector<16x24xf32>
    %333 = arith.mulf %331, %332 : vector<16x24xf32>
    %cst_215 = arith.constant 0xFF800000 : f32
    %334 = vector.broadcast %cst_215 : f32 to vector<16x24xf32>
    %335 = arith.select %73, %333, %334 : vector<16x24xi1>, vector<16x24xf32>
    %cst_216 = arith.constant dense<0xFF800000> : vector<16xf32>
    %336 = vector.multi_reduction <maximumf>, %335, %cst_216 [1] : vector<16x24xf32> to vector<16xf32>
    %337 = vector.shape_cast %336 : vector<16xf32> to vector<16x1xf32>
    %338 = vector.broadcast %337 : vector<16x1xf32> to vector<16x24xf32>
    %339 = arith.subf %335, %338 : vector<16x24xf32>
    %340 = math.exp %339 : vector<16x24xf32>
    %cst_217 = arith.constant dense<0.000000e+00> : vector<16xf32>
    %341 = vector.multi_reduction <add>, %340, %cst_217 [1] : vector<16x24xf32> to vector<16xf32>
    %342 = vector.shape_cast %341 : vector<16xf32> to vector<16x1xf32>
    %343 = tpu.reciprocal %342 {approx = true} : vector<16x1xf32> -> vector<16x1xf32>
    %344 = vector.broadcast %343 : vector<16x1xf32> to vector<16x24xf32>
    %345 = arith.mulf %340, %344 : vector<16x24xf32>
    %cst_218 = arith.constant dense<0.000000e+00> : vector<16x8xf32>
    %346 = tpu.matmul %345, %330, %cst_218 {dimension_numbers = #tpu.dot_dimension_numbers<[1], [0], [0], [1], [0, 0, 1, 1], [], []>} : vector<16x24xf32>, vector<24x8xf32>, vector<16x8xf32> -> vector<16x8xf32>
    %c1_219 = arith.constant 1 : index
    %c0_220 = arith.constant 0 : index
    %c0_221 = arith.constant 0 : index
    %347 = vector.load %arg18[%c1_219, %c0_220, %c0_221] : memref<4x8x32xf32, #tpu.memory_space<vmem>>, vector<1x8x32xf32>
    %348 = vector.shape_cast %347 : vector<1x8x32xf32> to vector<8x32xf32>
    %cst_222 = arith.constant dense<0.000000e+00> : vector<16x32xf32>
    %349 = tpu.matmul %346, %348, %cst_222 {dimension_numbers = #tpu.dot_dimension_numbers<[1], [0], [0], [1], [0, 0, 1, 1], [], []>} : vector<16x8xf32>, vector<8x32xf32>, vector<16x32xf32> -> vector<16x32xf32>
    %350 = arith.addf %309, %349 : vector<16x32xf32>
    %c2_223 = arith.constant 2 : index
    %c0_224 = arith.constant 0 : index
    %c0_225 = arith.constant 0 : index
    %351 = vector.load %arg12[%c2_223, %c0_224, %c0_225] : memref<4x32x8xf32, #tpu.memory_space<vmem>>, vector<1x32x8xf32>
    %352 = vector.shape_cast %351 : vector<1x32x8xf32> to vector<32x8xf32>
    %cst_226 = arith.constant dense<0.000000e+00> : vector<16x8xf32>
    %353 = tpu.matmul %266, %352, %cst_226 {dimension_numbers = #tpu.dot_dimension_numbers<[1], [0], [0], [1], [0, 0, 1, 1], [], []>} : vector<16x32xf32>, vector<32x8xf32>, vector<16x8xf32> -> vector<16x8xf32>
    %c2_227 = arith.constant 2 : index
    %c0_228 = arith.constant 0 : index
    %c0_229 = arith.constant 0 : index
    %354 = vector.load %arg15[%c2_227, %c0_228, %c0_229] : memref<4x1x8xf32, #tpu.memory_space<vmem>>, vector<1x1x8xf32>
    %355 = vector.shape_cast %354 : vector<1x1x8xf32> to vector<1x8xf32>
    %356 = vector.broadcast %355 : vector<1x8xf32> to vector<16x8xf32>
    %357 = arith.addf %353, %356 : vector<16x8xf32>
    %c2_230 = arith.constant 2 : index
    %c0_231 = arith.constant 0 : index
    %c0_232 = arith.constant 0 : index
    %358 = vector.load %arg13[%c2_230, %c0_231, %c0_232] : memref<4x32x8xf32, #tpu.memory_space<vmem>>, vector<1x32x8xf32>
    %359 = vector.shape_cast %358 : vector<1x32x8xf32> to vector<32x8xf32>
    %cst_233 = arith.constant dense<0.000000e+00> : vector<24x8xf32>
    %360 = tpu.matmul %267, %359, %cst_233 {dimension_numbers = #tpu.dot_dimension_numbers<[1], [0], [0], [1], [0, 0, 1, 1], [], []>} : vector<24x32xf32>, vector<32x8xf32>, vector<24x8xf32> -> vector<24x8xf32>
    %c2_234 = arith.constant 2 : index
    %c0_235 = arith.constant 0 : index
    %c0_236 = arith.constant 0 : index
    %361 = vector.load %arg16[%c2_234, %c0_235, %c0_236] : memref<4x1x8xf32, #tpu.memory_space<vmem>>, vector<1x1x8xf32>
    %362 = vector.shape_cast %361 : vector<1x1x8xf32> to vector<1x8xf32>
    %363 = vector.broadcast %362 : vector<1x8xf32> to vector<24x8xf32>
    %364 = arith.addf %360, %363 : vector<24x8xf32>
    %c2_237 = arith.constant 2 : index
    %c0_238 = arith.constant 0 : index
    %c0_239 = arith.constant 0 : index
    %365 = vector.load %arg14[%c2_237, %c0_238, %c0_239] : memref<4x32x8xf32, #tpu.memory_space<vmem>>, vector<1x32x8xf32>
    %366 = vector.shape_cast %365 : vector<1x32x8xf32> to vector<32x8xf32>
    %cst_240 = arith.constant dense<0.000000e+00> : vector<24x8xf32>
    %367 = tpu.matmul %1, %366, %cst_240 {dimension_numbers = #tpu.dot_dimension_numbers<[1], [0], [0], [1], [0, 0, 1, 1], [], []>} : vector<24x32xf32>, vector<32x8xf32>, vector<24x8xf32> -> vector<24x8xf32>
    %c2_241 = arith.constant 2 : index
    %c0_242 = arith.constant 0 : index
    %c0_243 = arith.constant 0 : index
    %368 = vector.load %arg17[%c2_241, %c0_242, %c0_243] : memref<4x1x8xf32, #tpu.memory_space<vmem>>, vector<1x1x8xf32>
    %369 = vector.shape_cast %368 : vector<1x1x8xf32> to vector<1x8xf32>
    %370 = vector.broadcast %369 : vector<1x8xf32> to vector<24x8xf32>
    %371 = arith.addf %367, %370 : vector<24x8xf32>
    %cst_244 = arith.constant dense<0.000000e+00> : vector<16x24xf32>
    %372 = tpu.matmul %357, %364, %cst_244 {dimension_numbers = #tpu.dot_dimension_numbers<[1], [1], [0], [0], [0, 0, 1, 0], [], []>} : vector<16x8xf32>, vector<24x8xf32>, vector<16x24xf32> -> vector<16x24xf32>
    %cst_245 = arith.constant 0.353553385 : f32
    %373 = vector.broadcast %cst_245 : f32 to vector<16x24xf32>
    %374 = arith.mulf %372, %373 : vector<16x24xf32>
    %cst_246 = arith.constant 0xFF800000 : f32
    %375 = vector.broadcast %cst_246 : f32 to vector<16x24xf32>
    %376 = arith.select %73, %374, %375 : vector<16x24xi1>, vector<16x24xf32>
    %cst_247 = arith.constant dense<0xFF800000> : vector<16xf32>
    %377 = vector.multi_reduction <maximumf>, %376, %cst_247 [1] : vector<16x24xf32> to vector<16xf32>
    %378 = vector.shape_cast %377 : vector<16xf32> to vector<16x1xf32>
    %379 = vector.broadcast %378 : vector<16x1xf32> to vector<16x24xf32>
    %380 = arith.subf %376, %379 : vector<16x24xf32>
    %381 = math.exp %380 : vector<16x24xf32>
    %cst_248 = arith.constant dense<0.000000e+00> : vector<16xf32>
    %382 = vector.multi_reduction <add>, %381, %cst_248 [1] : vector<16x24xf32> to vector<16xf32>
    %383 = vector.shape_cast %382 : vector<16xf32> to vector<16x1xf32>
    %384 = tpu.reciprocal %383 {approx = true} : vector<16x1xf32> -> vector<16x1xf32>
    %385 = vector.broadcast %384 : vector<16x1xf32> to vector<16x24xf32>
    %386 = arith.mulf %381, %385 : vector<16x24xf32>
    %cst_249 = arith.constant dense<0.000000e+00> : vector<16x8xf32>
    %387 = tpu.matmul %386, %371, %cst_249 {dimension_numbers = #tpu.dot_dimension_numbers<[1], [0], [0], [1], [0, 0, 1, 1], [], []>} : vector<16x24xf32>, vector<24x8xf32>, vector<16x8xf32> -> vector<16x8xf32>
    %c2_250 = arith.constant 2 : index
    %c0_251 = arith.constant 0 : index
    %c0_252 = arith.constant 0 : index
    %388 = vector.load %arg18[%c2_250, %c0_251, %c0_252] : memref<4x8x32xf32, #tpu.memory_space<vmem>>, vector<1x8x32xf32>
    %389 = vector.shape_cast %388 : vector<1x8x32xf32> to vector<8x32xf32>
    %cst_253 = arith.constant dense<0.000000e+00> : vector<16x32xf32>
    %390 = tpu.matmul %387, %389, %cst_253 {dimension_numbers = #tpu.dot_dimension_numbers<[1], [0], [0], [1], [0, 0, 1, 1], [], []>} : vector<16x8xf32>, vector<8x32xf32>, vector<16x32xf32> -> vector<16x32xf32>
    %391 = arith.addf %350, %390 : vector<16x32xf32>
    %c3_254 = arith.constant 3 : index
    %c0_255 = arith.constant 0 : index
    %c0_256 = arith.constant 0 : index
    %392 = vector.load %arg12[%c3_254, %c0_255, %c0_256] : memref<4x32x8xf32, #tpu.memory_space<vmem>>, vector<1x32x8xf32>
    %393 = vector.shape_cast %392 : vector<1x32x8xf32> to vector<32x8xf32>
    %cst_257 = arith.constant dense<0.000000e+00> : vector<16x8xf32>
    %394 = tpu.matmul %266, %393, %cst_257 {dimension_numbers = #tpu.dot_dimension_numbers<[1], [0], [0], [1], [0, 0, 1, 1], [], []>} : vector<16x32xf32>, vector<32x8xf32>, vector<16x8xf32> -> vector<16x8xf32>
    %c3_258 = arith.constant 3 : index
    %c0_259 = arith.constant 0 : index
    %c0_260 = arith.constant 0 : index
    %395 = vector.load %arg15[%c3_258, %c0_259, %c0_260] : memref<4x1x8xf32, #tpu.memory_space<vmem>>, vector<1x1x8xf32>
    %396 = vector.shape_cast %395 : vector<1x1x8xf32> to vector<1x8xf32>
    %397 = vector.broadcast %396 : vector<1x8xf32> to vector<16x8xf32>
    %398 = arith.addf %394, %397 : vector<16x8xf32>
    %c3_261 = arith.constant 3 : index
    %c0_262 = arith.constant 0 : index
    %c0_263 = arith.constant 0 : index
    %399 = vector.load %arg13[%c3_261, %c0_262, %c0_263] : memref<4x32x8xf32, #tpu.memory_space<vmem>>, vector<1x32x8xf32>
    %400 = vector.shape_cast %399 : vector<1x32x8xf32> to vector<32x8xf32>
    %cst_264 = arith.constant dense<0.000000e+00> : vector<24x8xf32>
    %401 = tpu.matmul %267, %400, %cst_264 {dimension_numbers = #tpu.dot_dimension_numbers<[1], [0], [0], [1], [0, 0, 1, 1], [], []>} : vector<24x32xf32>, vector<32x8xf32>, vector<24x8xf32> -> vector<24x8xf32>
    %c3_265 = arith.constant 3 : index
    %c0_266 = arith.constant 0 : index
    %c0_267 = arith.constant 0 : index
    %402 = vector.load %arg16[%c3_265, %c0_266, %c0_267] : memref<4x1x8xf32, #tpu.memory_space<vmem>>, vector<1x1x8xf32>
    %403 = vector.shape_cast %402 : vector<1x1x8xf32> to vector<1x8xf32>
    %404 = vector.broadcast %403 : vector<1x8xf32> to vector<24x8xf32>
    %405 = arith.addf %401, %404 : vector<24x8xf32>
    %c3_268 = arith.constant 3 : index
    %c0_269 = arith.constant 0 : index
    %c0_270 = arith.constant 0 : index
    %406 = vector.load %arg14[%c3_268, %c0_269, %c0_270] : memref<4x32x8xf32, #tpu.memory_space<vmem>>, vector<1x32x8xf32>
    %407 = vector.shape_cast %406 : vector<1x32x8xf32> to vector<32x8xf32>
    %cst_271 = arith.constant dense<0.000000e+00> : vector<24x8xf32>
    %408 = tpu.matmul %1, %407, %cst_271 {dimension_numbers = #tpu.dot_dimension_numbers<[1], [0], [0], [1], [0, 0, 1, 1], [], []>} : vector<24x32xf32>, vector<32x8xf32>, vector<24x8xf32> -> vector<24x8xf32>
    %c3_272 = arith.constant 3 : index
    %c0_273 = arith.constant 0 : index
    %c0_274 = arith.constant 0 : index
    %409 = vector.load %arg17[%c3_272, %c0_273, %c0_274] : memref<4x1x8xf32, #tpu.memory_space<vmem>>, vector<1x1x8xf32>
    %410 = vector.shape_cast %409 : vector<1x1x8xf32> to vector<1x8xf32>
    %411 = vector.broadcast %410 : vector<1x8xf32> to vector<24x8xf32>
    %412 = arith.addf %408, %411 : vector<24x8xf32>
    %cst_275 = arith.constant dense<0.000000e+00> : vector<16x24xf32>
    %413 = tpu.matmul %398, %405, %cst_275 {dimension_numbers = #tpu.dot_dimension_numbers<[1], [1], [0], [0], [0, 0, 1, 0], [], []>} : vector<16x8xf32>, vector<24x8xf32>, vector<16x24xf32> -> vector<16x24xf32>
    %cst_276 = arith.constant 0.353553385 : f32
    %414 = vector.broadcast %cst_276 : f32 to vector<16x24xf32>
    %415 = arith.mulf %413, %414 : vector<16x24xf32>
    %cst_277 = arith.constant 0xFF800000 : f32
    %416 = vector.broadcast %cst_277 : f32 to vector<16x24xf32>
    %417 = arith.select %73, %415, %416 : vector<16x24xi1>, vector<16x24xf32>
    %cst_278 = arith.constant dense<0xFF800000> : vector<16xf32>
    %418 = vector.multi_reduction <maximumf>, %417, %cst_278 [1] : vector<16x24xf32> to vector<16xf32>
    %419 = vector.shape_cast %418 : vector<16xf32> to vector<16x1xf32>
    %420 = vector.broadcast %419 : vector<16x1xf32> to vector<16x24xf32>
    %421 = arith.subf %417, %420 : vector<16x24xf32>
    %422 = math.exp %421 : vector<16x24xf32>
    %cst_279 = arith.constant dense<0.000000e+00> : vector<16xf32>
    %423 = vector.multi_reduction <add>, %422, %cst_279 [1] : vector<16x24xf32> to vector<16xf32>
    %424 = vector.shape_cast %423 : vector<16xf32> to vector<16x1xf32>
    %425 = tpu.reciprocal %424 {approx = true} : vector<16x1xf32> -> vector<16x1xf32>
    %426 = vector.broadcast %425 : vector<16x1xf32> to vector<16x24xf32>
    %427 = arith.mulf %422, %426 : vector<16x24xf32>
    %cst_280 = arith.constant dense<0.000000e+00> : vector<16x8xf32>
    %428 = tpu.matmul %427, %412, %cst_280 {dimension_numbers = #tpu.dot_dimension_numbers<[1], [0], [0], [1], [0, 0, 1, 1], [], []>} : vector<16x24xf32>, vector<24x8xf32>, vector<16x8xf32> -> vector<16x8xf32>
    %c3_281 = arith.constant 3 : index
    %c0_282 = arith.constant 0 : index
    %c0_283 = arith.constant 0 : index
    %429 = vector.load %arg18[%c3_281, %c0_282, %c0_283] : memref<4x8x32xf32, #tpu.memory_space<vmem>>, vector<1x8x32xf32>
    %430 = vector.shape_cast %429 : vector<1x8x32xf32> to vector<8x32xf32>
    %cst_284 = arith.constant dense<0.000000e+00> : vector<16x32xf32>
    %431 = tpu.matmul %428, %430, %cst_284 {dimension_numbers = #tpu.dot_dimension_numbers<[1], [0], [0], [1], [0, 0, 1, 1], [], []>} : vector<16x8xf32>, vector<8x32xf32>, vector<16x32xf32> -> vector<16x32xf32>
    %432 = arith.addf %391, %431 : vector<16x32xf32>
    %c0_285 = arith.constant 0 : index
    %c0_286 = arith.constant 0 : index
    %433 = vector.load %arg19[%c0_285, %c0_286] : memref<1x32xf32, #tpu.memory_space<vmem>>, vector<1x32xf32>
    %434 = vector.broadcast %433 : vector<1x32xf32> to vector<16x32xf32>
    %435 = arith.addf %432, %434 : vector<16x32xf32>
    %436 = arith.addf %265, %435 : vector<16x32xf32>
    %cst_287 = arith.constant dense<0.000000e+00> : vector<16xf32>
    %437 = vector.multi_reduction <add>, %436, %cst_287 [1] : vector<16x32xf32> to vector<16xf32>
    %438 = vector.shape_cast %437 : vector<16xf32> to vector<16x1xf32>
    %cst_288 = arith.constant 3.125000e-02 : f32
    %439 = vector.broadcast %cst_288 : f32 to vector<16x1xf32>
    %440 = arith.mulf %438, %439 : vector<16x1xf32>
    %441 = vector.broadcast %440 : vector<16x1xf32> to vector<16x32xf32>
    %442 = arith.subf %436, %441 : vector<16x32xf32>
    %443 = arith.mulf %442, %442 : vector<16x32xf32>
    %cst_289 = arith.constant dense<0.000000e+00> : vector<16xf32>
    %444 = vector.multi_reduction <add>, %443, %cst_289 [1] : vector<16x32xf32> to vector<16xf32>
    %445 = vector.shape_cast %444 : vector<16xf32> to vector<16x1xf32>
    %cst_290 = arith.constant 3.125000e-02 : f32
    %446 = vector.broadcast %cst_290 : f32 to vector<16x1xf32>
    %447 = arith.mulf %445, %446 : vector<16x1xf32>
    %cst_291 = arith.constant 9.99999974E-6 : f32
    %448 = vector.broadcast %cst_291 : f32 to vector<16x1xf32>
    %449 = arith.addf %447, %448 : vector<16x1xf32>
    %450 = math.rsqrt %449 : vector<16x1xf32>
    %451 = vector.broadcast %450 : vector<16x1xf32> to vector<16x32xf32>
    %452 = arith.mulf %442, %451 : vector<16x32xf32>
    %c0_292 = arith.constant 0 : index
    %c0_293 = arith.constant 0 : index
    %453 = vector.load %arg26[%c0_292, %c0_293] : memref<1x32xf32, #tpu.memory_space<vmem>>, vector<1x32xf32>
    %454 = vector.broadcast %453 : vector<1x32xf32> to vector<16x32xf32>
    %455 = arith.mulf %452, %454 : vector<16x32xf32>
    %c0_294 = arith.constant 0 : index
    %c0_295 = arith.constant 0 : index
    %456 = vector.load %arg27[%c0_294, %c0_295] : memref<1x32xf32, #tpu.memory_space<vmem>>, vector<1x32xf32>
    %457 = vector.broadcast %456 : vector<1x32xf32> to vector<16x32xf32>
    %458 = arith.addf %455, %457 : vector<16x32xf32>
    %c0_296 = arith.constant 0 : index
    %c0_297 = arith.constant 0 : index
    %459 = vector.load %arg20[%c0_296, %c0_297] : memref<32x64xf32, #tpu.memory_space<vmem>>, vector<32x64xf32>
    %cst_298 = arith.constant dense<0.000000e+00> : vector<16x64xf32>
    %460 = tpu.matmul %458, %459, %cst_298 {dimension_numbers = #tpu.dot_dimension_numbers<[1], [0], [0], [1], [0, 0, 1, 1], [], []>} : vector<16x32xf32>, vector<32x64xf32>, vector<16x64xf32> -> vector<16x64xf32>
    %c0_299 = arith.constant 0 : index
    %c0_300 = arith.constant 0 : index
    %461 = vector.load %arg21[%c0_299, %c0_300] : memref<1x64xf32, #tpu.memory_space<vmem>>, vector<1x64xf32>
    %462 = vector.broadcast %461 : vector<1x64xf32> to vector<16x64xf32>
    %463 = arith.addf %460, %462 : vector<16x64xf32>
    %cst_301 = arith.constant 0.000000e+00 : f32
    %464 = vector.broadcast %cst_301 : f32 to vector<16x64xf32>
    %465 = arith.maximumf %463, %464 : vector<16x64xf32>
    %c0_302 = arith.constant 0 : index
    %c0_303 = arith.constant 0 : index
    %466 = vector.load %arg22[%c0_302, %c0_303] : memref<64x32xf32, #tpu.memory_space<vmem>>, vector<64x32xf32>
    %cst_304 = arith.constant dense<0.000000e+00> : vector<16x32xf32>
    %467 = tpu.matmul %465, %466, %cst_304 {dimension_numbers = #tpu.dot_dimension_numbers<[1], [0], [0], [1], [0, 0, 1, 1], [], []>} : vector<16x64xf32>, vector<64x32xf32>, vector<16x32xf32> -> vector<16x32xf32>
    %c0_305 = arith.constant 0 : index
    %c0_306 = arith.constant 0 : index
    %468 = vector.load %arg23[%c0_305, %c0_306] : memref<1x32xf32, #tpu.memory_space<vmem>>, vector<1x32xf32>
    %469 = vector.broadcast %468 : vector<1x32xf32> to vector<16x32xf32>
    %470 = arith.addf %467, %469 : vector<16x32xf32>
    %471 = arith.addf %458, %470 : vector<16x32xf32>
    %cst_307 = arith.constant dense<0.000000e+00> : vector<16xf32>
    %472 = vector.multi_reduction <add>, %471, %cst_307 [1] : vector<16x32xf32> to vector<16xf32>
    %473 = vector.shape_cast %472 : vector<16xf32> to vector<16x1xf32>
    %cst_308 = arith.constant 3.125000e-02 : f32
    %474 = vector.broadcast %cst_308 : f32 to vector<16x1xf32>
    %475 = arith.mulf %473, %474 : vector<16x1xf32>
    %476 = vector.broadcast %475 : vector<16x1xf32> to vector<16x32xf32>
    %477 = arith.subf %471, %476 : vector<16x32xf32>
    %478 = arith.mulf %477, %477 : vector<16x32xf32>
    %cst_309 = arith.constant dense<0.000000e+00> : vector<16xf32>
    %479 = vector.multi_reduction <add>, %478, %cst_309 [1] : vector<16x32xf32> to vector<16xf32>
    %480 = vector.shape_cast %479 : vector<16xf32> to vector<16x1xf32>
    %cst_310 = arith.constant 3.125000e-02 : f32
    %481 = vector.broadcast %cst_310 : f32 to vector<16x1xf32>
    %482 = arith.mulf %480, %481 : vector<16x1xf32>
    %cst_311 = arith.constant 9.99999974E-6 : f32
    %483 = vector.broadcast %cst_311 : f32 to vector<16x1xf32>
    %484 = arith.addf %482, %483 : vector<16x1xf32>
    %485 = math.rsqrt %484 : vector<16x1xf32>
    %486 = vector.broadcast %485 : vector<16x1xf32> to vector<16x32xf32>
    %487 = arith.mulf %477, %486 : vector<16x32xf32>
    %c0_312 = arith.constant 0 : index
    %c0_313 = arith.constant 0 : index
    %488 = vector.load %arg28[%c0_312, %c0_313] : memref<1x32xf32, #tpu.memory_space<vmem>>, vector<1x32xf32>
    %489 = vector.broadcast %488 : vector<1x32xf32> to vector<16x32xf32>
    %490 = arith.mulf %487, %489 : vector<16x32xf32>
    %c0_314 = arith.constant 0 : index
    %c0_315 = arith.constant 0 : index
    %491 = vector.load %arg29[%c0_314, %c0_315] : memref<1x32xf32, #tpu.memory_space<vmem>>, vector<1x32xf32>
    %492 = vector.broadcast %491 : vector<1x32xf32> to vector<16x32xf32>
    %493 = arith.addf %490, %492 : vector<16x32xf32>
    %c0_316 = arith.constant 0 : index
    %c0_317 = arith.constant 0 : index
    %494 = vector.load %arg30[%c0_316, %c0_317] : memref<16x32xf32, #tpu.memory_space<vmem>>, vector<16x32xf32>
    tpu.vector_store %arg30[%c0_316, %c0_317], %493 {strides = array<i32>} : memref<16x32xf32, #tpu.memory_space<vmem>>, vector<16x32xf32>,
    return
  }
}

</mosaic_0001>

<llo_original>
// kernel: interactor_forward.1
$region0: #{interactor_forward.1}
  #allocation0 [shape = 'u32[]', space=smem, size = 0x4, offset = 0x4, fixed_abs, tag = 'smem constant byte address 0x4 - core index']
  #allocation1 [shape = 'u32[144,128]{1,0:T(1,128)}', space=vmem, size = 0x12000, scoped, tag = 'internal scratch']
  %s0 = inlined_call_operand.smem [shape: u32[31], index: -1, kind: input, shape index: {}]
  %s1 = sld [smem:[%s0]]
  %s2 = scalar_lea.smem %s0, 1
  %s3 = sld [smem:[%s2]]
  %s4 = scalar_lea.smem %s0, 2
  %s5 = sld [smem:[%s4]]
  %s6 = scalar_lea.smem %s0, 3
  %s7 = sld [smem:[%s6]]
  %s8 = scalar_lea.smem %s0, 4
  %s9 = sld [smem:[%s8]]
  %s10 = scalar_lea.smem %s0, 5
  %s11 = sld [smem:[%s10]]
  %s12 = scalar_lea.smem %s0, 6
  %s13 = sld [smem:[%s12]]
  %s14 = scalar_lea.smem %s0, 7
  %s15 = sld [smem:[%s14]]
  %s16 = scalar_lea.smem %s0, 8
  %s17 = sld [smem:[%s16]]
  %s18 = scalar_lea.smem %s0, 9
  %s19 = sld [smem:[%s18]]
  %s20 = scalar_lea.smem %s0, 10
  %s21 = sld [smem:[%s20]]
  %s22 = scalar_lea.smem %s0, 11
  %s23 = sld [smem:[%s22]]
  %s24 = scalar_lea.smem %s0, 12
  %s25 = sld [smem:[%s24]]
  %s26 = scalar_lea.smem %s0, 13
  %s27 = sld [smem:[%s26]]
  %s28 = scalar_lea.smem %s0, 14
  %s29 = sld [smem:[%s28]]
  %s30 = scalar_lea.smem %s0, 15
  %s31 = sld [smem:[%s30]]
  %s32 = scalar_lea.smem %s0, 16
  %s33 = sld [smem:[%s32]]
  %s34 = scalar_lea.smem %s0, 17
  %s35 = sld [smem:[%s34]]
  %s36 = scalar_lea.smem %s0, 18
  %s37 = sld [smem:[%s36]]
  %s38 = scalar_lea.smem %s0, 19
  %s39 = sld [smem:[%s38]]
  %s40 = scalar_lea.smem %s0, 20
  %s41 = sld [smem:[%s40]]
  %s42 = scalar_lea.smem %s0, 21
  %s43 = sld [smem:[%s42]]
  %s44 = scalar_lea.smem %s0, 22
  %s45 = sld [smem:[%s44]]
  %s46 = scalar_lea.smem %s0, 23
  %s47 = sld [smem:[%s46]]
  %s48 = scalar_lea.smem %s0, 24
  %s49 = sld [smem:[%s48]]
  %s50 = scalar_lea.smem %s0, 25
  %s51 = sld [smem:[%s50]]
  %s52 = scalar_lea.smem %s0, 26
  %s53 = sld [smem:[%s52]]
  %s54 = scalar_lea.smem %s0, 27
  %s55 = sld [smem:[%s54]]
  %s56 = scalar_lea.smem %s0, 28
  %s57 = sld [smem:[%s56]]
  %s58 = scalar_lea.smem %s0, 29
  %s59 = sld [smem:[%s58]]
  %s60 = scalar_lea.smem %s0, 30
  %s61 = sld [smem:[%s60]]
  %s62 = sld [smem:[#allocation0]]
  $region130: #{interactor_forward.1} parent=0
    _
  %s64 = ssub.s32 1, %s62
  %s65 = scalar_select 0, %s64, %s62
  $region1: #{interactor_forward.1} parent=0
    #allocation2 [shape = 'u8[8192]{0}', space=vmem, size = 0x2000, scoped, tag = 'output window, operand 0, single buffered']
    #allocation3 [shape = 's32[1]{0}', space=sflag, size = 0x4, scoped, tag = 'scoped memory for interactor_forward.1']
    %66 = vsyncpa [#allocation3], 0
    // Predicated region
    $region2: #{interactor_forward.1} parent=1 // pred_check
      _
    $region3: #{interactor_forward.1} parent=1 // pred_check_branch
      %68 = sbr.rel (0) target = $region5
    $region4: #{interactor_forward.1} parent=1 // pred_region
      _
    $region5: #{interactor_forward.1} parent=1 // pred_fallthru
      _
    // Predicated region
    $region6: #{interactor_forward.1} parent=1 // pred_check
      _
    $region7: #{interactor_forward.1} parent=1 // pred_check_branch
      %70 = sbr.rel (0) target = $region9
    $region8: #{interactor_forward.1} parent=1 // pred_region
      _
    $region9: #{interactor_forward.1} parent=1 // pred_fallthru
      _
    // Predicated region
    $region10: #{interactor_forward.1} parent=1 // pred_check
      _
    $region11: #{interactor_forward.1} parent=1 // pred_check_branch
      %72 = sbr.rel (0) target = $region13
    $region12: #{interactor_forward.1} parent=1 // pred_region
      _
    $region13: #{interactor_forward.1} parent=1 // pred_fallthru
      _
    // Predicated region
    $region14: #{interactor_forward.1} parent=1 // pred_check
      _
    $region15: #{interactor_forward.1} parent=1 // pred_check_branch
      %74 = sbr.rel (0) target = $region17
    $region16: #{interactor_forward.1} parent=1 // pred_region
      _
    $region17: #{interactor_forward.1} parent=1 // pred_fallthru
      _
    // Predicated region
    $region18: #{interactor_forward.1} parent=1 // pred_check
      _
    $region19: #{interactor_forward.1} parent=1 // pred_check_branch
      %76 = sbr.rel (0) target = $region21
    $region20: #{interactor_forward.1} parent=1 // pred_region
      _
    $region21: #{interactor_forward.1} parent=1 // pred_fallthru
      _
    // Predicated region
    $region22: #{interactor_forward.1} parent=1 // pred_check
      _
    $region23: #{interactor_forward.1} parent=1 // pred_check_branch
      %78 = sbr.rel (0) target = $region25
    $region24: #{interactor_forward.1} parent=1 // pred_region
      _
    $region25: #{interactor_forward.1} parent=1 // pred_fallthru
      _
    // Predicated region
    $region26: #{interactor_forward.1} parent=1 // pred_check
      _
    $region27: #{interactor_forward.1} parent=1 // pred_check_branch
      %80 = sbr.rel (0) target = $region29
    $region28: #{interactor_forward.1} parent=1 // pred_region
      _
    $region29: #{interactor_forward.1} parent=1 // pred_fallthru
      _
    // Predicated region
    $region30: #{interactor_forward.1} parent=1 // pred_check
      _
    $region31: #{interactor_forward.1} parent=1 // pred_check_branch
      %82 = sbr.rel (0) target = $region33
    $region32: #{interactor_forward.1} parent=1 // pred_region
      _
    $region33: #{interactor_forward.1} parent=1 // pred_fallthru
      _
    // Predicated region
    $region34: #{interactor_forward.1} parent=1 // pred_check
      _
    $region35: #{interactor_forward.1} parent=1 // pred_check_branch
      %84 = sbr.rel (0) target = $region37
    $region36: #{interactor_forward.1} parent=1 // pred_region
      _
    $region37: #{interactor_forward.1} parent=1 // pred_fallthru
      _
    // Predicated region
    $region38: #{interactor_forward.1} parent=1 // pred_check
      _
    $region39: #{interactor_forward.1} parent=1 // pred_check_branch
      %86 = sbr.rel (0) target = $region41
    $region40: #{interactor_forward.1} parent=1 // pred_region
      _
    $region41: #{interactor_forward.1} parent=1 // pred_fallthru
      _
    // Predicated region
    $region42: #{interactor_forward.1} parent=1 // pred_check
      _
    $region43: #{interactor_forward.1} parent=1 // pred_check_branch
      %88 = sbr.rel (0) target = $region45
    $region44: #{interactor_forward.1} parent=1 // pred_region
      _
    $region45: #{interactor_forward.1} parent=1 // pred_fallthru
      _
    // Predicated region
    $region46: #{interactor_forward.1} parent=1 // pred_check
      _
    $region47: #{interactor_forward.1} parent=1 // pred_check_branch
      %90 = sbr.rel (0) target = $region49
    $region48: #{interactor_forward.1} parent=1 // pred_region
      _
    $region49: #{interactor_forward.1} parent=1 // pred_fallthru
      _
    // Predicated region
    $region50: #{interactor_forward.1} parent=1 // pred_check
      _
    $region51: #{interactor_forward.1} parent=1 // pred_check_branch
      %92 = sbr.rel (0) target = $region53
    $region52: #{interactor_forward.1} parent=1 // pred_region
      _
    $region53: #{interactor_forward.1} parent=1 // pred_fallthru
      _
    // Predicated region
    $region54: #{interactor_forward.1} parent=1 // pred_check
      _
    $region55: #{interactor_forward.1} parent=1 // pred_check_branch
      %94 = sbr.rel (0) target = $region57
    $region56: #{interactor_forward.1} parent=1 // pred_region
      _
    $region57: #{interactor_forward.1} parent=1 // pred_fallthru
      _
    // Predicated region
    $region58: #{interactor_forward.1} parent=1 // pred_check
      _
    $region59: #{interactor_forward.1} parent=1 // pred_check_branch
      %96 = sbr.rel (0) target = $region61
    $region60: #{interactor_forward.1} parent=1 // pred_region
      _
    $region61: #{interactor_forward.1} parent=1 // pred_fallthru
      _
    // Predicated region
    $region62: #{interactor_forward.1} parent=1 // pred_check
      _
    $region63: #{interactor_forward.1} parent=1 // pred_check_branch
      %98 = sbr.rel (0) target = $region65
    $region64: #{interactor_forward.1} parent=1 // pred_region
      _
    $region65: #{interactor_forward.1} parent=1 // pred_fallthru
      _
    // Predicated region
    $region66: #{interactor_forward.1} parent=1 // pred_check
      _
    $region67: #{interactor_forward.1} parent=1 // pred_check_branch
      %100 = sbr.rel (0) target = $region69
    $region68: #{interactor_forward.1} parent=1 // pred_region
      _
    $region69: #{interactor_forward.1} parent=1 // pred_fallthru
      _
    // Predicated region
    $region70: #{interactor_forward.1} parent=1 // pred_check
      _
    $region71: #{interactor_forward.1} parent=1 // pred_check_branch
      %102 = sbr.rel (0) target = $region73
    $region72: #{interactor_forward.1} parent=1 // pred_region
      _
    $region73: #{interactor_forward.1} parent=1 // pred_fallthru
      _
    // Predicated region
    $region74: #{interactor_forward.1} parent=1 // pred_check
      _
    $region75: #{interactor_forward.1} parent=1 // pred_check_branch
      %104 = sbr.rel (0) target = $region77
    $region76: #{interactor_forward.1} parent=1 // pred_region
      _
    $region77: #{interactor_forward.1} parent=1 // pred_fallthru
      _
    // Predicated region
    $region78: #{interactor_forward.1} parent=1 // pred_check
      _
    $region79: #{interactor_forward.1} parent=1 // pred_check_branch
      %106 = sbr.rel (0) target = $region81
    $region80: #{interactor_forward.1} parent=1 // pred_region
      _
    $region81: #{interactor_forward.1} parent=1 // pred_fallthru
      _
    // Predicated region
    $region82: #{interactor_forward.1} parent=1 // pred_check
      _
    $region83: #{interactor_forward.1} parent=1 // pred_check_branch
      %108 = sbr.rel (0) target = $region85
    $region84: #{interactor_forward.1} parent=1 // pred_region
      _
    $region85: #{interactor_forward.1} parent=1 // pred_fallthru
      _
    // Predicated region
    $region86: #{interactor_forward.1} parent=1 // pred_check
      _
    $region87: #{interactor_forward.1} parent=1 // pred_check_branch
      %110 = sbr.rel (0) target = $region89
    $region88: #{interactor_forward.1} parent=1 // pred_region
      _
    $region89: #{interactor_forward.1} parent=1 // pred_fallthru
      _
    // Predicated region
    $region90: #{interactor_forward.1} parent=1 // pred_check
      _
    $region91: #{interactor_forward.1} parent=1 // pred_check_branch
      %112 = sbr.rel (0) target = $region93
    $region92: #{interactor_forward.1} parent=1 // pred_region
      _
    $region93: #{interactor_forward.1} parent=1 // pred_fallthru
      _
    // Predicated region
    $region94: #{interactor_forward.1} parent=1 // pred_check
      _
    $region95: #{interactor_forward.1} parent=1 // pred_check_branch
      %114 = sbr.rel (0) target = $region97
    $region96: #{interactor_forward.1} parent=1 // pred_region
      _
    $region97: #{interactor_forward.1} parent=1 // pred_fallthru
      _
    // Predicated region
    $region98: #{interactor_forward.1} parent=1 // pred_check
      _
    $region99: #{interactor_forward.1} parent=1 // pred_check_branch
      %116 = sbr.rel (0) target = $region101
    $region100: #{interactor_forward.1} parent=1 // pred_region
      _
    $region101: #{interactor_forward.1} parent=1 // pred_fallthru
      _
    // Predicated region
    $region102: #{interactor_forward.1} parent=1 // pred_check
      _
    $region103: #{interactor_forward.1} parent=1 // pred_check_branch
      %118 = sbr.rel (0) target = $region105
    $region104: #{interactor_forward.1} parent=1 // pred_region
      _
    $region105: #{interactor_forward.1} parent=1 // pred_fallthru
      _
    // Predicated region
    $region106: #{interactor_forward.1} parent=1 // pred_check
      _
    $region107: #{interactor_forward.1} parent=1 // pred_check_branch
      %120 = sbr.rel (0) target = $region109
    $region108: #{interactor_forward.1} parent=1 // pred_region
      _
    $region109: #{interactor_forward.1} parent=1 // pred_fallthru
      _
    // Predicated region
    $region110: #{interactor_forward.1} parent=1 // pred_check
      _
    $region111: #{interactor_forward.1} parent=1 // pred_check_branch
      %122 = sbr.rel (0) target = $region113
    $region112: #{interactor_forward.1} parent=1 // pred_region
      _
    $region113: #{interactor_forward.1} parent=1 // pred_fallthru
      _
    // Predicated region
    $region114: #{interactor_forward.1} parent=1 // pred_check
      _
    $region115: #{interactor_forward.1} parent=1 // pred_check_branch
      %124 = sbr.rel (0) target = $region117
    $region116: #{interactor_forward.1} parent=1 // pred_region
      _
    $region117: #{interactor_forward.1} parent=1 // pred_fallthru
      _
    // Predicated region
    $region118: #{interactor_forward.1} parent=1 // pred_check
      _
    $region119: #{interactor_forward.1} parent=1 // pred_check_branch
      %126 = sbr.rel (0) target = $region121
    $region120: #{interactor_forward.1} parent=1 // pred_region
      _
    $region121: #{interactor_forward.1} parent=1 // pred_fallthru
      _
    %v127 = vld [vmem:[%s1] sm:$0xff]
    %v128 = vld [vmem:[%s1 + $0x8] sm:$0xff]
    %v129 = vld [vmem:[%s3] sm:$0xff]
    %v130 = vld [vmem:[%s3 + $0x8] sm:$0xff]
    %v131 = vld [vmem:[%s3 + $0x10] sm:$0xff]
    %v132 = vld [vmem:[%s5] sm:$0xff]
    %v133 = vld [vmem:[%s5 + $0x8] sm:$0xff]
    %v134 = vld [vmem:[%s7] sm:$0xff]
    %v135 = vld [vmem:[%s7 + $0x8] sm:$0xff]
    %v136 = vld [vmem:[%s7 + $0x10] sm:$0xff]
    %v137 = vlaneseq
    %v138 = vshrl.u32 %v137, 7
    %v139 = vadd.s32 %v138, 8
    %vm140 = vcmp.lt.s32.totalorder %v138, 0
    %v141 = vsub.s32 0, %v138
    %v142 = vsel %vm140, %v141, %v138
    %v143 = vshrl.u32 %v142, 1
    %v144 = vand.u32 %v142, 1
    %v145 = vsub.s32 0, %v144
    %v146 = vsel %vm140, %v145, %v144
    %vm147 = vcmp.lt.s32.totalorder %v139, 0
    %v148 = vsub.s32 0, %v139
    %v149 = vsel %vm147, %v148, %v139
    %v150 = vshrl.u32 %v149, 1
    %v151 = vand.u32 %v149, 1
    %v152 = vsub.s32 0, %v151
    %v153 = vsel %vm147, %v152, %v151
    %vm154 = vcmp.ne.s32.totalorder %v146, 0
    %vm155 = vcmp.ne.s32.totalorder %v153, 0
    %vm156 = vcmp.lt.s32.totalorder %v146, 0
    %vm157 = vcmp.lt.s32.totalorder %v153, 0
    %vm158 = vmand %vm156, %vm154
    %vm159 = vmand %vm157, %vm155
    %v160 = vadd.s32 %v146, 2
    %v161 = vadd.s32 %v153, 2
    %v162 = vsel %vm158, %v160, %v146
    %v163 = vsel %vm159, %v161, %v153
    %v164 = vlaneseq
    %v165 = vand.u32 %v164, 127
    %vm166 = vcmp.lt.s32.totalorder %v165, 0
    %v167 = vsub.s32 0, %v165
    %v168 = vsel %vm166, %v167, %v165
    %v169 = vshrl.u32 %v168, 1
    %v170 = vand.u32 %v168, 1
    %v171 = vsub.s32 0, %v170
    %v172 = vsel %vm166, %v171, %v170
    %vm173 = vcmp.ne.s32.totalorder %v172, 0
    %vm174 = vcmp.lt.s32.totalorder %v172, 0
    %vm175 = vmand %vm174, %vm173
    %v176 = vadd.s32 %v172, 2
    %v177 = vsel %vm175, %v176, %v172
    %vm178 = vcmp.eq.s32.totalorder %v162, %v177
    %vm179 = vcmp.eq.s32.totalorder %v163, %v177
    %v180 = vadd.f32 %v127, %v132
    %v181 = vadd.f32 %v128, %v133
    %v182 = vld [vmem:[%s9] sm:$0xff]
    %v183 = vld [vmem:[%s9 + $0x8] sm:$0xff]
    %v184 = vld [vmem:[%s9 + $0x10] sm:$0xff]
    %v185 = vld [vmem:[%s9 + $0x18] sm:$0xff]
    %v186 = vld [vmem:[%s15] sm:$0x1]
    %v188 = vlaneseq
    %v189 = vshrl.u32 %v188, 7
    %v190 = vsub.s32 0, %v189
    %v191 = vrot.slane %v186, %v190
    %vm193 = vcmask 261120
    %v195 = vsel %vm193, %v180, 0
    %v198 = vsel %vm193, %v181, 0
    %200 = vmatprep.subr.mxu0 0.0
    %201 = vmatpush1.msra.mxu0 %v182
    %202 = vmatprep.subr.mxu0 0.0
    %203 = vmatpush1.msra.mxu0 %v183
    %204 = vmatprep.subr.mxu0 0.0
    %205 = vmatpush1.msra.mxu0 %v184
    %206 = vmatprep.subr.mxu0 0.0
    %207 = vmatpush1.msra.mxu0 %v185
    %208 = vmatprep.subr.mxu0 0.0
    %209 = vmatpush1.msra.mxu0 0.0
    %210 = vmatprep.subr.mxu0 0.0
    %211 = vmatpush1.msra.mxu0 0.0
    %212 = vmatprep.subr.mxu0 0.0
    %213 = vmatpush1.msra.mxu0 0.0
    %214 = vmatprep.subr.mxu0 0.0
    %215 = vmatpush1.msra.mxu0 0.0
    %216 = vmatprep.subr.mxu0 0.0
    %217 = vmatpush1.msra.mxu0 0.0
    %218 = vmatprep.subr.mxu0 0.0
    %219 = vmatpush1.msra.mxu0 0.0
    %220 = vmatprep.subr.mxu0 0.0
    %221 = vmatpush1.msra.mxu0 0.0
    %222 = vmatprep.subr.mxu0 0.0
    %223 = vmatpush1.msra.mxu0 0.0
    %224 = vmatprep.subr.mxu0 0.0
    %225 = vmatpush1.msra.mxu0 0.0
    %226 = vmatprep.subr.mxu0 0.0
    %227 = vmatpush1.msra.mxu0 0.0
    %228 = vmatprep.subr.mxu0 0.0
    %229 = vmatpush1.msra.mxu0 0.0
    %230 = vmatprep.subr.mxu0 0.0
    %231 = vmatpush1.msra.mxu0 0.0
    %232 = vmatprep.subr.mxu0 0.0
    %233 = vmatpush1.msra.mxu0 0.0
    %234 = vmatprep.subr.mxu0 0.0
    %235 = vmatpush1.msra.mxu0 0.0
    %236 = vmatprep.subr.mxu0 0.0
    %237 = vmatpush1.msra.mxu0 0.0
    %238 = vmatprep.subr.mxu0 0.0
    %239 = vmatpush1.msra.mxu0 0.0
    %240 = vmatprep.subr.mxu0 0.0
    %241 = vmatpush1.msra.mxu0 0.0
    %242 = vmatprep.subr.mxu0 0.0
    %243 = vmatpush1.msra.mxu0 0.0
    %244 = vmatprep.subr.mxu0 0.0
    %245 = vmatpush1.msra.mxu0 0.0
    %246 = vmatprep.subr.mxu0 0.0
    %247 = vmatpush1.msra.mxu0 0.0
    %248 = vmatprep.subr.mxu0 0.0
    %249 = vmatpush1.msra.mxu0 0.0
    %250 = vmatprep.subr.mxu0 0.0
    %251 = vmatpush1.msra.mxu0 0.0
    %252 = vmatprep.subr.mxu0 0.0
    %253 = vmatpush1.msra.mxu0 0.0
    %254 = vmatprep.subr.mxu0 0.0
    %255 = vmatpush1.msra.mxu0 0.0
    %256 = vmatprep.subr.mxu0 0.0
    %257 = vmatpush1.msra.mxu0 0.0
    %258 = vmatprep.subr.mxu0 0.0
    %259 = vmatpush1.msra.mxu0 0.0
    %260 = vmatprep.subr.mxu0 0.0
    %261 = vmatpush1.msra.mxu0 0.0
    %262 = vmatprep.subr.mxu0 0.0
    %263 = vmatpush1.msra.mxu0 0.0
    %264 = vmatprep.mubr.f32.mxu0 0.0
    %265 = vmatmul.mubr.f32.gmra.mrb[0].mxu0 %v195
    %v266 = vpop.f32.mrb[0].mxu0
    %v267 = vadd.f32 %v191, %v266
    %v268 = vpop.f32.mrb[0].mxu0
    %269 = vmatprep.mubr.f32.mxu0 0.0
    %270 = vmatmul.mubr.f32.gmra.mrb[0].mxu0 %v198
    %v271 = vpop.f32.mrb[0].mxu0
    %v272 = vadd.f32 %v191, %v271
    %v273 = vpop.f32.mrb[0].mxu0
    %274 = vdwg.mxu0
    %v275 = vld [vmem:[%s11] sm:$0xff]
    %v276 = vld [vmem:[%s11 + $0x8] sm:$0xff]
    %v277 = vld [vmem:[%s11 + $0x10] sm:$0xff]
    %v278 = vld [vmem:[%s11 + $0x18] sm:$0xff]
    %v279 = vld [vmem:[%s17] sm:$0x1]
    %v281 = vlaneseq
    %v282 = vshrl.u32 %v281, 7
    %v283 = vsub.s32 0, %v282
    %v284 = vrot.slane %v279, %v283
    %286 = vmatprep.subr.mxu0 0.0
    %287 = vmatpush1.msra.mxu0 %v275
    %288 = vmatprep.subr.mxu0 0.0
    %289 = vmatpush1.msra.mxu0 %v276
    %290 = vmatprep.subr.mxu0 0.0
    %291 = vmatpush1.msra.mxu0 %v277
    %292 = vmatprep.subr.mxu0 0.0
    %293 = vmatpush1.msra.mxu0 %v278
    %294 = vmatprep.subr.mxu0 0.0
    %295 = vmatpush1.msra.mxu0 0.0
    %296 = vmatprep.subr.mxu0 0.0
    %297 = vmatpush1.msra.mxu0 0.0
    %298 = vmatprep.subr.mxu0 0.0
    %299 = vmatpush1.msra.mxu0 0.0
    %300 = vmatprep.subr.mxu0 0.0
    %301 = vmatpush1.msra.mxu0 0.0
    %302 = vmatprep.subr.mxu0 0.0
    %303 = vmatpush1.msra.mxu0 0.0
    %304 = vmatprep.subr.mxu0 0.0
    %305 = vmatpush1.msra.mxu0 0.0
    %306 = vmatprep.subr.mxu0 0.0
    %307 = vmatpush1.msra.mxu0 0.0
    %308 = vmatprep.subr.mxu0 0.0
    %309 = vmatpush1.msra.mxu0 0.0
    %310 = vmatprep.subr.mxu0 0.0
    %311 = vmatpush1.msra.mxu0 0.0
    %312 = vmatprep.subr.mxu0 0.0
    %313 = vmatpush1.msra.mxu0 0.0
    %314 = vmatprep.subr.mxu0 0.0
    %315 = vmatpush1.msra.mxu0 0.0
    %316 = vmatprep.subr.mxu0 0.0
    %317 = vmatpush1.msra.mxu0 0.0
    %318 = vmatprep.subr.mxu0 0.0
    %319 = vmatpush1.msra.mxu0 0.0
    %320 = vmatprep.subr.mxu0 0.0
    %321 = vmatpush1.msra.mxu0 0.0
    %322 = vmatprep.subr.mxu0 0.0
    %323 = vmatpush1.msra.mxu0 0.0
    %324 = vmatprep.subr.mxu0 0.0
    %325 = vmatpush1.msra.mxu0 0.0
    %326 = vmatprep.subr.mxu0 0.0
    %327 = vmatpush1.msra.mxu0 0.0
    %328 = vmatprep.subr.mxu0 0.0
    %329 = vmatpush1.msra.mxu0 0.0
    %330 = vmatprep.subr.mxu0 0.0
    %331 = vmatpush1.msra.mxu0 0.0
    %332 = vmatprep.subr.mxu0 0.0
    %333 = vmatpush1.msra.mxu0 0.0
    %334 = vmatprep.subr.mxu0 0.0
    %335 = vmatpush1.msra.mxu0 0.0
    %336 = vmatprep.subr.mxu0 0.0
    %337 = vmatpush1.msra.mxu0 0.0
    %338 = vmatprep.subr.mxu0 0.0
    %339 = vmatpush1.msra.mxu0 0.0
    %340 = vmatprep.subr.mxu0 0.0
    %341 = vmatpush1.msra.mxu0 0.0
    %342 = vmatprep.subr.mxu0 0.0
    %343 = vmatpush1.msra.mxu0 0.0
    %344 = vmatprep.subr.mxu0 0.0
    %345 = vmatpush1.msra.mxu0 0.0
    %346 = vmatprep.subr.mxu0 0.0
    %347 = vmatpush1.msra.mxu0 0.0
    %348 = vmatprep.subr.mxu0 0.0
    %349 = vmatpush1.msra.mxu0 0.0
    %350 = vmatprep.mubr.f32.mxu0 0.0
    %351 = vmatmul.mubr.f32.gmra.mrb[0].mxu0 %v195
    %v352 = vpop.f32.mrb[0].mxu0
    %v353 = vadd.f32 %v284, %v352
    %v354 = vpop.f32.mrb[0].mxu0
    %355 = vmatprep.mubr.f32.mxu0 0.0
    %356 = vmatmul.mubr.f32.gmra.mrb[0].mxu0 %v198
    %v357 = vpop.f32.mrb[0].mxu0
    %v358 = vadd.f32 %v284, %v357
    %v359 = vpop.f32.mrb[0].mxu0
    %360 = vdwg.mxu0
    %v361 = vld [vmem:[%s13] sm:$0xff]
    %v362 = vld [vmem:[%s13 + $0x8] sm:$0xff]
    %v363 = vld [vmem:[%s13 + $0x10] sm:$0xff]
    %v364 = vld [vmem:[%s13 + $0x18] sm:$0xff]
    %v365 = vld [vmem:[%s19] sm:$0x1]
    %v367 = vlaneseq
    %v368 = vshrl.u32 %v367, 7
    %v369 = vsub.s32 0, %v368
    %v370 = vrot.slane %v365, %v369
    %v373 = vsel %vm193, %v127, 0
    %v376 = vsel %vm193, %v128, 0
    %378 = vmatprep.subr.mxu0 0.0
    %379 = vmatpush1.msra.mxu0 %v361
    %380 = vmatprep.subr.mxu0 0.0
    %381 = vmatpush1.msra.mxu0 %v362
    %382 = vmatprep.subr.mxu0 0.0
    %383 = vmatpush1.msra.mxu0 %v363
    %384 = vmatprep.subr.mxu0 0.0
    %385 = vmatpush1.msra.mxu0 %v364
    %386 = vmatprep.subr.mxu0 0.0
    %387 = vmatpush1.msra.mxu0 0.0
    %388 = vmatprep.subr.mxu0 0.0
    %389 = vmatpush1.msra.mxu0 0.0
    %390 = vmatprep.subr.mxu0 0.0
    %391 = vmatpush1.msra.mxu0 0.0
    %392 = vmatprep.subr.mxu0 0.0
    %393 = vmatpush1.msra.mxu0 0.0
    %394 = vmatprep.subr.mxu0 0.0
    %395 = vmatpush1.msra.mxu0 0.0
    %396 = vmatprep.subr.mxu0 0.0
    %397 = vmatpush1.msra.mxu0 0.0
    %398 = vmatprep.subr.mxu0 0.0
    %399 = vmatpush1.msra.mxu0 0.0
    %400 = vmatprep.subr.mxu0 0.0
    %401 = vmatpush1.msra.mxu0 0.0
    %402 = vmatprep.subr.mxu0 0.0
    %403 = vmatpush1.msra.mxu0 0.0
    %404 = vmatprep.subr.mxu0 0.0
    %405 = vmatpush1.msra.mxu0 0.0
    %406 = vmatprep.subr.mxu0 0.0
    %407 = vmatpush1.msra.mxu0 0.0
    %408 = vmatprep.subr.mxu0 0.0
    %409 = vmatpush1.msra.mxu0 0.0
    %410 = vmatprep.subr.mxu0 0.0
    %411 = vmatpush1.msra.mxu0 0.0
    %412 = vmatprep.subr.mxu0 0.0
    %413 = vmatpush1.msra.mxu0 0.0
    %414 = vmatprep.subr.mxu0 0.0
    %415 = vmatpush1.msra.mxu0 0.0
    %416 = vmatprep.subr.mxu0 0.0
    %417 = vmatpush1.msra.mxu0 0.0
    %418 = vmatprep.subr.mxu0 0.0
    %419 = vmatpush1.msra.mxu0 0.0
    %420 = vmatprep.subr.mxu0 0.0
    %421 = vmatpush1.msra.mxu0 0.0
    %422 = vmatprep.subr.mxu0 0.0
    %423 = vmatpush1.msra.mxu0 0.0
    %424 = vmatprep.subr.mxu0 0.0
    %425 = vmatpush1.msra.mxu0 0.0
    %426 = vmatprep.subr.mxu0 0.0
    %427 = vmatpush1.msra.mxu0 0.0
    %428 = vmatprep.subr.mxu0 0.0
    %429 = vmatpush1.msra.mxu0 0.0
    %430 = vmatprep.subr.mxu0 0.0
    %431 = vmatpush1.msra.mxu0 0.0
    %432 = vmatprep.subr.mxu0 0.0
    %433 = vmatpush1.msra.mxu0 0.0
    %434 = vmatprep.subr.mxu0 0.0
    %435 = vmatpush1.msra.mxu0 0.0
    %436 = vmatprep.subr.mxu0 0.0
    %437 = vmatpush1.msra.mxu0 0.0
    %438 = vmatprep.subr.mxu0 0.0
    %439 = vmatpush1.msra.mxu0 0.0
    %440 = vmatprep.subr.mxu0 0.0
    %441 = vmatpush1.msra.mxu0 0.0
    %442 = vmatprep.mubr.f32.mxu0 0.0
    %443 = vmatmul.mubr.f32.gmra.mrb[0].mxu0 %v373
    %v444 = vpop.f32.mrb[0].mxu0
    %v445 = vadd.f32 %v370, %v444
    %v446 = vpop.f32.mrb[0].mxu0
    %447 = vmatprep.mubr.f32.mxu0 0.0
    %448 = vmatmul.mubr.f32.gmra.mrb[0].mxu0 %v376
    %v449 = vpop.f32.mrb[0].mxu0
    %v450 = vadd.f32 %v370, %v449
    %v451 = vpop.f32.mrb[0].mxu0
    %452 = vdwg.mxu0
    %vm453 = vcmask 64512
    %v455 = vsel %vm453, %v267, 0
    %v458 = vsel %vm453, %v272, 0
    %v461 = vsel %vm453, %v353, 0
    %v464 = vsel %vm453, %v358, 0
    %466 = vmatprep.subr.mxu0 0.0
    %467 = vmatpush1.xpose.msra.mxu0 %v461
    %468 = vmatprep.subr.mxu0 0.0
    %469 = vmatpush1.xpose.msra.mxu0 %v464
    %470 = vmatprep.subr.mxu0 0.0
    %471 = vmatpush1.xpose.msra.mxu0 0.0
    %472 = vmatprep.subr.mxu0 0.0
    %473 = vmatpush1.xpose.msra.mxu0 0.0
    %474 = vmatprep.subr.mxu0 0.0
    %475 = vmatpush1.xpose.msra.mxu0 0.0
    %476 = vmatprep.subr.mxu0 0.0
    %477 = vmatpush1.xpose.msra.mxu0 0.0
    %478 = vmatprep.subr.mxu0 0.0
    %479 = vmatpush1.xpose.msra.mxu0 0.0
    %480 = vmatprep.subr.mxu0 0.0
    %481 = vmatpush1.xpose.msra.mxu0 0.0
    %482 = vmatprep.subr.mxu0 0.0
    %483 = vmatpush1.xpose.msra.mxu0 0.0
    %484 = vmatprep.subr.mxu0 0.0
    %485 = vmatpush1.xpose.msra.mxu0 0.0
    %486 = vmatprep.subr.mxu0 0.0
    %487 = vmatpush1.xpose.msra.mxu0 0.0
    %488 = vmatprep.subr.mxu0 0.0
    %489 = vmatpush1.xpose.msra.mxu0 0.0
    %490 = vmatprep.subr.mxu0 0.0
    %491 = vmatpush1.xpose.msra.mxu0 0.0
    %492 = vmatprep.subr.mxu0 0.0
    %493 = vmatpush1.xpose.msra.mxu0 0.0
    %494 = vmatprep.subr.mxu0 0.0
    %495 = vmatpush1.xpose.msra.mxu0 0.0
    %496 = vmatprep.subr.mxu0 0.0
    %497 = vmatpush1.xpose.msra.mxu0 0.0
    %498 = vmatprep.subr.mxu0 0.0
    %499 = vmatpush1.xpose.msra.mxu0 0.0
    %500 = vmatprep.subr.mxu0 0.0
    %501 = vmatpush1.xpose.msra.mxu0 0.0
    %502 = vmatprep.subr.mxu0 0.0
    %503 = vmatpush1.xpose.msra.mxu0 0.0
    %504 = vmatprep.subr.mxu0 0.0
    %505 = vmatpush1.xpose.msra.mxu0 0.0
    %506 = vmatprep.subr.mxu0 0.0
    %507 = vmatpush1.xpose.msra.mxu0 0.0
    %508 = vmatprep.subr.mxu0 0.0
    %509 = vmatpush1.xpose.msra.mxu0 0.0
    %510 = vmatprep.subr.mxu0 0.0
    %511 = vmatpush1.xpose.msra.mxu0 0.0
    %512 = vmatprep.subr.mxu0 0.0
    %513 = vmatpush1.xpose.msra.mxu0 0.0
    %514 = vmatprep.subr.mxu0 0.0
    %515 = vmatpush1.xpose.msra.mxu0 0.0
    %516 = vmatprep.subr.mxu0 0.0
    %517 = vmatpush1.xpose.msra.mxu0 0.0
    %518 = vmatprep.subr.mxu0 0.0
    %519 = vmatpush1.xpose.msra.mxu0 0.0
    %520 = vmatprep.subr.mxu0 0.0
    %521 = vmatpush1.xpose.msra.mxu0 0.0
    %522 = vmatprep.subr.mxu0 0.0
    %523 = vmatpush1.xpose.msra.mxu0 0.0
    %524 = vmatprep.subr.mxu0 0.0
    %525 = vmatpush1.xpose.msra.mxu0 0.0
    %526 = vmatprep.subr.mxu0 0.0
    %527 = vmatpush1.xpose.msra.mxu0 0.0
    %528 = vmatprep.subr.mxu0 0.0
    %529 = vmatpush1.xpose.msra.mxu0 0.0
    %530 = vmatprep.mubr.f32.mxu0 0.0
    %531 = vmatmul.mubr.f32.gmra.mrb[0].mxu0 %v455
    %v532 = vpop.f32.mrb[0].mxu0
    %v533 = vadd.f32 0.0, %v532
    %v534 = vpop.f32.mrb[0].mxu0
    %535 = vmatprep.mubr.f32.mxu0 0.0
    %536 = vmatmul.mubr.f32.gmra.mrb[0].mxu0 %v458
    %v537 = vpop.f32.mrb[0].mxu0
    %v538 = vadd.f32 0.0, %v537
    %v539 = vpop.f32.mrb[0].mxu0
    %540 = vdwg.mxu0
    %v541 = vmul.f32 %v533, 0.35355338
    %v542 = vmul.f32 %v538, 0.35355338
    %v543 = vsel %vm178, %v541, -inf
    %v544 = vsel %vm179, %v542, -inf
    %vm545 = vcmask 130048
    %v546 = vsel %vm545, %v543, -inf
    %547 = vmax.xlane.f32.xlu0 %v546
    %v548 = vpop.xlane.xlu0 %547
    %v549 = vsel %vm545, %v544, -inf
    %550 = vmax.xlane.f32.xlu0 %v549
    %v551 = vpop.xlane.xlu0 %550
    %v552 = vsub.f32 %v543, %v548
    %v553 = vsub.f32 %v544, %v551
    %v554 = vmul.f32 %v552, 1.442695
    %v555 = vpow.pop %v554
    %v556 = vmul.f32 %v553, 1.442695
    %v557 = vpow.pop %v556
    %v558 = vsel %vm545, %v555, 0.0
    %559 = vadd.xlane.f32.xlu0 %v558
    %v560 = vpop.xlane.xlu0 %559
    %v561 = vsel %vm545, %v557, 0.0
    %562 = vadd.xlane.f32.xlu0 %v561
    %v563 = vpop.xlane.xlu0 %562
    %v564 = vrcp.pop %v560
    %v565 = vrcp.pop %v563
    %v566 = vmul.f32 %v555, %v564
    %v567 = vmul.f32 %v557, %v565
    %v569 = vsel %vm545, %v566, 0
    %v572 = vsel %vm545, %v567, 0
    %574 = vmatprep.subr.mxu0 0.0
    %575 = vmatpush1.msra.mxu0 %v445
    %576 = vmatprep.subr.mxu0 0.0
    %577 = vmatpush1.msra.mxu0 %v450
    %578 = vmatprep.subr.mxu0 0.0
    %579 = vmatpush1.msra.mxu0 0.0
    %580 = vmatprep.subr.mxu0 0.0
    %581 = vmatpush1.msra.mxu0 0.0
    %582 = vmatprep.subr.mxu0 0.0
    %583 = vmatpush1.msra.mxu0 0.0
    %584 = vmatprep.subr.mxu0 0.0
    %585 = vmatpush1.msra.mxu0 0.0
    %586 = vmatprep.subr.mxu0 0.0
    %587 = vmatpush1.msra.mxu0 0.0
    %588 = vmatprep.subr.mxu0 0.0
    %589 = vmatpush1.msra.mxu0 0.0
    %590 = vmatprep.subr.mxu0 0.0
    %591 = vmatpush1.msra.mxu0 0.0
    %592 = vmatprep.subr.mxu0 0.0
    %593 = vmatpush1.msra.mxu0 0.0
    %594 = vmatprep.subr.mxu0 0.0
    %595 = vmatpush1.msra.mxu0 0.0
    %596 = vmatprep.subr.mxu0 0.0
    %597 = vmatpush1.msra.mxu0 0.0
    %598 = vmatprep.subr.mxu0 0.0
    %599 = vmatpush1.msra.mxu0 0.0
    %600 = vmatprep.subr.mxu0 0.0
    %601 = vmatpush1.msra.mxu0 0.0
    %602 = vmatprep.subr.mxu0 0.0
    %603 = vmatpush1.msra.mxu0 0.0
    %604 = vmatprep.subr.mxu0 0.0
    %605 = vmatpush1.msra.mxu0 0.0
    %606 = vmatprep.subr.mxu0 0.0
    %607 = vmatpush1.msra.mxu0 0.0
    %608 = vmatprep.subr.mxu0 0.0
    %609 = vmatpush1.msra.mxu0 0.0
    %610 = vmatprep.subr.mxu0 0.0
    %611 = vmatpush1.msra.mxu0 0.0
    %612 = vmatprep.subr.mxu0 0.0
    %613 = vmatpush1.msra.mxu0 0.0
    %614 = vmatprep.subr.mxu0 0.0
    %615 = vmatpush1.msra.mxu0 0.0
    %616 = vmatprep.subr.mxu0 0.0
    %617 = vmatpush1.msra.mxu0 0.0
    %618 = vmatprep.subr.mxu0 0.0
    %619 = vmatpush1.msra.mxu0 0.0
    %620 = vmatprep.subr.mxu0 0.0
    %621 = vmatpush1.msra.mxu0 0.0
    %622 = vmatprep.subr.mxu0 0.0
    %623 = vmatpush1.msra.mxu0 0.0
    %624 = vmatprep.subr.mxu0 0.0
    %625 = vmatpush1.msra.mxu0 0.0
    %626 = vmatprep.subr.mxu0 0.0
    %627 = vmatpush1.msra.mxu0 0.0
    %628 = vmatprep.subr.mxu0 0.0
    %629 = vmatpush1.msra.mxu0 0.0
    %630 = vmatprep.subr.mxu0 0.0
    %631 = vmatpush1.msra.mxu0 0.0
    %632 = vmatprep.subr.mxu0 0.0
    %633 = vmatpush1.msra.mxu0 0.0
    %634 = vmatprep.subr.mxu0 0.0
    %635 = vmatpush1.msra.mxu0 0.0
    %636 = vmatprep.subr.mxu0 0.0
    %637 = vmatpush1.msra.mxu0 0.0
    %638 = vmatprep.mubr.f32.mxu0 0.0
    %639 = vmatmul.mubr.f32.gmra.mrb[0].mxu0 %v569
    %v640 = vpop.f32.mrb[0].mxu0
    %v641 = vadd.f32 0.0, %v640
    %v642 = vpop.f32.mrb[0].mxu0
    %643 = vmatprep.mubr.f32.mxu0 0.0
    %644 = vmatmul.mubr.f32.gmra.mrb[0].mxu0 %v572
    %v645 = vpop.f32.mrb[0].mxu0
    %v646 = vadd.f32 0.0, %v645
    %v647 = vpop.f32.mrb[0].mxu0
    %648 = vdwg.mxu0
    %v649 = vld [vmem:[%s21] sm:$0xff]
    %s650 = scalar_lea.vmem %s9, 32
    %v651 = vld [vmem:[%s650] sm:$0xff]
    %v652 = vld [vmem:[%s650 + $0x8] sm:$0xff]
    %v653 = vld [vmem:[%s650 + $0x10] sm:$0xff]
    %v654 = vld [vmem:[%s650 + $0x18] sm:$0xff]
    %s655 = scalar_lea.vmem %s15, 1
    %v656 = vld [vmem:[%s655] sm:$0x1]
    %v658 = vlaneseq
    %v659 = vshrl.u32 %v658, 7
    %v660 = vsub.s32 0, %v659
    %v661 = vrot.slane %v656, %v660
    %663 = vmatprep.subr.mxu0 0.0
    %664 = vmatpush1.msra.mxu0 %v651
    %665 = vmatprep.subr.mxu0 0.0
    %666 = vmatpush1.msra.mxu0 %v652
    %667 = vmatprep.subr.mxu0 0.0
    %668 = vmatpush1.msra.mxu0 %v653
    %669 = vmatprep.subr.mxu0 0.0
    %670 = vmatpush1.msra.mxu0 %v654
    %671 = vmatprep.subr.mxu0 0.0
    %672 = vmatpush1.msra.mxu0 0.0
    %673 = vmatprep.subr.mxu0 0.0
    %674 = vmatpush1.msra.mxu0 0.0
    %675 = vmatprep.subr.mxu0 0.0
    %676 = vmatpush1.msra.mxu0 0.0
    %677 = vmatprep.subr.mxu0 0.0
    %678 = vmatpush1.msra.mxu0 0.0
    %679 = vmatprep.subr.mxu0 0.0
    %680 = vmatpush1.msra.mxu0 0.0
    %681 = vmatprep.subr.mxu0 0.0
    %682 = vmatpush1.msra.mxu0 0.0
    %683 = vmatprep.subr.mxu0 0.0
    %684 = vmatpush1.msra.mxu0 0.0
    %685 = vmatprep.subr.mxu0 0.0
    %686 = vmatpush1.msra.mxu0 0.0
    %687 = vmatprep.subr.mxu0 0.0
    %688 = vmatpush1.msra.mxu0 0.0
    %689 = vmatprep.subr.mxu0 0.0
    %690 = vmatpush1.msra.mxu0 0.0
    %691 = vmatprep.subr.mxu0 0.0
    %692 = vmatpush1.msra.mxu0 0.0
    %693 = vmatprep.subr.mxu0 0.0
    %694 = vmatpush1.msra.mxu0 0.0
    %695 = vmatprep.subr.mxu0 0.0
    %696 = vmatpush1.msra.mxu0 0.0
    %697 = vmatprep.subr.mxu0 0.0
    %698 = vmatpush1.msra.mxu0 0.0
    %699 = vmatprep.subr.mxu0 0.0
    %700 = vmatpush1.msra.mxu0 0.0
    %701 = vmatprep.subr.mxu0 0.0
    %702 = vmatpush1.msra.mxu0 0.0
    %703 = vmatprep.subr.mxu0 0.0
    %704 = vmatpush1.msra.mxu0 0.0
    %705 = vmatprep.subr.mxu0 0.0
    %706 = vmatpush1.msra.mxu0 0.0
    %707 = vmatprep.subr.mxu0 0.0
    %708 = vmatpush1.msra.mxu0 0.0
    %709 = vmatprep.subr.mxu0 0.0
    %710 = vmatpush1.msra.mxu0 0.0
    %711 = vmatprep.subr.mxu0 0.0
    %712 = vmatpush1.msra.mxu0 0.0
    %713 = vmatprep.subr.mxu0 0.0
    %714 = vmatpush1.msra.mxu0 0.0
    %715 = vmatprep.subr.mxu0 0.0
    %716 = vmatpush1.msra.mxu0 0.0
    %717 = vmatprep.subr.mxu0 0.0
    %718 = vmatpush1.msra.mxu0 0.0
    %719 = vmatprep.subr.mxu0 0.0
    %720 = vmatpush1.msra.mxu0 0.0
    %721 = vmatprep.subr.mxu0 0.0
    %722 = vmatpush1.msra.mxu0 0.0
    %723 = vmatprep.subr.mxu0 0.0
    %724 = vmatpush1.msra.mxu0 0.0
    %725 = vmatprep.subr.mxu0 0.0
    %726 = vmatpush1.msra.mxu0 0.0
    %727 = vmatprep.mubr.f32.mxu0 0.0
    %728 = vmatmul.mubr.f32.gmra.mrb[0].mxu0 %v195
    %v729 = vpop.f32.mrb[0].mxu0
    %v730 = vadd.f32 %v661, %v729
    %v731 = vpop.f32.mrb[0].mxu0
    %732 = vmatprep.mubr.f32.mxu0 0.0
    %733 = vmatmul.mubr.f32.gmra.mrb[0].mxu0 %v198
    %v734 = vpop.f32.mrb[0].mxu0
    %v735 = vadd.f32 %v661, %v734
    %v736 = vpop.f32.mrb[0].mxu0
    %737 = vdwg.mxu0
    %s738 = scalar_lea.vmem %s11, 32
    %v739 = vld [vmem:[%s738] sm:$0xff]
    %v740 = vld [vmem:[%s738 + $0x8] sm:$0xff]
    %v741 = vld [vmem:[%s738 + $0x10] sm:$0xff]
    %v742 = vld [vmem:[%s738 + $0x18] sm:$0xff]
    %s743 = scalar_lea.vmem %s17, 1
    %v744 = vld [vmem:[%s743] sm:$0x1]
    %v746 = vlaneseq
    %v747 = vshrl.u32 %v746, 7
    %v748 = vsub.s32 0, %v747
    %v749 = vrot.slane %v744, %v748
    %751 = vmatprep.subr.mxu0 0.0
    %752 = vmatpush1.msra.mxu0 %v739
    %753 = vmatprep.subr.mxu0 0.0
    %754 = vmatpush1.msra.mxu0 %v740
    %755 = vmatprep.subr.mxu0 0.0
    %756 = vmatpush1.msra.mxu0 %v741
    %757 = vmatprep.subr.mxu0 0.0
    %758 = vmatpush1.msra.mxu0 %v742
    %759 = vmatprep.subr.mxu0 0.0
    %760 = vmatpush1.msra.mxu0 0.0
    %761 = vmatprep.subr.mxu0 0.0
    %762 = vmatpush1.msra.mxu0 0.0
    %763 = vmatprep.subr.mxu0 0.0
    %764 = vmatpush1.msra.mxu0 0.0
    %765 = vmatprep.subr.mxu0 0.0
    %766 = vmatpush1.msra.mxu0 0.0
    %767 = vmatprep.subr.mxu0 0.0
    %768 = vmatpush1.msra.mxu0 0.0
    %769 = vmatprep.subr.mxu0 0.0
    %770 = vmatpush1.msra.mxu0 0.0
    %771 = vmatprep.subr.mxu0 0.0
    %772 = vmatpush1.msra.mxu0 0.0
    %773 = vmatprep.subr.mxu0 0.0
    %774 = vmatpush1.msra.mxu0 0.0
    %775 = vmatprep.subr.mxu0 0.0
    %776 = vmatpush1.msra.mxu0 0.0
    %777 = vmatprep.subr.mxu0 0.0
    %778 = vmatpush1.msra.mxu0 0.0
    %779 = vmatprep.subr.mxu0 0.0
    %780 = vmatpush1.msra.mxu0 0.0
    %781 = vmatprep.subr.mxu0 0.0
    %782 = vmatpush1.msra.mxu0 0.0
    %783 = vmatprep.subr.mxu0 0.0
    %784 = vmatpush1.msra.mxu0 0.0
    %785 = vmatprep.subr.mxu0 0.0
    %786 = vmatpush1.msra.mxu0 0.0
    %787 = vmatprep.subr.mxu0 0.0
    %788 = vmatpush1.msra.mxu0 0.0
    %789 = vmatprep.subr.mxu0 0.0
    %790 = vmatpush1.msra.mxu0 0.0
    %791 = vmatprep.subr.mxu0 0.0
    %792 = vmatpush1.msra.mxu0 0.0
    %793 = vmatprep.subr.mxu0 0.0
    %794 = vmatpush1.msra.mxu0 0.0
    %795 = vmatprep.subr.mxu0 0.0
    %796 = vmatpush1.msra.mxu0 0.0
    %797 = vmatprep.subr.mxu0 0.0
    %798 = vmatpush1.msra.mxu0 0.0
    %799 = vmatprep.subr.mxu0 0.0
    %800 = vmatpush1.msra.mxu0 0.0
    %801 = vmatprep.subr.mxu0 0.0
    %802 = vmatpush1.msra.mxu0 0.0
    %803 = vmatprep.subr.mxu0 0.0
    %804 = vmatpush1.msra.mxu0 0.0
    %805 = vmatprep.subr.mxu0 0.0
    %806 = vmatpush1.msra.mxu0 0.0
    %807 = vmatprep.subr.mxu0 0.0
    %808 = vmatpush1.msra.mxu0 0.0
    %809 = vmatprep.subr.mxu0 0.0
    %810 = vmatpush1.msra.mxu0 0.0
    %811 = vmatprep.subr.mxu0 0.0
    %812 = vmatpush1.msra.mxu0 0.0
    %813 = vmatprep.subr.mxu0 0.0
    %814 = vmatpush1.msra.mxu0 0.0
    %815 = vmatprep.mubr.f32.mxu0 0.0
    %816 = vmatmul.mubr.f32.gmra.mrb[0].mxu0 %v195
    %v817 = vpop.f32.mrb[0].mxu0
    %v818 = vadd.f32 %v749, %v817
    %v819 = vpop.f32.mrb[0].mxu0
    %820 = vmatprep.mubr.f32.mxu0 0.0
    %821 = vmatmul.mubr.f32.gmra.mrb[0].mxu0 %v198
    %v822 = vpop.f32.mrb[0].mxu0
    %v823 = vadd.f32 %v749, %v822
    %v824 = vpop.f32.mrb[0].mxu0
    %825 = vdwg.mxu0
    %s826 = scalar_lea.vmem %s13, 32
    %v827 = vld [vmem:[%s826] sm:$0xff]
    %v828 = vld [vmem:[%s826 + $0x8] sm:$0xff]
    %v829 = vld [vmem:[%s826 + $0x10] sm:$0xff]
    %v830 = vld [vmem:[%s826 + $0x18] sm:$0xff]
    %s831 = scalar_lea.vmem %s19, 1
    %v832 = vld [vmem:[%s831] sm:$0x1]
    %v834 = vlaneseq
    %v835 = vshrl.u32 %v834, 7
    %v836 = vsub.s32 0, %v835
    %v837 = vrot.slane %v832, %v836
    %839 = vmatprep.subr.mxu0 0.0
    %840 = vmatpush1.msra.mxu0 %v827
    %841 = vmatprep.subr.mxu0 0.0
    %842 = vmatpush1.msra.mxu0 %v828
    %843 = vmatprep.subr.mxu0 0.0
    %844 = vmatpush1.msra.mxu0 %v829
    %845 = vmatprep.subr.mxu0 0.0
    %846 = vmatpush1.msra.mxu0 %v830
    %847 = vmatprep.subr.mxu0 0.0
    %848 = vmatpush1.msra.mxu0 0.0
    %849 = vmatprep.subr.mxu0 0.0
    %850 = vmatpush1.msra.mxu0 0.0
    %851 = vmatprep.subr.mxu0 0.0
    %852 = vmatpush1.msra.mxu0 0.0
    %853 = vmatprep.subr.mxu0 0.0
    %854 = vmatpush1.msra.mxu0 0.0
    %855 = vmatprep.subr.mxu0 0.0
    %856 = vmatpush1.msra.mxu0 0.0
    %857 = vmatprep.subr.mxu0 0.0
    %858 = vmatpush1.msra.mxu0 0.0
    %859 = vmatprep.subr.mxu0 0.0
    %860 = vmatpush1.msra.mxu0 0.0
    %861 = vmatprep.subr.mxu0 0.0
    %862 = vmatpush1.msra.mxu0 0.0
    %863 = vmatprep.subr.mxu0 0.0
    %864 = vmatpush1.msra.mxu0 0.0
    %865 = vmatprep.subr.mxu0 0.0
    %866 = vmatpush1.msra.mxu0 0.0
    %867 = vmatprep.subr.mxu0 0.0
    %868 = vmatpush1.msra.mxu0 0.0
    %869 = vmatprep.subr.mxu0 0.0
    %870 = vmatpush1.msra.mxu0 0.0
    %871 = vmatprep.subr.mxu0 0.0
    %872 = vmatpush1.msra.mxu0 0.0
    %873 = vmatprep.subr.mxu0 0.0
    %874 = vmatpush1.msra.mxu0 0.0
    %875 = vmatprep.subr.mxu0 0.0
    %876 = vmatpush1.msra.mxu0 0.0
    %877 = vmatprep.subr.mxu0 0.0
    %878 = vmatpush1.msra.mxu0 0.0
    %879 = vmatprep.subr.mxu0 0.0
    %880 = vmatpush1.msra.mxu0 0.0
    %881 = vmatprep.subr.mxu0 0.0
    %882 = vmatpush1.msra.mxu0 0.0
    %883 = vmatprep.subr.mxu0 0.0
    %884 = vmatpush1.msra.mxu0 0.0
    %885 = vmatprep.subr.mxu0 0.0
    %886 = vmatpush1.msra.mxu0 0.0
    %887 = vmatprep.subr.mxu0 0.0
    %888 = vmatpush1.msra.mxu0 0.0
    %889 = vmatprep.subr.mxu0 0.0
    %890 = vmatpush1.msra.mxu0 0.0
    %891 = vmatprep.subr.mxu0 0.0
    %892 = vmatpush1.msra.mxu0 0.0
    %893 = vmatprep.subr.mxu0 0.0
    %894 = vmatpush1.msra.mxu0 0.0
    %895 = vmatprep.subr.mxu0 0.0
    %896 = vmatpush1.msra.mxu0 0.0
    %897 = vmatprep.subr.mxu0 0.0
    %898 = vmatpush1.msra.mxu0 0.0
    %899 = vmatprep.subr.mxu0 0.0
    %900 = vmatpush1.msra.mxu0 0.0
    %901 = vmatprep.subr.mxu0 0.0
    %902 = vmatpush1.msra.mxu0 0.0
    %903 = vmatprep.mubr.f32.mxu0 0.0
    %904 = vmatmul.mubr.f32.gmra.mrb[0].mxu0 %v373
    %v905 = vpop.f32.mrb[0].mxu0
    %v906 = vadd.f32 %v837, %v905
    %v907 = vpop.f32.mrb[0].mxu0
    %908 = vmatprep.mubr.f32.mxu0 0.0
    %909 = vmatmul.mubr.f32.gmra.mrb[0].mxu0 %v376
    %v910 = vpop.f32.mrb[0].mxu0
    %v911 = vadd.f32 %v837, %v910
    %v912 = vpop.f32.mrb[0].mxu0
    %913 = vdwg.mxu0
    %v915 = vsel %vm453, %v730, 0
    %v918 = vsel %vm453, %v735, 0
    %v921 = vsel %vm453, %v818, 0
    %v924 = vsel %vm453, %v823, 0
    %926 = vmatprep.subr.mxu0 0.0
    %927 = vmatpush1.xpose.msra.mxu0 %v921
    %928 = vmatprep.subr.mxu0 0.0
    %929 = vmatpush1.xpose.msra.mxu0 %v924
    %930 = vmatprep.subr.mxu0 0.0
    %931 = vmatpush1.xpose.msra.mxu0 0.0
    %932 = vmatprep.subr.mxu0 0.0
    %933 = vmatpush1.xpose.msra.mxu0 0.0
    %934 = vmatprep.subr.mxu0 0.0
    %935 = vmatpush1.xpose.msra.mxu0 0.0
    %936 = vmatprep.subr.mxu0 0.0
    %937 = vmatpush1.xpose.msra.mxu0 0.0
    %938 = vmatprep.subr.mxu0 0.0
    %939 = vmatpush1.xpose.msra.mxu0 0.0
    %940 = vmatprep.subr.mxu0 0.0
    %941 = vmatpush1.xpose.msra.mxu0 0.0
    %942 = vmatprep.subr.mxu0 0.0
    %943 = vmatpush1.xpose.msra.mxu0 0.0
    %944 = vmatprep.subr.mxu0 0.0
    %945 = vmatpush1.xpose.msra.mxu0 0.0
    %946 = vmatprep.subr.mxu0 0.0
    %947 = vmatpush1.xpose.msra.mxu0 0.0
    %948 = vmatprep.subr.mxu0 0.0
    %949 = vmatpush1.xpose.msra.mxu0 0.0
    %950 = vmatprep.subr.mxu0 0.0
    %951 = vmatpush1.xpose.msra.mxu0 0.0
    %952 = vmatprep.subr.mxu0 0.0
    %953 = vmatpush1.xpose.msra.mxu0 0.0
    %954 = vmatprep.subr.mxu0 0.0
    %955 = vmatpush1.xpose.msra.mxu0 0.0
    %956 = vmatprep.subr.mxu0 0.0
    %957 = vmatpush1.xpose.msra.mxu0 0.0
    %958 = vmatprep.subr.mxu0 0.0
    %959 = vmatpush1.xpose.msra.mxu0 0.0
    %960 = vmatprep.subr.mxu0 0.0
    %961 = vmatpush1.xpose.msra.mxu0 0.0
    %962 = vmatprep.subr.mxu0 0.0
    %963 = vmatpush1.xpose.msra.mxu0 0.0
    %964 = vmatprep.subr.mxu0 0.0
    %965 = vmatpush1.xpose.msra.mxu0 0.0
    %966 = vmatprep.subr.mxu0 0.0
    %967 = vmatpush1.xpose.msra.mxu0 0.0
    %968 = vmatprep.subr.mxu0 0.0
    %969 = vmatpush1.xpose.msra.mxu0 0.0
    %970 = vmatprep.subr.mxu0 0.0
    %971 = vmatpush1.xpose.msra.mxu0 0.0
    %972 = vmatprep.subr.mxu0 0.0
    %973 = vmatpush1.xpose.msra.mxu0 0.0
    %974 = vmatprep.subr.mxu0 0.0
    %975 = vmatpush1.xpose.msra.mxu0 0.0
    %976 = vmatprep.subr.mxu0 0.0
    %977 = vmatpush1.xpose.msra.mxu0 0.0
    %978 = vmatprep.subr.mxu0 0.0
    %979 = vmatpush1.xpose.msra.mxu0 0.0
    %980 = vmatprep.subr.mxu0 0.0
    %981 = vmatpush1.xpose.msra.mxu0 0.0
    %982 = vmatprep.subr.mxu0 0.0
    %983 = vmatpush1.xpose.msra.mxu0 0.0
    %984 = vmatprep.subr.mxu0 0.0
    %985 = vmatpush1.xpose.msra.mxu0 0.0
    %986 = vmatprep.subr.mxu0 0.0
    %987 = vmatpush1.xpose.msra.mxu0 0.0
    %988 = vmatprep.subr.mxu0 0.0
    %989 = vmatpush1.xpose.msra.mxu0 0.0
    %990 = vmatprep.mubr.f32.mxu0 0.0
    %991 = vmatmul.mubr.f32.gmra.mrb[0].mxu0 %v915
    %v992 = vpop.f32.mrb[0].mxu0
    %v993 = vadd.f32 0.0, %v992
    %v994 = vpop.f32.mrb[0].mxu0
    %995 = vmatprep.mubr.f32.mxu0 0.0
    %996 = vmatmul.mubr.f32.gmra.mrb[0].mxu0 %v918
    %v997 = vpop.f32.mrb[0].mxu0
    %v998 = vadd.f32 0.0, %v997
    %v999 = vpop.f32.mrb[0].mxu0
    %1000 = vdwg.mxu0
    %v1001 = vmul.f32 %v993, 0.35355338
    %v1002 = vmul.f32 %v998, 0.35355338
    %v1003 = vsel %vm178, %v1001, -inf
    %v1004 = vsel %vm179, %v1002, -inf
    %v1005 = vsel %vm545, %v1003, -inf
    %1006 = vmax.xlane.f32.xlu0 %v1005
    %v1007 = vpop.xlane.xlu0 %1006
    %v1008 = vsel %vm545, %v1004, -inf
    %1009 = vmax.xlane.f32.xlu0 %v1008
    %v1010 = vpop.xlane.xlu0 %1009
    %v1011 = vsub.f32 %v1003, %v1007
    %v1012 = vsub.f32 %v1004, %v1010
    %v1013 = vmul.f32 %v1011, 1.442695
    %v1014 = vpow.pop %v1013
    %v1015 = vmul.f32 %v1012, 1.442695
    %v1016 = vpow.pop %v1015
    %v1017 = vsel %vm545, %v1014, 0.0
    %1018 = vadd.xlane.f32.xlu0 %v1017
    %v1019 = vpop.xlane.xlu0 %1018
    %v1020 = vsel %vm545, %v1016, 0.0
    %1021 = vadd.xlane.f32.xlu0 %v1020
    %v1022 = vpop.xlane.xlu0 %1021
    %v1023 = vrcp.pop %v1019
    %v1024 = vrcp.pop %v1022
    %v1025 = vmul.f32 %v1014, %v1023
    %v1026 = vmul.f32 %v1016, %v1024
    %v1028 = vsel %vm545, %v1025, 0
    %v1031 = vsel %vm545, %v1026, 0
    %1033 = vmatprep.subr.mxu0 0.0
    %1034 = vmatpush1.msra.mxu0 %v906
    %1035 = vmatprep.subr.mxu0 0.0
    %1036 = vmatpush1.msra.mxu0 %v911
    %1037 = vmatprep.subr.mxu0 0.0
    %1038 = vmatpush1.msra.mxu0 0.0
    %1039 = vmatprep.subr.mxu0 0.0
    %1040 = vmatpush1.msra.mxu0 0.0
    %1041 = vmatprep.subr.mxu0 0.0
    %1042 = vmatpush1.msra.mxu0 0.0
    %1043 = vmatprep.subr.mxu0 0.0
    %1044 = vmatpush1.msra.mxu0 0.0
    %1045 = vmatprep.subr.mxu0 0.0
    %1046 = vmatpush1.msra.mxu0 0.0
    %1047 = vmatprep.subr.mxu0 0.0
    %1048 = vmatpush1.msra.mxu0 0.0
    %1049 = vmatprep.subr.mxu0 0.0
    %1050 = vmatpush1.msra.mxu0 0.0
    %1051 = vmatprep.subr.mxu0 0.0
    %1052 = vmatpush1.msra.mxu0 0.0
    %1053 = vmatprep.subr.mxu0 0.0
    %1054 = vmatpush1.msra.mxu0 0.0
    %1055 = vmatprep.subr.mxu0 0.0
    %1056 = vmatpush1.msra.mxu0 0.0
    %1057 = vmatprep.subr.mxu0 0.0
    %1058 = vmatpush1.msra.mxu0 0.0
    %1059 = vmatprep.subr.mxu0 0.0
    %1060 = vmatpush1.msra.mxu0 0.0
    %1061 = vmatprep.subr.mxu0 0.0
    %1062 = vmatpush1.msra.mxu0 0.0
    %1063 = vmatprep.subr.mxu0 0.0
    %1064 = vmatpush1.msra.mxu0 0.0
    %1065 = vmatprep.subr.mxu0 0.0
    %1066 = vmatpush1.msra.mxu0 0.0
    %1067 = vmatprep.subr.mxu0 0.0
    %1068 = vmatpush1.msra.mxu0 0.0
    %1069 = vmatprep.subr.mxu0 0.0
    %1070 = vmatpush1.msra.mxu0 0.0
    %1071 = vmatprep.subr.mxu0 0.0
    %1072 = vmatpush1.msra.mxu0 0.0
    %1073 = vmatprep.subr.mxu0 0.0
    %1074 = vmatpush1.msra.mxu0 0.0
    %1075 = vmatprep.subr.mxu0 0.0
    %1076 = vmatpush1.msra.mxu0 0.0
    %1077 = vmatprep.subr.mxu0 0.0
    %1078 = vmatpush1.msra.mxu0 0.0
    %1079 = vmatprep.subr.mxu0 0.0
    %1080 = vmatpush1.msra.mxu0 0.0
    %1081 = vmatprep.subr.mxu0 0.0
    %1082 = vmatpush1.msra.mxu0 0.0
    %1083 = vmatprep.subr.mxu0 0.0
    %1084 = vmatpush1.msra.mxu0 0.0
    %1085 = vmatprep.subr.mxu0 0.0
    %1086 = vmatpush1.msra.mxu0 0.0
    %1087 = vmatprep.subr.mxu0 0.0
    %1088 = vmatpush1.msra.mxu0 0.0
    %1089 = vmatprep.subr.mxu0 0.0
    %1090 = vmatpush1.msra.mxu0 0.0
    %1091 = vmatprep.subr.mxu0 0.0
    %1092 = vmatpush1.msra.mxu0 0.0
    %1093 = vmatprep.subr.mxu0 0.0
    %1094 = vmatpush1.msra.mxu0 0.0
    %1095 = vmatprep.subr.mxu0 0.0
    %1096 = vmatpush1.msra.mxu0 0.0
    %1097 = vmatprep.mubr.f32.mxu0 0.0
    %1098 = vmatmul.mubr.f32.gmra.mrb[0].mxu0 %v1028
    %v1099 = vpop.f32.mrb[0].mxu0
    %v1100 = vadd.f32 0.0, %v1099
    %v1101 = vpop.f32.mrb[0].mxu0
    %1102 = vmatprep.mubr.f32.mxu0 0.0
    %1103 = vmatmul.mubr.f32.gmra.mrb[0].mxu0 %v1031
    %v1104 = vpop.f32.mrb[0].mxu0
    %v1105 = vadd.f32 0.0, %v1104
    %v1106 = vpop.f32.mrb[0].mxu0
    %1107 = vdwg.mxu0
    %s1108 = scalar_lea.vmem %s21, 8
    %v1109 = vld [vmem:[%s1108] sm:$0xff]
    %v1111 = vsel %vm453, %v1100, 0
    %v1114 = vsel %vm453, %v1105, 0
    %1116 = vmatprep.subr.mxu0 0.0
    %1117 = vmatpush1.msra.mxu0 %v1109
    %1118 = vmatprep.subr.mxu0 0.0
    %1119 = vmatpush1.msra.mxu0 0.0
    %1120 = vmatprep.subr.mxu0 0.0
    %1121 = vmatpush1.msra.mxu0 0.0
    %1122 = vmatprep.subr.mxu0 0.0
    %1123 = vmatpush1.msra.mxu0 0.0
    %1124 = vmatprep.subr.mxu0 0.0
    %1125 = vmatpush1.msra.mxu0 0.0
    %1126 = vmatprep.subr.mxu0 0.0
    %1127 = vmatpush1.msra.mxu0 0.0
    %1128 = vmatprep.subr.mxu0 0.0
    %1129 = vmatpush1.msra.mxu0 0.0
    %1130 = vmatprep.subr.mxu0 0.0
    %1131 = vmatpush1.msra.mxu0 0.0
    %1132 = vmatprep.subr.mxu0 0.0
    %1133 = vmatpush1.msra.mxu0 0.0
    %1134 = vmatprep.subr.mxu0 0.0
    %1135 = vmatpush1.msra.mxu0 0.0
    %1136 = vmatprep.subr.mxu0 0.0
    %1137 = vmatpush1.msra.mxu0 0.0
    %1138 = vmatprep.subr.mxu0 0.0
    %1139 = vmatpush1.msra.mxu0 0.0
    %1140 = vmatprep.subr.mxu0 0.0
    %1141 = vmatpush1.msra.mxu0 0.0
    %1142 = vmatprep.subr.mxu0 0.0
    %1143 = vmatpush1.msra.mxu0 0.0
    %1144 = vmatprep.subr.mxu0 0.0
    %1145 = vmatpush1.msra.mxu0 0.0
    %1146 = vmatprep.subr.mxu0 0.0
    %1147 = vmatpush1.msra.mxu0 0.0
    %1148 = vmatprep.subr.mxu0 0.0
    %1149 = vmatpush1.msra.mxu0 0.0
    %1150 = vmatprep.subr.mxu0 0.0
    %1151 = vmatpush1.msra.mxu0 0.0
    %1152 = vmatprep.subr.mxu0 0.0
    %1153 = vmatpush1.msra.mxu0 0.0
    %1154 = vmatprep.subr.mxu0 0.0
    %1155 = vmatpush1.msra.mxu0 0.0
    %1156 = vmatprep.subr.mxu0 0.0
    %1157 = vmatpush1.msra.mxu0 0.0
    %1158 = vmatprep.subr.mxu0 0.0
    %1159 = vmatpush1.msra.mxu0 0.0
    %1160 = vmatprep.subr.mxu0 0.0
    %1161 = vmatpush1.msra.mxu0 0.0
    %1162 = vmatprep.subr.mxu0 0.0
    %1163 = vmatpush1.msra.mxu0 0.0
    %1164 = vmatprep.subr.mxu0 0.0
    %1165 = vmatpush1.msra.mxu0 0.0
    %1166 = vmatprep.subr.mxu0 0.0
    %1167 = vmatpush1.msra.mxu0 0.0
    %1168 = vmatprep.subr.mxu0 0.0
    %1169 = vmatpush1.msra.mxu0 0.0
    %1170 = vmatprep.subr.mxu0 0.0
    %1171 = vmatpush1.msra.mxu0 0.0
    %1172 = vmatprep.subr.mxu0 0.0
    %1173 = vmatpush1.msra.mxu0 0.0
    %1174 = vmatprep.subr.mxu0 0.0
    %1175 = vmatpush1.msra.mxu0 0.0
    %1176 = vmatprep.subr.mxu0 0.0
    %1177 = vmatpush1.msra.mxu0 0.0
    %1178 = vmatprep.subr.mxu0 0.0
    %1179 = vmatpush1.msra.mxu0 0.0
    %1180 = vmatprep.mubr.f32.mxu0 0.0
    %1181 = vmatmul.mubr.f32.gmra.mrb[0].mxu0 %v1111
    %v1182 = vpop.f32.mrb[0].mxu0
    %v1183 = vadd.f32 0.0, %v1182
    %v1184 = vpop.f32.mrb[0].mxu0
    %1185 = vmatprep.mubr.f32.mxu0 0.0
    %1186 = vmatmul.mubr.f32.gmra.mrb[0].mxu0 %v1114
    %v1187 = vpop.f32.mrb[0].mxu0
    %v1188 = vadd.f32 0.0, %v1187
    %v1189 = vpop.f32.mrb[0].mxu0
    %1190 = vdwg.mxu0
    %v1192 = vsel %vm453, %v641, 0
    %v1195 = vsel %vm453, %v646, 0
    %1197 = vmatprep.subr.mxu0 0.0
    %1198 = vmatpush1.msra.mxu0 %v649
    %1199 = vmatprep.subr.mxu0 0.0
    %1200 = vmatpush1.msra.mxu0 0.0
    %1201 = vmatprep.subr.mxu0 0.0
    %1202 = vmatpush1.msra.mxu0 0.0
    %1203 = vmatprep.subr.mxu0 0.0
    %1204 = vmatpush1.msra.mxu0 0.0
    %1205 = vmatprep.subr.mxu0 0.0
    %1206 = vmatpush1.msra.mxu0 0.0
    %1207 = vmatprep.subr.mxu0 0.0
    %1208 = vmatpush1.msra.mxu0 0.0
    %1209 = vmatprep.subr.mxu0 0.0
    %1210 = vmatpush1.msra.mxu0 0.0
    %1211 = vmatprep.subr.mxu0 0.0
    %1212 = vmatpush1.msra.mxu0 0.0
    %1213 = vmatprep.subr.mxu0 0.0
    %1214 = vmatpush1.msra.mxu0 0.0
    %1215 = vmatprep.subr.mxu0 0.0
    %1216 = vmatpush1.msra.mxu0 0.0
    %1217 = vmatprep.subr.mxu0 0.0
    %1218 = vmatpush1.msra.mxu0 0.0
    %1219 = vmatprep.subr.mxu0 0.0
    %1220 = vmatpush1.msra.mxu0 0.0
    %1221 = vmatprep.subr.mxu0 0.0
    %1222 = vmatpush1.msra.mxu0 0.0
    %1223 = vmatprep.subr.mxu0 0.0
    %1224 = vmatpush1.msra.mxu0 0.0
    %1225 = vmatprep.subr.mxu0 0.0
    %1226 = vmatpush1.msra.mxu0 0.0
    %1227 = vmatprep.subr.mxu0 0.0
    %1228 = vmatpush1.msra.mxu0 0.0
    %1229 = vmatprep.subr.mxu0 0.0
    %1230 = vmatpush1.msra.mxu0 0.0
    %1231 = vmatprep.subr.mxu0 0.0
    %1232 = vmatpush1.msra.mxu0 0.0
    %1233 = vmatprep.subr.mxu0 0.0
    %1234 = vmatpush1.msra.mxu0 0.0
    %1235 = vmatprep.subr.mxu0 0.0
    %1236 = vmatpush1.msra.mxu0 0.0
    %1237 = vmatprep.subr.mxu0 0.0
    %1238 = vmatpush1.msra.mxu0 0.0
    %1239 = vmatprep.subr.mxu0 0.0
    %1240 = vmatpush1.msra.mxu0 0.0
    %1241 = vmatprep.subr.mxu0 0.0
    %1242 = vmatpush1.msra.mxu0 0.0
    %1243 = vmatprep.subr.mxu0 0.0
    %1244 = vmatpush1.msra.mxu0 0.0
    %1245 = vmatprep.subr.mxu0 0.0
    %1246 = vmatpush1.msra.mxu0 0.0
    %1247 = vmatprep.subr.mxu0 0.0
    %1248 = vmatpush1.msra.mxu0 0.0
    %1249 = vmatprep.subr.mxu0 0.0
    %1250 = vmatpush1.msra.mxu0 0.0
    %1251 = vmatprep.subr.mxu0 0.0
    %1252 = vmatpush1.msra.mxu0 0.0
    %1253 = vmatprep.subr.mxu0 0.0
    %1254 = vmatpush1.msra.mxu0 0.0
    %1255 = vmatprep.subr.mxu0 0.0
    %1256 = vmatpush1.msra.mxu0 0.0
    %1257 = vmatprep.subr.mxu0 0.0
    %1258 = vmatpush1.msra.mxu0 0.0
    %1259 = vmatprep.subr.mxu0 0.0
    %1260 = vmatpush1.msra.mxu0 0.0
    %1261 = vmatprep.mubr.f32.mxu0 0.0
    %1262 = vmatmul.mubr.f32.gmra.mrb[0].mxu0 %v1192
    %v1263 = vpop.f32.mrb[0].mxu0
    %v1264 = vadd.f32 %v1183, %v1263
    %v1265 = vpop.f32.mrb[0].mxu0
    %1266 = vmatprep.mubr.f32.mxu0 0.0
    %1267 = vmatmul.mubr.f32.gmra.mrb[0].mxu0 %v1195
    %v1268 = vpop.f32.mrb[0].mxu0
    %v1269 = vadd.f32 %v1188, %v1268
    %v1270 = vpop.f32.mrb[0].mxu0
    %1271 = vdwg.mxu0
    %s1272 = scalar_lea.vmem %s9, 64
    %v1273 = vld [vmem:[%s1272] sm:$0xff]
    %v1274 = vld [vmem:[%s1272 + $0x8] sm:$0xff]
    %v1275 = vld [vmem:[%s1272 + $0x10] sm:$0xff]
    %v1276 = vld [vmem:[%s1272 + $0x18] sm:$0xff]
    %s1277 = scalar_lea.vmem %s15, 2
    %v1278 = vld [vmem:[%s1277] sm:$0x1]
    %v1280 = vlaneseq
    %v1281 = vshrl.u32 %v1280, 7
    %v1282 = vsub.s32 0, %v1281
    %v1283 = vrot.slane %v1278, %v1282
    %1285 = vmatprep.subr.mxu0 0.0
    %1286 = vmatpush1.msra.mxu0 %v1273
    %1287 = vmatprep.subr.mxu0 0.0
    %1288 = vmatpush1.msra.mxu0 %v1274
    %1289 = vmatprep.subr.mxu0 0.0
    %1290 = vmatpush1.msra.mxu0 %v1275
    %1291 = vmatprep.subr.mxu0 0.0
    %1292 = vmatpush1.msra.mxu0 %v1276
    %1293 = vmatprep.subr.mxu0 0.0
    %1294 = vmatpush1.msra.mxu0 0.0
    %1295 = vmatprep.subr.mxu0 0.0
    %1296 = vmatpush1.msra.mxu0 0.0
    %1297 = vmatprep.subr.mxu0 0.0
    %1298 = vmatpush1.msra.mxu0 0.0
    %1299 = vmatprep.subr.mxu0 0.0
    %1300 = vmatpush1.msra.mxu0 0.0
    %1301 = vmatprep.subr.mxu0 0.0
    %1302 = vmatpush1.msra.mxu0 0.0
    %1303 = vmatprep.subr.mxu0 0.0
    %1304 = vmatpush1.msra.mxu0 0.0
    %1305 = vmatprep.subr.mxu0 0.0
    %1306 = vmatpush1.msra.mxu0 0.0
    %1307 = vmatprep.subr.mxu0 0.0
    %1308 = vmatpush1.msra.mxu0 0.0
    %1309 = vmatprep.subr.mxu0 0.0
    %1310 = vmatpush1.msra.mxu0 0.0
    %1311 = vmatprep.subr.mxu0 0.0
    %1312 = vmatpush1.msra.mxu0 0.0
    %1313 = vmatprep.subr.mxu0 0.0
    %1314 = vmatpush1.msra.mxu0 0.0
    %1315 = vmatprep.subr.mxu0 0.0
    %1316 = vmatpush1.msra.mxu0 0.0
    %1317 = vmatprep.subr.mxu0 0.0
    %1318 = vmatpush1.msra.mxu0 0.0
    %1319 = vmatprep.subr.mxu0 0.0
    %1320 = vmatpush1.msra.mxu0 0.0
    %1321 = vmatprep.subr.mxu0 0.0
    %1322 = vmatpush1.msra.mxu0 0.0
    %1323 = vmatprep.subr.mxu0 0.0
    %1324 = vmatpush1.msra.mxu0 0.0
    %1325 = vmatprep.subr.mxu0 0.0
    %1326 = vmatpush1.msra.mxu0 0.0
    %1327 = vmatprep.subr.mxu0 0.0
    %1328 = vmatpush1.msra.mxu0 0.0
    %1329 = vmatprep.subr.mxu0 0.0
    %1330 = vmatpush1.msra.mxu0 0.0
    %1331 = vmatprep.subr.mxu0 0.0
    %1332 = vmatpush1.msra.mxu0 0.0
    %1333 = vmatprep.subr.mxu0 0.0
    %1334 = vmatpush1.msra.mxu0 0.0
    %1335 = vmatprep.subr.mxu0 0.0
    %1336 = vmatpush1.msra.mxu0 0.0
    %1337 = vmatprep.subr.mxu0 0.0
    %1338 = vmatpush1.msra.mxu0 0.0
    %1339 = vmatprep.subr.mxu0 0.0
    %1340 = vmatpush1.msra.mxu0 0.0
    %1341 = vmatprep.subr.mxu0 0.0
    %1342 = vmatpush1.msra.mxu0 0.0
    %1343 = vmatprep.subr.mxu0 0.0
    %1344 = vmatpush1.msra.mxu0 0.0
    %1345 = vmatprep.subr.mxu0 0.0
    %1346 = vmatpush1.msra.mxu0 0.0
    %1347 = vmatprep.subr.mxu0 0.0
    %1348 = vmatpush1.msra.mxu0 0.0
    %1349 = vmatprep.mubr.f32.mxu0 0.0
    %1350 = vmatmul.mubr.f32.gmra.mrb[0].mxu0 %v195
    %v1351 = vpop.f32.mrb[0].mxu0
    %v1352 = vadd.f32 %v1283, %v1351
    %v1353 = vpop.f32.mrb[0].mxu0
    %1354 = vmatprep.mubr.f32.mxu0 0.0
    %1355 = vmatmul.mubr.f32.gmra.mrb[0].mxu0 %v198
    %v1356 = vpop.f32.mrb[0].mxu0
    %v1357 = vadd.f32 %v1283, %v1356
    %v1358 = vpop.f32.mrb[0].mxu0
    %1359 = vdwg.mxu0
    %s1360 = scalar_lea.vmem %s11, 64
    %v1361 = vld [vmem:[%s1360] sm:$0xff]
    %v1362 = vld [vmem:[%s1360 + $0x8] sm:$0xff]
    %v1363 = vld [vmem:[%s1360 + $0x10] sm:$0xff]
    %v1364 = vld [vmem:[%s1360 + $0x18] sm:$0xff]
    %s1365 = scalar_lea.vmem %s17, 2
    %v1366 = vld [vmem:[%s1365] sm:$0x1]
    %v1368 = vlaneseq
    %v1369 = vshrl.u32 %v1368, 7
    %v1370 = vsub.s32 0, %v1369
    %v1371 = vrot.slane %v1366, %v1370
    %1373 = vmatprep.subr.mxu0 0.0
    %1374 = vmatpush1.msra.mxu0 %v1361
    %1375 = vmatprep.subr.mxu0 0.0
    %1376 = vmatpush1.msra.mxu0 %v1362
    %1377 = vmatprep.subr.mxu0 0.0
    %1378 = vmatpush1.msra.mxu0 %v1363
    %1379 = vmatprep.subr.mxu0 0.0
    %1380 = vmatpush1.msra.mxu0 %v1364
    %1381 = vmatprep.subr.mxu0 0.0
    %1382 = vmatpush1.msra.mxu0 0.0
    %1383 = vmatprep.subr.mxu0 0.0
    %1384 = vmatpush1.msra.mxu0 0.0
    %1385 = vmatprep.subr.mxu0 0.0
    %1386 = vmatpush1.msra.mxu0 0.0
    %1387 = vmatprep.subr.mxu0 0.0
    %1388 = vmatpush1.msra.mxu0 0.0
    %1389 = vmatprep.subr.mxu0 0.0
    %1390 = vmatpush1.msra.mxu0 0.0
    %1391 = vmatprep.subr.mxu0 0.0
    %1392 = vmatpush1.msra.mxu0 0.0
    %1393 = vmatprep.subr.mxu0 0.0
    %1394 = vmatpush1.msra.mxu0 0.0
    %1395 = vmatprep.subr.mxu0 0.0
    %1396 = vmatpush1.msra.mxu0 0.0
    %1397 = vmatprep.subr.mxu0 0.0
    %1398 = vmatpush1.msra.mxu0 0.0
    %1399 = vmatprep.subr.mxu0 0.0
    %1400 = vmatpush1.msra.mxu0 0.0
    %1401 = vmatprep.subr.mxu0 0.0
    %1402 = vmatpush1.msra.mxu0 0.0
    %1403 = vmatprep.subr.mxu0 0.0
    %1404 = vmatpush1.msra.mxu0 0.0
    %1405 = vmatprep.subr.mxu0 0.0
    %1406 = vmatpush1.msra.mxu0 0.0
    %1407 = vmatprep.subr.mxu0 0.0
    %1408 = vmatpush1.msra.mxu0 0.0
    %1409 = vmatprep.subr.mxu0 0.0
    %1410 = vmatpush1.msra.mxu0 0.0
    %1411 = vmatprep.subr.mxu0 0.0
    %1412 = vmatpush1.msra.mxu0 0.0
    %1413 = vmatprep.subr.mxu0 0.0
    %1414 = vmatpush1.msra.mxu0 0.0
    %1415 = vmatprep.subr.mxu0 0.0
    %1416 = vmatpush1.msra.mxu0 0.0
    %1417 = vmatprep.subr.mxu0 0.0
    %1418 = vmatpush1.msra.mxu0 0.0
    %1419 = vmatprep.subr.mxu0 0.0
    %1420 = vmatpush1.msra.mxu0 0.0
    %1421 = vmatprep.subr.mxu0 0.0
    %1422 = vmatpush1.msra.mxu0 0.0
    %1423 = vmatprep.subr.mxu0 0.0
    %1424 = vmatpush1.msra.mxu0 0.0
    %1425 = vmatprep.subr.mxu0 0.0
    %1426 = vmatpush1.msra.mxu0 0.0
    %1427 = vmatprep.subr.mxu0 0.0
    %1428 = vmatpush1.msra.mxu0 0.0
    %1429 = vmatprep.subr.mxu0 0.0
    %1430 = vmatpush1.msra.mxu0 0.0
    %1431 = vmatprep.subr.mxu0 0.0
    %1432 = vmatpush1.msra.mxu0 0.0
    %1433 = vmatprep.subr.mxu0 0.0
    %1434 = vmatpush1.msra.mxu0 0.0
    %1435 = vmatprep.subr.mxu0 0.0
    %1436 = vmatpush1.msra.mxu0 0.0
    %1437 = vmatprep.mubr.f32.mxu0 0.0
    %1438 = vmatmul.mubr.f32.gmra.mrb[0].mxu0 %v195
    %v1439 = vpop.f32.mrb[0].mxu0
    %v1440 = vadd.f32 %v1371, %v1439
    %v1441 = vpop.f32.mrb[0].mxu0
    %1442 = vmatprep.mubr.f32.mxu0 0.0
    %1443 = vmatmul.mubr.f32.gmra.mrb[0].mxu0 %v198
    %v1444 = vpop.f32.mrb[0].mxu0
    %v1445 = vadd.f32 %v1371, %v1444
    %v1446 = vpop.f32.mrb[0].mxu0
    %1447 = vdwg.mxu0
    %s1448 = scalar_lea.vmem %s13, 64
    %v1449 = vld [vmem:[%s1448] sm:$0xff]
    %v1450 = vld [vmem:[%s1448 + $0x8] sm:$0xff]
    %v1451 = vld [vmem:[%s1448 + $0x10] sm:$0xff]
    %v1452 = vld [vmem:[%s1448 + $0x18] sm:$0xff]
    %s1453 = scalar_lea.vmem %s19, 2
    %v1454 = vld [vmem:[%s1453] sm:$0x1]
    %v1456 = vlaneseq
    %v1457 = vshrl.u32 %v1456, 7
    %v1458 = vsub.s32 0, %v1457
    %v1459 = vrot.slane %v1454, %v1458
    %1461 = vmatprep.subr.mxu0 0.0
    %1462 = vmatpush1.msra.mxu0 %v1449
    %1463 = vmatprep.subr.mxu0 0.0
    %1464 = vmatpush1.msra.mxu0 %v1450
    %1465 = vmatprep.subr.mxu0 0.0
    %1466 = vmatpush1.msra.mxu0 %v1451
    %1467 = vmatprep.subr.mxu0 0.0
    %1468 = vmatpush1.msra.mxu0 %v1452
    %1469 = vmatprep.subr.mxu0 0.0
    %1470 = vmatpush1.msra.mxu0 0.0
    %1471 = vmatprep.subr.mxu0 0.0
    %1472 = vmatpush1.msra.mxu0 0.0
    %1473 = vmatprep.subr.mxu0 0.0
    %1474 = vmatpush1.msra.mxu0 0.0
    %1475 = vmatprep.subr.mxu0 0.0
    %1476 = vmatpush1.msra.mxu0 0.0
    %1477 = vmatprep.subr.mxu0 0.0
    %1478 = vmatpush1.msra.mxu0 0.0
    %1479 = vmatprep.subr.mxu0 0.0
    %1480 = vmatpush1.msra.mxu0 0.0
    %1481 = vmatprep.subr.mxu0 0.0
    %1482 = vmatpush1.msra.mxu0 0.0
    %1483 = vmatprep.subr.mxu0 0.0
    %1484 = vmatpush1.msra.mxu0 0.0
    %1485 = vmatprep.subr.mxu0 0.0
    %1486 = vmatpush1.msra.mxu0 0.0
    %1487 = vmatprep.subr.mxu0 0.0
    %1488 = vmatpush1.msra.mxu0 0.0
    %1489 = vmatprep.subr.mxu0 0.0
    %1490 = vmatpush1.msra.mxu0 0.0
    %1491 = vmatprep.subr.mxu0 0.0
    %1492 = vmatpush1.msra.mxu0 0.0
    %1493 = vmatprep.subr.mxu0 0.0
    %1494 = vmatpush1.msra.mxu0 0.0
    %1495 = vmatprep.subr.mxu0 0.0
    %1496 = vmatpush1.msra.mxu0 0.0
    %1497 = vmatprep.subr.mxu0 0.0
    %1498 = vmatpush1.msra.mxu0 0.0
    %1499 = vmatprep.subr.mxu0 0.0
    %1500 = vmatpush1.msra.mxu0 0.0
    %1501 = vmatprep.subr.mxu0 0.0
    %1502 = vmatpush1.msra.mxu0 0.0
    %1503 = vmatprep.subr.mxu0 0.0
    %1504 = vmatpush1.msra.mxu0 0.0
    %1505 = vmatprep.subr.mxu0 0.0
    %1506 = vmatpush1.msra.mxu0 0.0
    %1507 = vmatprep.subr.mxu0 0.0
    %1508 = vmatpush1.msra.mxu0 0.0
    %1509 = vmatprep.subr.mxu0 0.0
    %1510 = vmatpush1.msra.mxu0 0.0
    %1511 = vmatprep.subr.mxu0 0.0
    %1512 = vmatpush1.msra.mxu0 0.0
    %1513 = vmatprep.subr.mxu0 0.0
    %1514 = vmatpush1.msra.mxu0 0.0
    %1515 = vmatprep.subr.mxu0 0.0
    %1516 = vmatpush1.msra.mxu0 0.0
    %1517 = vmatprep.subr.mxu0 0.0
    %1518 = vmatpush1.msra.mxu0 0.0
    %1519 = vmatprep.subr.mxu0 0.0
    %1520 = vmatpush1.msra.mxu0 0.0
    %1521 = vmatprep.subr.mxu0 0.0
    %1522 = vmatpush1.msra.mxu0 0.0
    %1523 = vmatprep.subr.mxu0 0.0
    %1524 = vmatpush1.msra.mxu0 0.0
    %1525 = vmatprep.mubr.f32.mxu0 0.0
    %1526 = vmatmul.mubr.f32.gmra.mrb[0].mxu0 %v373
    %v1527 = vpop.f32.mrb[0].mxu0
    %v1528 = vadd.f32 %v1459, %v1527
    %v1529 = vpop.f32.mrb[0].mxu0
    %1530 = vmatprep.mubr.f32.mxu0 0.0
    %1531 = vmatmul.mubr.f32.gmra.mrb[0].mxu0 %v376
    %v1532 = vpop.f32.mrb[0].mxu0
    %v1533 = vadd.f32 %v1459, %v1532
    %v1534 = vpop.f32.mrb[0].mxu0
    %1535 = vdwg.mxu0
    %v1537 = vsel %vm453, %v1352, 0
    %v1540 = vsel %vm453, %v1357, 0
    %v1543 = vsel %vm453, %v1440, 0
    %v1546 = vsel %vm453, %v1445, 0
    %1548 = vmatprep.subr.mxu0 0.0
    %1549 = vmatpush1.xpose.msra.mxu0 %v1543
    %1550 = vmatprep.subr.mxu0 0.0
    %1551 = vmatpush1.xpose.msra.mxu0 %v1546
    %1552 = vmatprep.subr.mxu0 0.0
    %1553 = vmatpush1.xpose.msra.mxu0 0.0
    %1554 = vmatprep.subr.mxu0 0.0
    %1555 = vmatpush1.xpose.msra.mxu0 0.0
    %1556 = vmatprep.subr.mxu0 0.0
    %1557 = vmatpush1.xpose.msra.mxu0 0.0
    %1558 = vmatprep.subr.mxu0 0.0
    %1559 = vmatpush1.xpose.msra.mxu0 0.0
    %1560 = vmatprep.subr.mxu0 0.0
    %1561 = vmatpush1.xpose.msra.mxu0 0.0
    %1562 = vmatprep.subr.mxu0 0.0
    %1563 = vmatpush1.xpose.msra.mxu0 0.0
    %1564 = vmatprep.subr.mxu0 0.0
    %1565 = vmatpush1.xpose.msra.mxu0 0.0
    %1566 = vmatprep.subr.mxu0 0.0
    %1567 = vmatpush1.xpose.msra.mxu0 0.0
    %1568 = vmatprep.subr.mxu0 0.0
    %1569 = vmatpush1.xpose.msra.mxu0 0.0
    %1570 = vmatprep.subr.mxu0 0.0
    %1571 = vmatpush1.xpose.msra.mxu0 0.0
    %1572 = vmatprep.subr.mxu0 0.0
    %1573 = vmatpush1.xpose.msra.mxu0 0.0
    %1574 = vmatprep.subr.mxu0 0.0
    %1575 = vmatpush1.xpose.msra.mxu0 0.0
    %1576 = vmatprep.subr.mxu0 0.0
    %1577 = vmatpush1.xpose.msra.mxu0 0.0
    %1578 = vmatprep.subr.mxu0 0.0
    %1579 = vmatpush1.xpose.msra.mxu0 0.0
    %1580 = vmatprep.subr.mxu0 0.0
    %1581 = vmatpush1.xpose.msra.mxu0 0.0
    %1582 = vmatprep.subr.mxu0 0.0
    %1583 = vmatpush1.xpose.msra.mxu0 0.0
    %1584 = vmatprep.subr.mxu0 0.0
    %1585 = vmatpush1.xpose.msra.mxu0 0.0
    %1586 = vmatprep.subr.mxu0 0.0
    %1587 = vmatpush1.xpose.msra.mxu0 0.0
    %1588 = vmatprep.subr.mxu0 0.0
    %1589 = vmatpush1.xpose.msra.mxu0 0.0
    %1590 = vmatprep.subr.mxu0 0.0
    %1591 = vmatpush1.xpose.msra.mxu0 0.0
    %1592 = vmatprep.subr.mxu0 0.0
    %1593 = vmatpush1.xpose.msra.mxu0 0.0
    %1594 = vmatprep.subr.mxu0 0.0
    %1595 = vmatpush1.xpose.msra.mxu0 0.0
    %1596 = vmatprep.subr.mxu0 0.0
    %1597 = vmatpush1.xpose.msra.mxu0 0.0
    %1598 = vmatprep.subr.mxu0 0.0
    %1599 = vmatpush1.xpose.msra.mxu0 0.0
    %1600 = vmatprep.subr.mxu0 0.0
    %1601 = vmatpush1.xpose.msra.mxu0 0.0
    %1602 = vmatprep.subr.mxu0 0.0
    %1603 = vmatpush1.xpose.msra.mxu0 0.0
    %1604 = vmatprep.subr.mxu0 0.0
    %1605 = vmatpush1.xpose.msra.mxu0 0.0
    %1606 = vmatprep.subr.mxu0 0.0
    %1607 = vmatpush1.xpose.msra.mxu0 0.0
    %1608 = vmatprep.subr.mxu0 0.0
    %1609 = vmatpush1.xpose.msra.mxu0 0.0
    %1610 = vmatprep.subr.mxu0 0.0
    %1611 = vmatpush1.xpose.msra.mxu0 0.0
    %1612 = vmatprep.mubr.f32.mxu0 0.0
    %1613 = vmatmul.mubr.f32.gmra.mrb[0].mxu0 %v1537
    %v1614 = vpop.f32.mrb[0].mxu0
    %v1615 = vadd.f32 0.0, %v1614
    %v1616 = vpop.f32.mrb[0].mxu0
    %1617 = vmatprep.mubr.f32.mxu0 0.0
    %1618 = vmatmul.mubr.f32.gmra.mrb[0].mxu0 %v1540
    %v1619 = vpop.f32.mrb[0].mxu0
    %v1620 = vadd.f32 0.0, %v1619
    %v1621 = vpop.f32.mrb[0].mxu0
    %1622 = vdwg.mxu0
    %v1623 = vmul.f32 %v1615, 0.35355338
    %v1624 = vmul.f32 %v1620, 0.35355338
    %v1625 = vsel %vm178, %v1623, -inf
    %v1626 = vsel %vm179, %v1624, -inf
    %v1627 = vsel %vm545, %v1625, -inf
    %1628 = vmax.xlane.f32.xlu0 %v1627
    %v1629 = vpop.xlane.xlu0 %1628
    %v1630 = vsel %vm545, %v1626, -inf
    %1631 = vmax.xlane.f32.xlu0 %v1630
    %v1632 = vpop.xlane.xlu0 %1631
    %v1633 = vsub.f32 %v1625, %v1629
    %v1634 = vsub.f32 %v1626, %v1632
    %v1635 = vmul.f32 %v1633, 1.442695
    %v1636 = vpow.pop %v1635
    %v1637 = vmul.f32 %v1634, 1.442695
    %v1638 = vpow.pop %v1637
    %v1639 = vsel %vm545, %v1636, 0.0
    %1640 = vadd.xlane.f32.xlu0 %v1639
    %v1641 = vpop.xlane.xlu0 %1640
    %v1642 = vsel %vm545, %v1638, 0.0
    %1643 = vadd.xlane.f32.xlu0 %v1642
    %v1644 = vpop.xlane.xlu0 %1643
    %v1645 = vrcp.pop %v1641
    %v1646 = vrcp.pop %v1644
    %v1647 = vmul.f32 %v1636, %v1645
    %v1648 = vmul.f32 %v1638, %v1646
    %v1650 = vsel %vm545, %v1647, 0
    %v1653 = vsel %vm545, %v1648, 0
    %1655 = vmatprep.subr.mxu0 0.0
    %1656 = vmatpush1.msra.mxu0 %v1528
    %1657 = vmatprep.subr.mxu0 0.0
    %1658 = vmatpush1.msra.mxu0 %v1533
    %1659 = vmatprep.subr.mxu0 0.0
    %1660 = vmatpush1.msra.mxu0 0.0
    %1661 = vmatprep.subr.mxu0 0.0
    %1662 = vmatpush1.msra.mxu0 0.0
    %1663 = vmatprep.subr.mxu0 0.0
    %1664 = vmatpush1.msra.mxu0 0.0
    %1665 = vmatprep.subr.mxu0 0.0
    %1666 = vmatpush1.msra.mxu0 0.0
    %1667 = vmatprep.subr.mxu0 0.0
    %1668 = vmatpush1.msra.mxu0 0.0
    %1669 = vmatprep.subr.mxu0 0.0
    %1670 = vmatpush1.msra.mxu0 0.0
    %1671 = vmatprep.subr.mxu0 0.0
    %1672 = vmatpush1.msra.mxu0 0.0
    %1673 = vmatprep.subr.mxu0 0.0
    %1674 = vmatpush1.msra.mxu0 0.0
    %1675 = vmatprep.subr.mxu0 0.0
    %1676 = vmatpush1.msra.mxu0 0.0
    %1677 = vmatprep.subr.mxu0 0.0
    %1678 = vmatpush1.msra.mxu0 0.0
    %1679 = vmatprep.subr.mxu0 0.0
    %1680 = vmatpush1.msra.mxu0 0.0
    %1681 = vmatprep.subr.mxu0 0.0
    %1682 = vmatpush1.msra.mxu0 0.0
    %1683 = vmatprep.subr.mxu0 0.0
    %1684 = vmatpush1.msra.mxu0 0.0
    %1685 = vmatprep.subr.mxu0 0.0
    %1686 = vmatpush1.msra.mxu0 0.0
    %1687 = vmatprep.subr.mxu0 0.0
    %1688 = vmatpush1.msra.mxu0 0.0
    %1689 = vmatprep.subr.mxu0 0.0
    %1690 = vmatpush1.msra.mxu0 0.0
    %1691 = vmatprep.subr.mxu0 0.0
    %1692 = vmatpush1.msra.mxu0 0.0
    %1693 = vmatprep.subr.mxu0 0.0
    %1694 = vmatpush1.msra.mxu0 0.0
    %1695 = vmatprep.subr.mxu0 0.0
    %1696 = vmatpush1.msra.mxu0 0.0
    %1697 = vmatprep.subr.mxu0 0.0
    %1698 = vmatpush1.msra.mxu0 0.0
    %1699 = vmatprep.subr.mxu0 0.0
    %1700 = vmatpush1.msra.mxu0 0.0
    %1701 = vmatprep.subr.mxu0 0.0
    %1702 = vmatpush1.msra.mxu0 0.0
    %1703 = vmatprep.subr.mxu0 0.0
    %1704 = vmatpush1.msra.mxu0 0.0
    %1705 = vmatprep.subr.mxu0 0.0
    %1706 = vmatpush1.msra.mxu0 0.0
    %1707 = vmatprep.subr.mxu0 0.0
    %1708 = vmatpush1.msra.mxu0 0.0
    %1709 = vmatprep.subr.mxu0 0.0
    %1710 = vmatpush1.msra.mxu0 0.0
    %1711 = vmatprep.subr.mxu0 0.0
    %1712 = vmatpush1.msra.mxu0 0.0
    %1713 = vmatprep.subr.mxu0 0.0
    %1714 = vmatpush1.msra.mxu0 0.0
    %1715 = vmatprep.subr.mxu0 0.0
    %1716 = vmatpush1.msra.mxu0 0.0
    %1717 = vmatprep.subr.mxu0 0.0
    %1718 = vmatpush1.msra.mxu0 0.0
    %1719 = vmatprep.mubr.f32.mxu0 0.0
    %1720 = vmatmul.mubr.f32.gmra.mrb[0].mxu0 %v1650
    %v1721 = vpop.f32.mrb[0].mxu0
    %v1722 = vadd.f32 0.0, %v1721
    %v1723 = vpop.f32.mrb[0].mxu0
    %1724 = vmatprep.mubr.f32.mxu0 0.0
    %1725 = vmatmul.mubr.f32.gmra.mrb[0].mxu0 %v1653
    %v1726 = vpop.f32.mrb[0].mxu0
    %v1727 = vadd.f32 0.0, %v1726
    %v1728 = vpop.f32.mrb[0].mxu0
    %1729 = vdwg.mxu0
    %s1730 = scalar_lea.vmem %s21, 16
    %v1731 = vld [vmem:[%s1730] sm:$0xff]
    %v1733 = vsel %vm453, %v1722, 0
    %v1736 = vsel %vm453, %v1727, 0
    %1738 = vmatprep.subr.mxu0 0.0
    %1739 = vmatpush1.msra.mxu0 %v1731
    %1740 = vmatprep.subr.mxu0 0.0
    %1741 = vmatpush1.msra.mxu0 0.0
    %1742 = vmatprep.subr.mxu0 0.0
    %1743 = vmatpush1.msra.mxu0 0.0
    %1744 = vmatprep.subr.mxu0 0.0
    %1745 = vmatpush1.msra.mxu0 0.0
    %1746 = vmatprep.subr.mxu0 0.0
    %1747 = vmatpush1.msra.mxu0 0.0
    %1748 = vmatprep.subr.mxu0 0.0
    %1749 = vmatpush1.msra.mxu0 0.0
    %1750 = vmatprep.subr.mxu0 0.0
    %1751 = vmatpush1.msra.mxu0 0.0
    %1752 = vmatprep.subr.mxu0 0.0
    %1753 = vmatpush1.msra.mxu0 0.0
    %1754 = vmatprep.subr.mxu0 0.0
    %1755 = vmatpush1.msra.mxu0 0.0
    %1756 = vmatprep.subr.mxu0 0.0
    %1757 = vmatpush1.msra.mxu0 0.0
    %1758 = vmatprep.subr.mxu0 0.0
    %1759 = vmatpush1.msra.mxu0 0.0
    %1760 = vmatprep.subr.mxu0 0.0
    %1761 = vmatpush1.msra.mxu0 0.0
    %1762 = vmatprep.subr.mxu0 0.0
    %1763 = vmatpush1.msra.mxu0 0.0
    %1764 = vmatprep.subr.mxu0 0.0
    %1765 = vmatpush1.msra.mxu0 0.0
    %1766 = vmatprep.subr.mxu0 0.0
    %1767 = vmatpush1.msra.mxu0 0.0
    %1768 = vmatprep.subr.mxu0 0.0
    %1769 = vmatpush1.msra.mxu0 0.0
    %1770 = vmatprep.subr.mxu0 0.0
    %1771 = vmatpush1.msra.mxu0 0.0
    %1772 = vmatprep.subr.mxu0 0.0
    %1773 = vmatpush1.msra.mxu0 0.0
    %1774 = vmatprep.subr.mxu0 0.0
    %1775 = vmatpush1.msra.mxu0 0.0
    %1776 = vmatprep.subr.mxu0 0.0
    %1777 = vmatpush1.msra.mxu0 0.0
    %1778 = vmatprep.subr.mxu0 0.0
    %1779 = vmatpush1.msra.mxu0 0.0
    %1780 = vmatprep.subr.mxu0 0.0
    %1781 = vmatpush1.msra.mxu0 0.0
    %1782 = vmatprep.subr.mxu0 0.0
    %1783 = vmatpush1.msra.mxu0 0.0
    %1784 = vmatprep.subr.mxu0 0.0
    %1785 = vmatpush1.msra.mxu0 0.0
    %1786 = vmatprep.subr.mxu0 0.0
    %1787 = vmatpush1.msra.mxu0 0.0
    %1788 = vmatprep.subr.mxu0 0.0
    %1789 = vmatpush1.msra.mxu0 0.0
    %1790 = vmatprep.subr.mxu0 0.0
    %1791 = vmatpush1.msra.mxu0 0.0
    %1792 = vmatprep.subr.mxu0 0.0
    %1793 = vmatpush1.msra.mxu0 0.0
    %1794 = vmatprep.subr.mxu0 0.0
    %1795 = vmatpush1.msra.mxu0 0.0
    %1796 = vmatprep.subr.mxu0 0.0
    %1797 = vmatpush1.msra.mxu0 0.0
    %1798 = vmatprep.subr.mxu0 0.0
    %1799 = vmatpush1.msra.mxu0 0.0
    %1800 = vmatprep.subr.mxu0 0.0
    %1801 = vmatpush1.msra.mxu0 0.0
    %1802 = vmatprep.mubr.f32.mxu0 0.0
    %1803 = vmatmul.mubr.f32.gmra.mrb[0].mxu0 %v1733
    %v1804 = vpop.f32.mrb[0].mxu0
    %v1805 = vadd.f32 0.0, %v1804
    %v1806 = vpop.f32.mrb[0].mxu0
    %1807 = vmatprep.mubr.f32.mxu0 0.0
    %1808 = vmatmul.mubr.f32.gmra.mrb[0].mxu0 %v1736
    %v1809 = vpop.f32.mrb[0].mxu0
    %v1810 = vadd.f32 0.0, %v1809
    %v1811 = vpop.f32.mrb[0].mxu0
    %1812 = vdwg.mxu0
    %v1813 = vadd.f32 %v1264, %v1805
    %v1814 = vadd.f32 %v1269, %v1810
    %s1815 = scalar_lea.vmem %s9, 96
    %v1816 = vld [vmem:[%s1815] sm:$0xff]
    %v1817 = vld [vmem:[%s1815 + $0x8] sm:$0xff]
    %v1818 = vld [vmem:[%s1815 + $0x10] sm:$0xff]
    %v1819 = vld [vmem:[%s1815 + $0x18] sm:$0xff]
    %s1820 = scalar_lea.vmem %s15, 3
    %v1821 = vld [vmem:[%s1820] sm:$0x1]
    %v1823 = vlaneseq
    %v1824 = vshrl.u32 %v1823, 7
    %v1825 = vsub.s32 0, %v1824
    %v1826 = vrot.slane %v1821, %v1825
    %1828 = vmatprep.subr.mxu0 0.0
    %1829 = vmatpush1.msra.mxu0 %v1816
    %1830 = vmatprep.subr.mxu0 0.0
    %1831 = vmatpush1.msra.mxu0 %v1817
    %1832 = vmatprep.subr.mxu0 0.0
    %1833 = vmatpush1.msra.mxu0 %v1818
    %1834 = vmatprep.subr.mxu0 0.0
    %1835 = vmatpush1.msra.mxu0 %v1819
    %1836 = vmatprep.subr.mxu0 0.0
    %1837 = vmatpush1.msra.mxu0 0.0
    %1838 = vmatprep.subr.mxu0 0.0
    %1839 = vmatpush1.msra.mxu0 0.0
    %1840 = vmatprep.subr.mxu0 0.0
    %1841 = vmatpush1.msra.mxu0 0.0
    %1842 = vmatprep.subr.mxu0 0.0
    %1843 = vmatpush1.msra.mxu0 0.0
    %1844 = vmatprep.subr.mxu0 0.0
    %1845 = vmatpush1.msra.mxu0 0.0
    %1846 = vmatprep.subr.mxu0 0.0
    %1847 = vmatpush1.msra.mxu0 0.0
    %1848 = vmatprep.subr.mxu0 0.0
    %1849 = vmatpush1.msra.mxu0 0.0
    %1850 = vmatprep.subr.mxu0 0.0
    %1851 = vmatpush1.msra.mxu0 0.0
    %1852 = vmatprep.subr.mxu0 0.0
    %1853 = vmatpush1.msra.mxu0 0.0
    %1854 = vmatprep.subr.mxu0 0.0
    %1855 = vmatpush1.msra.mxu0 0.0
    %1856 = vmatprep.subr.mxu0 0.0
    %1857 = vmatpush1.msra.mxu0 0.0
    %1858 = vmatprep.subr.mxu0 0.0
    %1859 = vmatpush1.msra.mxu0 0.0
    %1860 = vmatprep.subr.mxu0 0.0
    %1861 = vmatpush1.msra.mxu0 0.0
    %1862 = vmatprep.subr.mxu0 0.0
    %1863 = vmatpush1.msra.mxu0 0.0
    %1864 = vmatprep.subr.mxu0 0.0
    %1865 = vmatpush1.msra.mxu0 0.0
    %1866 = vmatprep.subr.mxu0 0.0
    %1867 = vmatpush1.msra.mxu0 0.0
    %1868 = vmatprep.subr.mxu0 0.0
    %1869 = vmatpush1.msra.mxu0 0.0
    %1870 = vmatprep.subr.mxu0 0.0
    %1871 = vmatpush1.msra.mxu0 0.0
    %1872 = vmatprep.subr.mxu0 0.0
    %1873 = vmatpush1.msra.mxu0 0.0
    %1874 = vmatprep.subr.mxu0 0.0
    %1875 = vmatpush1.msra.mxu0 0.0
    %1876 = vmatprep.subr.mxu0 0.0
    %1877 = vmatpush1.msra.mxu0 0.0
    %1878 = vmatprep.subr.mxu0 0.0
    %1879 = vmatpush1.msra.mxu0 0.0
    %1880 = vmatprep.subr.mxu0 0.0
    %1881 = vmatpush1.msra.mxu0 0.0
    %1882 = vmatprep.subr.mxu0 0.0
    %1883 = vmatpush1.msra.mxu0 0.0
    %1884 = vmatprep.subr.mxu0 0.0
    %1885 = vmatpush1.msra.mxu0 0.0
    %1886 = vmatprep.subr.mxu0 0.0
    %1887 = vmatpush1.msra.mxu0 0.0
    %1888 = vmatprep.subr.mxu0 0.0
    %1889 = vmatpush1.msra.mxu0 0.0
    %1890 = vmatprep.subr.mxu0 0.0
    %1891 = vmatpush1.msra.mxu0 0.0
    %1892 = vmatprep.mubr.f32.mxu0 0.0
    %1893 = vmatmul.mubr.f32.gmra.mrb[0].mxu0 %v195
    %v1894 = vpop.f32.mrb[0].mxu0
    %v1895 = vadd.f32 %v1826, %v1894
    %v1896 = vpop.f32.mrb[0].mxu0
    %1897 = vmatprep.mubr.f32.mxu0 0.0
    %1898 = vmatmul.mubr.f32.gmra.mrb[0].mxu0 %v198
    %v1899 = vpop.f32.mrb[0].mxu0
    %v1900 = vadd.f32 %v1826, %v1899
    %v1901 = vpop.f32.mrb[0].mxu0
    %1902 = vdwg.mxu0
    %s1903 = scalar_lea.vmem %s11, 96
    %v1904 = vld [vmem:[%s1903] sm:$0xff]
    %v1905 = vld [vmem:[%s1903 + $0x8] sm:$0xff]
    %v1906 = vld [vmem:[%s1903 + $0x10] sm:$0xff]
    %v1907 = vld [vmem:[%s1903 + $0x18] sm:$0xff]
    %s1908 = scalar_lea.vmem %s17, 3
    %v1909 = vld [vmem:[%s1908] sm:$0x1]
    %v1911 = vlaneseq
    %v1912 = vshrl.u32 %v1911, 7
    %v1913 = vsub.s32 0, %v1912
    %v1914 = vrot.slane %v1909, %v1913
    %1916 = vmatprep.subr.mxu0 0.0
    %1917 = vmatpush1.msra.mxu0 %v1904
    %1918 = vmatprep.subr.mxu0 0.0
    %1919 = vmatpush1.msra.mxu0 %v1905
    %1920 = vmatprep.subr.mxu0 0.0
    %1921 = vmatpush1.msra.mxu0 %v1906
    %1922 = vmatprep.subr.mxu0 0.0
    %1923 = vmatpush1.msra.mxu0 %v1907
    %1924 = vmatprep.subr.mxu0 0.0
    %1925 = vmatpush1.msra.mxu0 0.0
    %1926 = vmatprep.subr.mxu0 0.0
    %1927 = vmatpush1.msra.mxu0 0.0
    %1928 = vmatprep.subr.mxu0 0.0
    %1929 = vmatpush1.msra.mxu0 0.0
    %1930 = vmatprep.subr.mxu0 0.0
    %1931 = vmatpush1.msra.mxu0 0.0
    %1932 = vmatprep.subr.mxu0 0.0
    %1933 = vmatpush1.msra.mxu0 0.0
    %1934 = vmatprep.subr.mxu0 0.0
    %1935 = vmatpush1.msra.mxu0 0.0
    %1936 = vmatprep.subr.mxu0 0.0
    %1937 = vmatpush1.msra.mxu0 0.0
    %1938 = vmatprep.subr.mxu0 0.0
    %1939 = vmatpush1.msra.mxu0 0.0
    %1940 = vmatprep.subr.mxu0 0.0
    %1941 = vmatpush1.msra.mxu0 0.0
    %1942 = vmatprep.subr.mxu0 0.0
    %1943 = vmatpush1.msra.mxu0 0.0
    %1944 = vmatprep.subr.mxu0 0.0
    %1945 = vmatpush1.msra.mxu0 0.0
    %1946 = vmatprep.subr.mxu0 0.0
    %1947 = vmatpush1.msra.mxu0 0.0
    %1948 = vmatprep.subr.mxu0 0.0
    %1949 = vmatpush1.msra.mxu0 0.0
    %1950 = vmatprep.subr.mxu0 0.0
    %1951 = vmatpush1.msra.mxu0 0.0
    %1952 = vmatprep.subr.mxu0 0.0
    %1953 = vmatpush1.msra.mxu0 0.0
    %1954 = vmatprep.subr.mxu0 0.0
    %1955 = vmatpush1.msra.mxu0 0.0
    %1956 = vmatprep.subr.mxu0 0.0
    %1957 = vmatpush1.msra.mxu0 0.0
    %1958 = vmatprep.subr.mxu0 0.0
    %1959 = vmatpush1.msra.mxu0 0.0
    %1960 = vmatprep.subr.mxu0 0.0
    %1961 = vmatpush1.msra.mxu0 0.0
    %1962 = vmatprep.subr.mxu0 0.0
    %1963 = vmatpush1.msra.mxu0 0.0
    %1964 = vmatprep.subr.mxu0 0.0
    %1965 = vmatpush1.msra.mxu0 0.0
    %1966 = vmatprep.subr.mxu0 0.0
    %1967 = vmatpush1.msra.mxu0 0.0
    %1968 = vmatprep.subr.mxu0 0.0
    %1969 = vmatpush1.msra.mxu0 0.0
    %1970 = vmatprep.subr.mxu0 0.0
    %1971 = vmatpush1.msra.mxu0 0.0
    %1972 = vmatprep.subr.mxu0 0.0
    %1973 = vmatpush1.msra.mxu0 0.0
    %1974 = vmatprep.subr.mxu0 0.0
    %1975 = vmatpush1.msra.mxu0 0.0
    %1976 = vmatprep.subr.mxu0 0.0
    %1977 = vmatpush1.msra.mxu0 0.0
    %1978 = vmatprep.subr.mxu0 0.0
    %1979 = vmatpush1.msra.mxu0 0.0
    %1980 = vmatprep.mubr.f32.mxu0 0.0
    %1981 = vmatmul.mubr.f32.gmra.mrb[0].mxu0 %v195
    %v1982 = vpop.f32.mrb[0].mxu0
    %v1983 = vadd.f32 %v1914, %v1982
    %v1984 = vpop.f32.mrb[0].mxu0
    %1985 = vmatprep.mubr.f32.mxu0 0.0
    %1986 = vmatmul.mubr.f32.gmra.mrb[0].mxu0 %v198
    %v1987 = vpop.f32.mrb[0].mxu0
    %v1988 = vadd.f32 %v1914, %v1987
    %v1989 = vpop.f32.mrb[0].mxu0
    %1990 = vdwg.mxu0
    %s1991 = scalar_lea.vmem %s13, 96
    %v1992 = vld [vmem:[%s1991] sm:$0xff]
    %v1993 = vld [vmem:[%s1991 + $0x8] sm:$0xff]
    %v1994 = vld [vmem:[%s1991 + $0x10] sm:$0xff]
    %v1995 = vld [vmem:[%s1991 + $0x18] sm:$0xff]
    %s1996 = scalar_lea.vmem %s19, 3
    %v1997 = vld [vmem:[%s1996] sm:$0x1]
    %v1999 = vlaneseq
    %v2000 = vshrl.u32 %v1999, 7
    %v2001 = vsub.s32 0, %v2000
    %v2002 = vrot.slane %v1997, %v2001
    %2004 = vmatprep.subr.mxu0 0.0
    %2005 = vmatpush1.msra.mxu0 %v1992
    %2006 = vmatprep.subr.mxu0 0.0
    %2007 = vmatpush1.msra.mxu0 %v1993
    %2008 = vmatprep.subr.mxu0 0.0
    %2009 = vmatpush1.msra.mxu0 %v1994
    %2010 = vmatprep.subr.mxu0 0.0
    %2011 = vmatpush1.msra.mxu0 %v1995
    %2012 = vmatprep.subr.mxu0 0.0
    %2013 = vmatpush1.msra.mxu0 0.0
    %2014 = vmatprep.subr.mxu0 0.0
    %2015 = vmatpush1.msra.mxu0 0.0
    %2016 = vmatprep.subr.mxu0 0.0
    %2017 = vmatpush1.msra.mxu0 0.0
    %2018 = vmatprep.subr.mxu0 0.0
    %2019 = vmatpush1.msra.mxu0 0.0
    %2020 = vmatprep.subr.mxu0 0.0
    %2021 = vmatpush1.msra.mxu0 0.0
    %2022 = vmatprep.subr.mxu0 0.0
    %2023 = vmatpush1.msra.mxu0 0.0
    %2024 = vmatprep.subr.mxu0 0.0
    %2025 = vmatpush1.msra.mxu0 0.0
    %2026 = vmatprep.subr.mxu0 0.0
    %2027 = vmatpush1.msra.mxu0 0.0
    %2028 = vmatprep.subr.mxu0 0.0
    %2029 = vmatpush1.msra.mxu0 0.0
    %2030 = vmatprep.subr.mxu0 0.0
    %2031 = vmatpush1.msra.mxu0 0.0
    %2032 = vmatprep.subr.mxu0 0.0
    %2033 = vmatpush1.msra.mxu0 0.0
    %2034 = vmatprep.subr.mxu0 0.0
    %2035 = vmatpush1.msra.mxu0 0.0
    %2036 = vmatprep.subr.mxu0 0.0
    %2037 = vmatpush1.msra.mxu0 0.0
    %2038 = vmatprep.subr.mxu0 0.0
    %2039 = vmatpush1.msra.mxu0 0.0
    %2040 = vmatprep.subr.mxu0 0.0
    %2041 = vmatpush1.msra.mxu0 0.0
    %2042 = vmatprep.subr.mxu0 0.0
    %2043 = vmatpush1.msra.mxu0 0.0
    %2044 = vmatprep.subr.mxu0 0.0
    %2045 = vmatpush1.msra.mxu0 0.0
    %2046 = vmatprep.subr.mxu0 0.0
    %2047 = vmatpush1.msra.mxu0 0.0
    %2048 = vmatprep.subr.mxu0 0.0
    %2049 = vmatpush1.msra.mxu0 0.0
    %2050 = vmatprep.subr.mxu0 0.0
    %2051 = vmatpush1.msra.mxu0 0.0
    %2052 = vmatprep.subr.mxu0 0.0
    %2053 = vmatpush1.msra.mxu0 0.0
    %2054 = vmatprep.subr.mxu0 0.0
    %2055 = vmatpush1.msra.mxu0 0.0
    %2056 = vmatprep.subr.mxu0 0.0
    %2057 = vmatpush1.msra.mxu0 0.0
    %2058 = vmatprep.subr.mxu0 0.0
    %2059 = vmatpush1.msra.mxu0 0.0
    %2060 = vmatprep.subr.mxu0 0.0
    %2061 = vmatpush1.msra.mxu0 0.0
    %2062 = vmatprep.subr.mxu0 0.0
    %2063 = vmatpush1.msra.mxu0 0.0
    %2064 = vmatprep.subr.mxu0 0.0
    %2065 = vmatpush1.msra.mxu0 0.0
    %2066 = vmatprep.subr.mxu0 0.0
    %2067 = vmatpush1.msra.mxu0 0.0
    %2068 = vmatprep.mubr.f32.mxu0 0.0
    %2069 = vmatmul.mubr.f32.gmra.mrb[0].mxu0 %v373
    %v2070 = vpop.f32.mrb[0].mxu0
    %v2071 = vadd.f32 %v2002, %v2070
    %v2072 = vpop.f32.mrb[0].mxu0
    %2073 = vmatprep.mubr.f32.mxu0 0.0
    %2074 = vmatmul.mubr.f32.gmra.mrb[0].mxu0 %v376
    %v2075 = vpop.f32.mrb[0].mxu0
    %v2076 = vadd.f32 %v2002, %v2075
    %v2077 = vpop.f32.mrb[0].mxu0
    %2078 = vdwg.mxu0
    %v2080 = vsel %vm453, %v1895, 0
    %v2083 = vsel %vm453, %v1900, 0
    %v2086 = vsel %vm453, %v1983, 0
    %v2089 = vsel %vm453, %v1988, 0
    %2091 = vmatprep.subr.mxu0 0.0
    %2092 = vmatpush1.xpose.msra.mxu0 %v2086
    %2093 = vmatprep.subr.mxu0 0.0
    %2094 = vmatpush1.xpose.msra.mxu0 %v2089
    %2095 = vmatprep.subr.mxu0 0.0
    %2096 = vmatpush1.xpose.msra.mxu0 0.0
    %2097 = vmatprep.subr.mxu0 0.0
    %2098 = vmatpush1.xpose.msra.mxu0 0.0
    %2099 = vmatprep.subr.mxu0 0.0
    %2100 = vmatpush1.xpose.msra.mxu0 0.0
    %2101 = vmatprep.subr.mxu0 0.0
    %2102 = vmatpush1.xpose.msra.mxu0 0.0
    %2103 = vmatprep.subr.mxu0 0.0
    %2104 = vmatpush1.xpose.msra.mxu0 0.0
    %2105 = vmatprep.subr.mxu0 0.0
    %2106 = vmatpush1.xpose.msra.mxu0 0.0
    %2107 = vmatprep.subr.mxu0 0.0
    %2108 = vmatpush1.xpose.msra.mxu0 0.0
    %2109 = vmatprep.subr.mxu0 0.0
    %2110 = vmatpush1.xpose.msra.mxu0 0.0
    %2111 = vmatprep.subr.mxu0 0.0
    %2112 = vmatpush1.xpose.msra.mxu0 0.0
    %2113 = vmatprep.subr.mxu0 0.0
    %2114 = vmatpush1.xpose.msra.mxu0 0.0
    %2115 = vmatprep.subr.mxu0 0.0
    %2116 = vmatpush1.xpose.msra.mxu0 0.0
    %2117 = vmatprep.subr.mxu0 0.0
    %2118 = vmatpush1.xpose.msra.mxu0 0.0
    %2119 = vmatprep.subr.mxu0 0.0
    %2120 = vmatpush1.xpose.msra.mxu0 0.0
    %2121 = vmatprep.subr.mxu0 0.0
    %2122 = vmatpush1.xpose.msra.mxu0 0.0
    %2123 = vmatprep.subr.mxu0 0.0
    %2124 = vmatpush1.xpose.msra.mxu0 0.0
    %2125 = vmatprep.subr.mxu0 0.0
    %2126 = vmatpush1.xpose.msra.mxu0 0.0
    %2127 = vmatprep.subr.mxu0 0.0
    %2128 = vmatpush1.xpose.msra.mxu0 0.0
    %2129 = vmatprep.subr.mxu0 0.0
    %2130 = vmatpush1.xpose.msra.mxu0 0.0
    %2131 = vmatprep.subr.mxu0 0.0
    %2132 = vmatpush1.xpose.msra.mxu0 0.0
    %2133 = vmatprep.subr.mxu0 0.0
    %2134 = vmatpush1.xpose.msra.mxu0 0.0
    %2135 = vmatprep.subr.mxu0 0.0
    %2136 = vmatpush1.xpose.msra.mxu0 0.0
    %2137 = vmatprep.subr.mxu0 0.0
    %2138 = vmatpush1.xpose.msra.mxu0 0.0
    %2139 = vmatprep.subr.mxu0 0.0
    %2140 = vmatpush1.xpose.msra.mxu0 0.0
    %2141 = vmatprep.subr.mxu0 0.0
    %2142 = vmatpush1.xpose.msra.mxu0 0.0
    %2143 = vmatprep.subr.mxu0 0.0
    %2144 = vmatpush1.xpose.msra.mxu0 0.0
    %2145 = vmatprep.subr.mxu0 0.0
    %2146 = vmatpush1.xpose.msra.mxu0 0.0
    %2147 = vmatprep.subr.mxu0 0.0
    %2148 = vmatpush1.xpose.msra.mxu0 0.0
    %2149 = vmatprep.subr.mxu0 0.0
    %2150 = vmatpush1.xpose.msra.mxu0 0.0
    %2151 = vmatprep.subr.mxu0 0.0
    %2152 = vmatpush1.xpose.msra.mxu0 0.0
    %2153 = vmatprep.subr.mxu0 0.0
    %2154 = vmatpush1.xpose.msra.mxu0 0.0
    %2155 = vmatprep.mubr.f32.mxu0 0.0
    %2156 = vmatmul.mubr.f32.gmra.mrb[0].mxu0 %v2080
    %v2157 = vpop.f32.mrb[0].mxu0
    %v2158 = vadd.f32 0.0, %v2157
    %v2159 = vpop.f32.mrb[0].mxu0
    %2160 = vmatprep.mubr.f32.mxu0 0.0
    %2161 = vmatmul.mubr.f32.gmra.mrb[0].mxu0 %v2083
    %v2162 = vpop.f32.mrb[0].mxu0
    %v2163 = vadd.f32 0.0, %v2162
    %v2164 = vpop.f32.mrb[0].mxu0
    %2165 = vdwg.mxu0
    %v2166 = vmul.f32 %v2158, 0.35355338
    %v2167 = vmul.f32 %v2163, 0.35355338
    %v2168 = vsel %vm178, %v2166, -inf
    %v2169 = vsel %vm179, %v2167, -inf
    %v2170 = vsel %vm545, %v2168, -inf
    %2171 = vmax.xlane.f32.xlu0 %v2170
    %v2172 = vpop.xlane.xlu0 %2171
    %v2173 = vsel %vm545, %v2169, -inf
    %2174 = vmax.xlane.f32.xlu0 %v2173
    %v2175 = vpop.xlane.xlu0 %2174
    %v2176 = vsub.f32 %v2168, %v2172
    %v2177 = vsub.f32 %v2169, %v2175
    %v2178 = vmul.f32 %v2176, 1.442695
    %v2179 = vpow.pop %v2178
    %v2180 = vmul.f32 %v2177, 1.442695
    %v2181 = vpow.pop %v2180
    %v2182 = vsel %vm545, %v2179, 0.0
    %2183 = vadd.xlane.f32.xlu0 %v2182
    %v2184 = vpop.xlane.xlu0 %2183
    %v2185 = vsel %vm545, %v2181, 0.0
    %2186 = vadd.xlane.f32.xlu0 %v2185
    %v2187 = vpop.xlane.xlu0 %2186
    %v2188 = vrcp.pop %v2184
    %v2189 = vrcp.pop %v2187
    %v2190 = vmul.f32 %v2179, %v2188
    %v2191 = vmul.f32 %v2181, %v2189
    %v2193 = vsel %vm545, %v2190, 0
    %v2196 = vsel %vm545, %v2191, 0
    %2198 = vmatprep.subr.mxu0 0.0
    %2199 = vmatpush1.msra.mxu0 %v2071
    %2200 = vmatprep.subr.mxu0 0.0
    %2201 = vmatpush1.msra.mxu0 %v2076
    %2202 = vmatprep.subr.mxu0 0.0
    %2203 = vmatpush1.msra.mxu0 0.0
    %2204 = vmatprep.subr.mxu0 0.0
    %2205 = vmatpush1.msra.mxu0 0.0
    %2206 = vmatprep.subr.mxu0 0.0
    %2207 = vmatpush1.msra.mxu0 0.0
    %2208 = vmatprep.subr.mxu0 0.0
    %2209 = vmatpush1.msra.mxu0 0.0
    %2210 = vmatprep.subr.mxu0 0.0
    %2211 = vmatpush1.msra.mxu0 0.0
    %2212 = vmatprep.subr.mxu0 0.0
    %2213 = vmatpush1.msra.mxu0 0.0
    %2214 = vmatprep.subr.mxu0 0.0
    %2215 = vmatpush1.msra.mxu0 0.0
    %2216 = vmatprep.subr.mxu0 0.0
    %2217 = vmatpush1.msra.mxu0 0.0
    %2218 = vmatprep.subr.mxu0 0.0
    %2219 = vmatpush1.msra.mxu0 0.0
    %2220 = vmatprep.subr.mxu0 0.0
    %2221 = vmatpush1.msra.mxu0 0.0
    %2222 = vmatprep.subr.mxu0 0.0
    %2223 = vmatpush1.msra.mxu0 0.0
    %2224 = vmatprep.subr.mxu0 0.0
    %2225 = vmatpush1.msra.mxu0 0.0
    %2226 = vmatprep.subr.mxu0 0.0
    %2227 = vmatpush1.msra.mxu0 0.0
    %2228 = vmatprep.subr.mxu0 0.0
    %2229 = vmatpush1.msra.mxu0 0.0
    %2230 = vmatprep.subr.mxu0 0.0
    %2231 = vmatpush1.msra.mxu0 0.0
    %2232 = vmatprep.subr.mxu0 0.0
    %2233 = vmatpush1.msra.mxu0 0.0
    %2234 = vmatprep.subr.mxu0 0.0
    %2235 = vmatpush1.msra.mxu0 0.0
    %2236 = vmatprep.subr.mxu0 0.0
    %2237 = vmatpush1.msra.mxu0 0.0
    %2238 = vmatprep.subr.mxu0 0.0
    %2239 = vmatpush1.msra.mxu0 0.0
    %2240 = vmatprep.subr.mxu0 0.0
    %2241 = vmatpush1.msra.mxu0 0.0
    %2242 = vmatprep.subr.mxu0 0.0
    %2243 = vmatpush1.msra.mxu0 0.0
    %2244 = vmatprep.subr.mxu0 0.0
    %2245 = vmatpush1.msra.mxu0 0.0
    %2246 = vmatprep.subr.mxu0 0.0
    %2247 = vmatpush1.msra.mxu0 0.0
    %2248 = vmatprep.subr.mxu0 0.0
    %2249 = vmatpush1.msra.mxu0 0.0
    %2250 = vmatprep.subr.mxu0 0.0
    %2251 = vmatpush1.msra.mxu0 0.0
    %2252 = vmatprep.subr.mxu0 0.0
    %2253 = vmatpush1.msra.mxu0 0.0
    %2254 = vmatprep.subr.mxu0 0.0
    %2255 = vmatpush1.msra.mxu0 0.0
    %2256 = vmatprep.subr.mxu0 0.0
    %2257 = vmatpush1.msra.mxu0 0.0
    %2258 = vmatprep.subr.mxu0 0.0
    %2259 = vmatpush1.msra.mxu0 0.0
    %2260 = vmatprep.subr.mxu0 0.0
    %2261 = vmatpush1.msra.mxu0 0.0
    %2262 = vmatprep.mubr.f32.mxu0 0.0
    %2263 = vmatmul.mubr.f32.gmra.mrb[0].mxu0 %v2193
    %v2264 = vpop.f32.mrb[0].mxu0
    %v2265 = vadd.f32 0.0, %v2264
    %v2266 = vpop.f32.mrb[0].mxu0
    %2267 = vmatprep.mubr.f32.mxu0 0.0
    %2268 = vmatmul.mubr.f32.gmra.mrb[0].mxu0 %v2196
    %v2269 = vpop.f32.mrb[0].mxu0
    %v2270 = vadd.f32 0.0, %v2269
    %v2271 = vpop.f32.mrb[0].mxu0
    %2272 = vdwg.mxu0
    %s2273 = scalar_lea.vmem %s21, 24
    %v2274 = vld [vmem:[%s2273] sm:$0xff]
    %v2276 = vsel %vm453, %v2265, 0
    %v2279 = vsel %vm453, %v2270, 0
    %2281 = vmatprep.subr.mxu0 0.0
    %2282 = vmatpush1.msra.mxu0 %v2274
    %2283 = vmatprep.subr.mxu0 0.0
    %2284 = vmatpush1.msra.mxu0 0.0
    %2285 = vmatprep.subr.mxu0 0.0
    %2286 = vmatpush1.msra.mxu0 0.0
    %2287 = vmatprep.subr.mxu0 0.0
    %2288 = vmatpush1.msra.mxu0 0.0
    %2289 = vmatprep.subr.mxu0 0.0
    %2290 = vmatpush1.msra.mxu0 0.0
    %2291 = vmatprep.subr.mxu0 0.0
    %2292 = vmatpush1.msra.mxu0 0.0
    %2293 = vmatprep.subr.mxu0 0.0
    %2294 = vmatpush1.msra.mxu0 0.0
    %2295 = vmatprep.subr.mxu0 0.0
    %2296 = vmatpush1.msra.mxu0 0.0
    %2297 = vmatprep.subr.mxu0 0.0
    %2298 = vmatpush1.msra.mxu0 0.0
    %2299 = vmatprep.subr.mxu0 0.0
    %2300 = vmatpush1.msra.mxu0 0.0
    %2301 = vmatprep.subr.mxu0 0.0
    %2302 = vmatpush1.msra.mxu0 0.0
    %2303 = vmatprep.subr.mxu0 0.0
    %2304 = vmatpush1.msra.mxu0 0.0
    %2305 = vmatprep.subr.mxu0 0.0
    %2306 = vmatpush1.msra.mxu0 0.0
    %2307 = vmatprep.subr.mxu0 0.0
    %2308 = vmatpush1.msra.mxu0 0.0
    %2309 = vmatprep.subr.mxu0 0.0
    %2310 = vmatpush1.msra.mxu0 0.0
    %2311 = vmatprep.subr.mxu0 0.0
    %2312 = vmatpush1.msra.mxu0 0.0
    %2313 = vmatprep.subr.mxu0 0.0
    %2314 = vmatpush1.msra.mxu0 0.0
    %2315 = vmatprep.subr.mxu0 0.0
    %2316 = vmatpush1.msra.mxu0 0.0
    %2317 = vmatprep.subr.mxu0 0.0
    %2318 = vmatpush1.msra.mxu0 0.0
    %2319 = vmatprep.subr.mxu0 0.0
    %2320 = vmatpush1.msra.mxu0 0.0
    %2321 = vmatprep.subr.mxu0 0.0
    %2322 = vmatpush1.msra.mxu0 0.0
    %2323 = vmatprep.subr.mxu0 0.0
    %2324 = vmatpush1.msra.mxu0 0.0
    %2325 = vmatprep.subr.mxu0 0.0
    %2326 = vmatpush1.msra.mxu0 0.0
    %2327 = vmatprep.subr.mxu0 0.0
    %2328 = vmatpush1.msra.mxu0 0.0
    %2329 = vmatprep.subr.mxu0 0.0
    %2330 = vmatpush1.msra.mxu0 0.0
    %2331 = vmatprep.subr.mxu0 0.0
    %2332 = vmatpush1.msra.mxu0 0.0
    %2333 = vmatprep.subr.mxu0 0.0
    %2334 = vmatpush1.msra.mxu0 0.0
    %2335 = vmatprep.subr.mxu0 0.0
    %2336 = vmatpush1.msra.mxu0 0.0
    %2337 = vmatprep.subr.mxu0 0.0
    %2338 = vmatpush1.msra.mxu0 0.0
    %2339 = vmatprep.subr.mxu0 0.0
    %2340 = vmatpush1.msra.mxu0 0.0
    %2341 = vmatprep.subr.mxu0 0.0
    %2342 = vmatpush1.msra.mxu0 0.0
    %2343 = vmatprep.subr.mxu0 0.0
    %2344 = vmatpush1.msra.mxu0 0.0
    %2345 = vmatprep.mubr.f32.mxu0 0.0
    %2346 = vmatmul.mubr.f32.gmra.mrb[0].mxu0 %v2276
    %v2347 = vpop.f32.mrb[0].mxu0
    %v2348 = vadd.f32 0.0, %v2347
    %v2349 = vpop.f32.mrb[0].mxu0
    %2350 = vmatprep.mubr.f32.mxu0 0.0
    %2351 = vmatmul.mubr.f32.gmra.mrb[0].mxu0 %v2279
    %v2352 = vpop.f32.mrb[0].mxu0
    %v2353 = vadd.f32 0.0, %v2352
    %v2354 = vpop.f32.mrb[0].mxu0
    %2355 = vdwg.mxu0
    %v2356 = vadd.f32 %v1813, %v2348
    %v2357 = vadd.f32 %v1814, %v2353
    %v2358 = vld [vmem:[%s23] sm:$0x1]
    %v2360 = vlaneseq
    %v2361 = vshrl.u32 %v2360, 7
    %v2362 = vsub.s32 0, %v2361
    %v2363 = vrot.slane %v2358, %v2362
    %v2365 = vadd.f32 %v2356, %v2363
    %v2366 = vadd.f32 %v2357, %v2363
    %v2367 = vadd.f32 %v127, %v2365
    %v2368 = vadd.f32 %v128, %v2366
    %v2369 = vsel %vm193, %v2367, 0.0
    %2370 = vadd.xlane.f32.xlu0 %v2369
    %v2371 = vpop.xlane.xlu0 %2370
    %v2372 = vsel %vm193, %v2368, 0.0
    %2373 = vadd.xlane.f32.xlu0 %v2372
    %v2374 = vpop.xlane.xlu0 %2373
    %v2375 = vmul.f32 %v2371, 0.03125
    %v2376 = vmul.f32 %v2374, 0.03125
    %v2377 = vsub.f32 %v2367, %v2375
    %v2378 = vsub.f32 %v2368, %v2376
    %v2379 = vmul.f32 %v2377, %v2377
    %v2380 = vmul.f32 %v2378, %v2378
    %v2381 = vsel %vm193, %v2379, 0.0
    %2382 = vadd.xlane.f32.xlu0 %v2381
    %v2383 = vpop.xlane.xlu0 %2382
    %v2384 = vsel %vm193, %v2380, 0.0
    %2385 = vadd.xlane.f32.xlu0 %v2384
    %v2386 = vpop.xlane.xlu0 %2385
    %v2387 = vmul.f32 %v2383, 0.03125
    %v2388 = vmul.f32 %v2386, 0.03125
    %v2389 = vadd.f32 %v2387, 1e-05
    %v2390 = vadd.f32 %v2388, 1e-05
    %v2391 = vrsqrt.pop %v2389
    %v2392 = vrsqrt.pop %v2390
    %v2393 = vmul.f32 %v2377, %v2391
    %v2394 = vmul.f32 %v2378, %v2392
    %v2395 = vld [vmem:[%s49] sm:$0x1]
    %v2397 = vlaneseq
    %v2398 = vshrl.u32 %v2397, 7
    %v2399 = vsub.s32 0, %v2398
    %v2400 = vrot.slane %v2395, %v2399
    %v2402 = vmul.f32 %v2393, %v2400
    %v2403 = vmul.f32 %v2394, %v2400
    %v2404 = vld [vmem:[%s51] sm:$0x1]
    %v2406 = vlaneseq
    %v2407 = vshrl.u32 %v2406, 7
    %v2408 = vsub.s32 0, %v2407
    %v2409 = vrot.slane %v2404, %v2408
    %v2411 = vadd.f32 %v2402, %v2409
    %v2412 = vadd.f32 %v2403, %v2409
    %v2413 = vadd.f32 %v2411, %v132
    %v2414 = vadd.f32 %v2412, %v133
    %v2415 = vadd.f32 %v129, %v134
    %v2416 = vadd.f32 %v130, %v135
    %v2417 = vadd.f32 %v131, %v136
    %v2418 = vld [vmem:[%s25] sm:$0xff]
    %v2419 = vld [vmem:[%s25 + $0x8] sm:$0xff]
    %v2420 = vld [vmem:[%s25 + $0x10] sm:$0xff]
    %v2421 = vld [vmem:[%s25 + $0x18] sm:$0xff]
    %v2422 = vld [vmem:[%s31] sm:$0x1]
    %v2424 = vlaneseq
    %v2425 = vshrl.u32 %v2424, 7
    %v2426 = vsub.s32 0, %v2425
    %v2427 = vrot.slane %v2422, %v2426
    %v2430 = vsel %vm193, %v2413, 0
    %v2433 = vsel %vm193, %v2414, 0
    %2435 = vmatprep.subr.mxu0 0.0
    %2436 = vmatpush1.msra.mxu0 %v2418
    %2437 = vmatprep.subr.mxu0 0.0
    %2438 = vmatpush1.msra.mxu0 %v2419
    %2439 = vmatprep.subr.mxu0 0.0
    %2440 = vmatpush1.msra.mxu0 %v2420
    %2441 = vmatprep.subr.mxu0 0.0
    %2442 = vmatpush1.msra.mxu0 %v2421
    %2443 = vmatprep.subr.mxu0 0.0
    %2444 = vmatpush1.msra.mxu0 0.0
    %2445 = vmatprep.subr.mxu0 0.0
    %2446 = vmatpush1.msra.mxu0 0.0
    %2447 = vmatprep.subr.mxu0 0.0
    %2448 = vmatpush1.msra.mxu0 0.0
    %2449 = vmatprep.subr.mxu0 0.0
    %2450 = vmatpush1.msra.mxu0 0.0
    %2451 = vmatprep.subr.mxu0 0.0
    %2452 = vmatpush1.msra.mxu0 0.0
    %2453 = vmatprep.subr.mxu0 0.0
    %2454 = vmatpush1.msra.mxu0 0.0
    %2455 = vmatprep.subr.mxu0 0.0
    %2456 = vmatpush1.msra.mxu0 0.0
    %2457 = vmatprep.subr.mxu0 0.0
    %2458 = vmatpush1.msra.mxu0 0.0
    %2459 = vmatprep.subr.mxu0 0.0
    %2460 = vmatpush1.msra.mxu0 0.0
    %2461 = vmatprep.subr.mxu0 0.0
    %2462 = vmatpush1.msra.mxu0 0.0
    %2463 = vmatprep.subr.mxu0 0.0
    %2464 = vmatpush1.msra.mxu0 0.0
    %2465 = vmatprep.subr.mxu0 0.0
    %2466 = vmatpush1.msra.mxu0 0.0
    %2467 = vmatprep.subr.mxu0 0.0
    %2468 = vmatpush1.msra.mxu0 0.0
    %2469 = vmatprep.subr.mxu0 0.0
    %2470 = vmatpush1.msra.mxu0 0.0
    %2471 = vmatprep.subr.mxu0 0.0
    %2472 = vmatpush1.msra.mxu0 0.0
    %2473 = vmatprep.subr.mxu0 0.0
    %2474 = vmatpush1.msra.mxu0 0.0
    %2475 = vmatprep.subr.mxu0 0.0
    %2476 = vmatpush1.msra.mxu0 0.0
    %2477 = vmatprep.subr.mxu0 0.0
    %2478 = vmatpush1.msra.mxu0 0.0
    %2479 = vmatprep.subr.mxu0 0.0
    %2480 = vmatpush1.msra.mxu0 0.0
    %2481 = vmatprep.subr.mxu0 0.0
    %2482 = vmatpush1.msra.mxu0 0.0
    %2483 = vmatprep.subr.mxu0 0.0
    %2484 = vmatpush1.msra.mxu0 0.0
    %2485 = vmatprep.subr.mxu0 0.0
    %2486 = vmatpush1.msra.mxu0 0.0
    %2487 = vmatprep.subr.mxu0 0.0
    %2488 = vmatpush1.msra.mxu0 0.0
    %2489 = vmatprep.subr.mxu0 0.0
    %2490 = vmatpush1.msra.mxu0 0.0
    %2491 = vmatprep.subr.mxu0 0.0
    %2492 = vmatpush1.msra.mxu0 0.0
    %2493 = vmatprep.subr.mxu0 0.0
    %2494 = vmatpush1.msra.mxu0 0.0
    %2495 = vmatprep.subr.mxu0 0.0
    %2496 = vmatpush1.msra.mxu0 0.0
    %2497 = vmatprep.subr.mxu0 0.0
    %2498 = vmatpush1.msra.mxu0 0.0
    %2499 = vmatprep.mubr.f32.mxu0 0.0
    %2500 = vmatmul.mubr.f32.gmra.mrb[0].mxu0 %v2430
    %v2501 = vpop.f32.mrb[0].mxu0
    %v2502 = vadd.f32 %v2427, %v2501
    %v2503 = vpop.f32.mrb[0].mxu0
    %2504 = vmatprep.mubr.f32.mxu0 0.0
    %2505 = vmatmul.mubr.f32.gmra.mrb[0].mxu0 %v2433
    %v2506 = vpop.f32.mrb[0].mxu0
    %v2507 = vadd.f32 %v2427, %v2506
    %v2508 = vpop.f32.mrb[0].mxu0
    %2509 = vdwg.mxu0
    %v2510 = vld [vmem:[%s27] sm:$0xff]
    %v2511 = vld [vmem:[%s27 + $0x8] sm:$0xff]
    %v2512 = vld [vmem:[%s27 + $0x10] sm:$0xff]
    %v2513 = vld [vmem:[%s27 + $0x18] sm:$0xff]
    %v2514 = vld [vmem:[%s33] sm:$0x1]
    %v2516 = vlaneseq
    %v2517 = vshrl.u32 %v2516, 7
    %v2518 = vsub.s32 0, %v2517
    %v2519 = vrot.slane %v2514, %v2518
    %v2522 = vsel %vm193, %v2415, 0
    %v2525 = vsel %vm193, %v2416, 0
    %v2528 = vsel %vm193, %v2417, 0
    %2530 = vmatprep.subr.mxu0 0.0
    %2531 = vmatpush1.msra.mxu0 %v2510
    %2532 = vmatprep.subr.mxu0 0.0
    %2533 = vmatpush1.msra.mxu0 %v2511
    %2534 = vmatprep.subr.mxu0 0.0
    %2535 = vmatpush1.msra.mxu0 %v2512
    %2536 = vmatprep.subr.mxu0 0.0
    %2537 = vmatpush1.msra.mxu0 %v2513
    %2538 = vmatprep.subr.mxu0 0.0
    %2539 = vmatpush1.msra.mxu0 0.0
    %2540 = vmatprep.subr.mxu0 0.0
    %2541 = vmatpush1.msra.mxu0 0.0
    %2542 = vmatprep.subr.mxu0 0.0
    %2543 = vmatpush1.msra.mxu0 0.0
    %2544 = vmatprep.subr.mxu0 0.0
    %2545 = vmatpush1.msra.mxu0 0.0
    %2546 = vmatprep.subr.mxu0 0.0
    %2547 = vmatpush1.msra.mxu0 0.0
    %2548 = vmatprep.subr.mxu0 0.0
    %2549 = vmatpush1.msra.mxu0 0.0
    %2550 = vmatprep.subr.mxu0 0.0
    %2551 = vmatpush1.msra.mxu0 0.0
    %2552 = vmatprep.subr.mxu0 0.0
    %2553 = vmatpush1.msra.mxu0 0.0
    %2554 = vmatprep.subr.mxu0 0.0
    %2555 = vmatpush1.msra.mxu0 0.0
    %2556 = vmatprep.subr.mxu0 0.0
    %2557 = vmatpush1.msra.mxu0 0.0
    %2558 = vmatprep.subr.mxu0 0.0
    %2559 = vmatpush1.msra.mxu0 0.0
    %2560 = vmatprep.subr.mxu0 0.0
    %2561 = vmatpush1.msra.mxu0 0.0
    %2562 = vmatprep.subr.mxu0 0.0
    %2563 = vmatpush1.msra.mxu0 0.0
    %2564 = vmatprep.subr.mxu0 0.0
    %2565 = vmatpush1.msra.mxu0 0.0
    %2566 = vmatprep.subr.mxu0 0.0
    %2567 = vmatpush1.msra.mxu0 0.0
    %2568 = vmatprep.subr.mxu0 0.0
    %2569 = vmatpush1.msra.mxu0 0.0
    %2570 = vmatprep.subr.mxu0 0.0
    %2571 = vmatpush1.msra.mxu0 0.0
    %2572 = vmatprep.subr.mxu0 0.0
    %2573 = vmatpush1.msra.mxu0 0.0
    %2574 = vmatprep.subr.mxu0 0.0
    %2575 = vmatpush1.msra.mxu0 0.0
    %2576 = vmatprep.subr.mxu0 0.0
    %2577 = vmatpush1.msra.mxu0 0.0
    %2578 = vmatprep.subr.mxu0 0.0
    %2579 = vmatpush1.msra.mxu0 0.0
    %2580 = vmatprep.subr.mxu0 0.0
    %2581 = vmatpush1.msra.mxu0 0.0
    %2582 = vmatprep.subr.mxu0 0.0
    %2583 = vmatpush1.msra.mxu0 0.0
    %2584 = vmatprep.subr.mxu0 0.0
    %2585 = vmatpush1.msra.mxu0 0.0
    %2586 = vmatprep.subr.mxu0 0.0
    %2587 = vmatpush1.msra.mxu0 0.0
    %2588 = vmatprep.subr.mxu0 0.0
    %2589 = vmatpush1.msra.mxu0 0.0
    %2590 = vmatprep.subr.mxu0 0.0
    %2591 = vmatpush1.msra.mxu0 0.0
    %2592 = vmatprep.subr.mxu0 0.0
    %2593 = vmatpush1.msra.mxu0 0.0
    %2594 = vmatprep.mubr.f32.mxu0 0.0
    %2595 = vmatmul.mubr.f32.gmra.mrb[0].mxu0 %v2522
    %v2596 = vpop.f32.mrb[0].mxu0
    %v2597 = vadd.f32 %v2519, %v2596
    %v2598 = vpop.f32.mrb[0].mxu0
    %2599 = vmatprep.mubr.f32.mxu0 0.0
    %2600 = vmatmul.mubr.f32.gmra.mrb[0].mxu0 %v2525
    %v2601 = vpop.f32.mrb[0].mxu0
    %v2602 = vadd.f32 %v2519, %v2601
    %v2603 = vpop.f32.mrb[0].mxu0
    %2604 = vmatprep.mubr.f32.mxu0 0.0
    %2605 = vmatmul.mubr.f32.gmra.mrb[0].mxu0 %v2528
    %v2606 = vpop.f32.mrb[0].mxu0
    %v2607 = vadd.f32 %v2519, %v2606
    %v2608 = vpop.f32.mrb[0].mxu0
    %2609 = vdwg.mxu0
    %v2610 = vld [vmem:[%s29] sm:$0xff]
    %v2611 = vld [vmem:[%s29 + $0x8] sm:$0xff]
    %v2612 = vld [vmem:[%s29 + $0x10] sm:$0xff]
    %v2613 = vld [vmem:[%s29 + $0x18] sm:$0xff]
    %v2614 = vld [vmem:[%s35] sm:$0x1]
    %v2616 = vlaneseq
    %v2617 = vshrl.u32 %v2616, 7
    %v2618 = vsub.s32 0, %v2617
    %v2619 = vrot.slane %v2614, %v2618
    %v2622 = vsel %vm193, %v129, 0
    %v2625 = vsel %vm193, %v130, 0
    %v2628 = vsel %vm193, %v131, 0
    %2630 = vmatprep.subr.mxu0 0.0
    %2631 = vmatpush1.msra.mxu0 %v2610
    %2632 = vmatprep.subr.mxu0 0.0
    %2633 = vmatpush1.msra.mxu0 %v2611
    %2634 = vmatprep.subr.mxu0 0.0
    %2635 = vmatpush1.msra.mxu0 %v2612
    %2636 = vmatprep.subr.mxu0 0.0
    %2637 = vmatpush1.msra.mxu0 %v2613
    %2638 = vmatprep.subr.mxu0 0.0
    %2639 = vmatpush1.msra.mxu0 0.0
    %2640 = vmatprep.subr.mxu0 0.0
    %2641 = vmatpush1.msra.mxu0 0.0
    %2642 = vmatprep.subr.mxu0 0.0
    %2643 = vmatpush1.msra.mxu0 0.0
    %2644 = vmatprep.subr.mxu0 0.0
    %2645 = vmatpush1.msra.mxu0 0.0
    %2646 = vmatprep.subr.mxu0 0.0
    %2647 = vmatpush1.msra.mxu0 0.0
    %2648 = vmatprep.subr.mxu0 0.0
    %2649 = vmatpush1.msra.mxu0 0.0
    %2650 = vmatprep.subr.mxu0 0.0
    %2651 = vmatpush1.msra.mxu0 0.0
    %2652 = vmatprep.subr.mxu0 0.0
    %2653 = vmatpush1.msra.mxu0 0.0
    %2654 = vmatprep.subr.mxu0 0.0
    %2655 = vmatpush1.msra.mxu0 0.0
    %2656 = vmatprep.subr.mxu0 0.0
    %2657 = vmatpush1.msra.mxu0 0.0
    %2658 = vmatprep.subr.mxu0 0.0
    %2659 = vmatpush1.msra.mxu0 0.0
    %2660 = vmatprep.subr.mxu0 0.0
    %2661 = vmatpush1.msra.mxu0 0.0
    %2662 = vmatprep.subr.mxu0 0.0
    %2663 = vmatpush1.msra.mxu0 0.0
    %2664 = vmatprep.subr.mxu0 0.0
    %2665 = vmatpush1.msra.mxu0 0.0
    %2666 = vmatprep.subr.mxu0 0.0
    %2667 = vmatpush1.msra.mxu0 0.0
    %2668 = vmatprep.subr.mxu0 0.0
    %2669 = vmatpush1.msra.mxu0 0.0
    %2670 = vmatprep.subr.mxu0 0.0
    %2671 = vmatpush1.msra.mxu0 0.0
    %2672 = vmatprep.subr.mxu0 0.0
    %2673 = vmatpush1.msra.mxu0 0.0
    %2674 = vmatprep.subr.mxu0 0.0
    %2675 = vmatpush1.msra.mxu0 0.0
    %2676 = vmatprep.subr.mxu0 0.0
    %2677 = vmatpush1.msra.mxu0 0.0
    %2678 = vmatprep.subr.mxu0 0.0
    %2679 = vmatpush1.msra.mxu0 0.0
    %2680 = vmatprep.subr.mxu0 0.0
    %2681 = vmatpush1.msra.mxu0 0.0
    %2682 = vmatprep.subr.mxu0 0.0
    %2683 = vmatpush1.msra.mxu0 0.0
    %2684 = vmatprep.subr.mxu0 0.0
    %2685 = vmatpush1.msra.mxu0 0.0
    %2686 = vmatprep.subr.mxu0 0.0
    %2687 = vmatpush1.msra.mxu0 0.0
    %2688 = vmatprep.subr.mxu0 0.0
    %2689 = vmatpush1.msra.mxu0 0.0
    %2690 = vmatprep.subr.mxu0 0.0
    %2691 = vmatpush1.msra.mxu0 0.0
    %2692 = vmatprep.subr.mxu0 0.0
    %2693 = vmatpush1.msra.mxu0 0.0
    %2694 = vmatprep.mubr.f32.mxu0 0.0
    %2695 = vmatmul.mubr.f32.gmra.mrb[0].mxu0 %v2622
    %v2696 = vpop.f32.mrb[0].mxu0
    %v2697 = vadd.f32 %v2619, %v2696
    %v2698 = vpop.f32.mrb[0].mxu0
    %2699 = vmatprep.mubr.f32.mxu0 0.0
    %2700 = vmatmul.mubr.f32.gmra.mrb[0].mxu0 %v2625
    %v2701 = vpop.f32.mrb[0].mxu0
    %v2702 = vadd.f32 %v2619, %v2701
    %v2703 = vpop.f32.mrb[0].mxu0
    %2704 = vmatprep.mubr.f32.mxu0 0.0
    %2705 = vmatmul.mubr.f32.gmra.mrb[0].mxu0 %v2628
    %v2706 = vpop.f32.mrb[0].mxu0
    %v2707 = vadd.f32 %v2619, %v2706
    %v2708 = vpop.f32.mrb[0].mxu0
    %2709 = vdwg.mxu0
    %v2711 = vsel %vm453, %v2502, 0
    %v2714 = vsel %vm453, %v2507, 0
    %v2717 = vsel %vm453, %v2597, 0
    %v2720 = vsel %vm453, %v2602, 0
    %v2723 = vsel %vm453, %v2607, 0
    %2725 = vmatprep.subr.mxu0 0.0
    %2726 = vmatpush1.xpose.msra.mxu0 %v2717
    %2727 = vmatprep.subr.mxu0 0.0
    %2728 = vmatpush1.xpose.msra.mxu0 %v2720
    %2729 = vmatprep.subr.mxu0 0.0
    %2730 = vmatpush1.xpose.msra.mxu0 %v2723
    %2731 = vmatprep.subr.mxu0 0.0
    %2732 = vmatpush1.xpose.msra.mxu0 0.0
    %2733 = vmatprep.subr.mxu0 0.0
    %2734 = vmatpush1.xpose.msra.mxu0 0.0
    %2735 = vmatprep.subr.mxu0 0.0
    %2736 = vmatpush1.xpose.msra.mxu0 0.0
    %2737 = vmatprep.subr.mxu0 0.0
    %2738 = vmatpush1.xpose.msra.mxu0 0.0
    %2739 = vmatprep.subr.mxu0 0.0
    %2740 = vmatpush1.xpose.msra.mxu0 0.0
    %2741 = vmatprep.subr.mxu0 0.0
    %2742 = vmatpush1.xpose.msra.mxu0 0.0
    %2743 = vmatprep.subr.mxu0 0.0
    %2744 = vmatpush1.xpose.msra.mxu0 0.0
    %2745 = vmatprep.subr.mxu0 0.0
    %2746 = vmatpush1.xpose.msra.mxu0 0.0
    %2747 = vmatprep.subr.mxu0 0.0
    %2748 = vmatpush1.xpose.msra.mxu0 0.0
    %2749 = vmatprep.subr.mxu0 0.0
    %2750 = vmatpush1.xpose.msra.mxu0 0.0
    %2751 = vmatprep.subr.mxu0 0.0
    %2752 = vmatpush1.xpose.msra.mxu0 0.0
    %2753 = vmatprep.subr.mxu0 0.0
    %2754 = vmatpush1.xpose.msra.mxu0 0.0
    %2755 = vmatprep.subr.mxu0 0.0
    %2756 = vmatpush1.xpose.msra.mxu0 0.0
    %2757 = vmatprep.subr.mxu0 0.0
    %2758 = vmatpush1.xpose.msra.mxu0 0.0
    %2759 = vmatprep.subr.mxu0 0.0
    %2760 = vmatpush1.xpose.msra.mxu0 0.0
    %2761 = vmatprep.subr.mxu0 0.0
    %2762 = vmatpush1.xpose.msra.mxu0 0.0
    %2763 = vmatprep.subr.mxu0 0.0
    %2764 = vmatpush1.xpose.msra.mxu0 0.0
    %2765 = vmatprep.subr.mxu0 0.0
    %2766 = vmatpush1.xpose.msra.mxu0 0.0
    %2767 = vmatprep.subr.mxu0 0.0
    %2768 = vmatpush1.xpose.msra.mxu0 0.0
    %2769 = vmatprep.subr.mxu0 0.0
    %2770 = vmatpush1.xpose.msra.mxu0 0.0
    %2771 = vmatprep.subr.mxu0 0.0
    %2772 = vmatpush1.xpose.msra.mxu0 0.0
    %2773 = vmatprep.subr.mxu0 0.0
    %2774 = vmatpush1.xpose.msra.mxu0 0.0
    %2775 = vmatprep.subr.mxu0 0.0
    %2776 = vmatpush1.xpose.msra.mxu0 0.0
    %2777 = vmatprep.subr.mxu0 0.0
    %2778 = vmatpush1.xpose.msra.mxu0 0.0
    %2779 = vmatprep.subr.mxu0 0.0
    %2780 = vmatpush1.xpose.msra.mxu0 0.0
    %2781 = vmatprep.subr.mxu0 0.0
    %2782 = vmatpush1.xpose.msra.mxu0 0.0
    %2783 = vmatprep.subr.mxu0 0.0
    %2784 = vmatpush1.xpose.msra.mxu0 0.0
    %2785 = vmatprep.subr.mxu0 0.0
    %2786 = vmatpush1.xpose.msra.mxu0 0.0
    %2787 = vmatprep.subr.mxu0 0.0
    %2788 = vmatpush1.xpose.msra.mxu0 0.0
    %2789 = vmatprep.mubr.f32.mxu0 0.0
    %2790 = vmatmul.mubr.f32.gmra.mrb[0].mxu0 %v2711
    %v2791 = vpop.f32.mrb[0].mxu0
    %v2792 = vadd.f32 0.0, %v2791
    %v2793 = vpop.f32.mrb[0].mxu0
    %2794 = vmatprep.mubr.f32.mxu0 0.0
    %2795 = vmatmul.mubr.f32.gmra.mrb[0].mxu0 %v2714
    %v2796 = vpop.f32.mrb[0].mxu0
    %v2797 = vadd.f32 0.0, %v2796
    %v2798 = vpop.f32.mrb[0].mxu0
    %2799 = vdwg.mxu0
    %v2800 = vmul.f32 %v2792, 0.35355338
    %v2801 = vmul.f32 %v2797, 0.35355338
    %v2802 = vsel %vm178, %v2800, -inf
    %v2803 = vsel %vm179, %v2801, -inf
    %vm2804 = vcmask 195584
    %v2805 = vsel %vm2804, %v2802, -inf
    %2806 = vmax.xlane.f32.xlu0 %v2805
    %v2807 = vpop.xlane.xlu0 %2806
    %v2808 = vsel %vm2804, %v2803, -inf
    %2809 = vmax.xlane.f32.xlu0 %v2808
    %v2810 = vpop.xlane.xlu0 %2809
    %v2811 = vsub.f32 %v2802, %v2807
    %v2812 = vsub.f32 %v2803, %v2810
    %v2813 = vmul.f32 %v2811, 1.442695
    %v2814 = vpow.pop %v2813
    %v2815 = vmul.f32 %v2812, 1.442695
    %v2816 = vpow.pop %v2815
    %v2817 = vsel %vm2804, %v2814, 0.0
    %2818 = vadd.xlane.f32.xlu0 %v2817
    %v2819 = vpop.xlane.xlu0 %2818
    %v2820 = vsel %vm2804, %v2816, 0.0
    %2821 = vadd.xlane.f32.xlu0 %v2820
    %v2822 = vpop.xlane.xlu0 %2821
    %v2823 = vrcp.pop %v2819
    %v2824 = vrcp.pop %v2822
    %v2825 = vmul.f32 %v2814, %v2823
    %v2826 = vmul.f32 %v2816, %v2824
    %v2828 = vsel %vm2804, %v2825, 0
    %v2831 = vsel %vm2804, %v2826, 0
    %2833 = vmatprep.subr.mxu0 0.0
    %2834 = vmatpush1.msra.mxu0 %v2697
    %2835 = vmatprep.subr.mxu0 0.0
    %2836 = vmatpush1.msra.mxu0 %v2702
    %2837 = vmatprep.subr.mxu0 0.0
    %2838 = vmatpush1.msra.mxu0 %v2707
    %2839 = vmatprep.subr.mxu0 0.0
    %2840 = vmatpush1.msra.mxu0 0.0
    %2841 = vmatprep.subr.mxu0 0.0
    %2842 = vmatpush1.msra.mxu0 0.0
    %2843 = vmatprep.subr.mxu0 0.0
    %2844 = vmatpush1.msra.mxu0 0.0
    %2845 = vmatprep.subr.mxu0 0.0
    %2846 = vmatpush1.msra.mxu0 0.0
    %2847 = vmatprep.subr.mxu0 0.0
    %2848 = vmatpush1.msra.mxu0 0.0
    %2849 = vmatprep.subr.mxu0 0.0
    %2850 = vmatpush1.msra.mxu0 0.0
    %2851 = vmatprep.subr.mxu0 0.0
    %2852 = vmatpush1.msra.mxu0 0.0
    %2853 = vmatprep.subr.mxu0 0.0
    %2854 = vmatpush1.msra.mxu0 0.0
    %2855 = vmatprep.subr.mxu0 0.0
    %2856 = vmatpush1.msra.mxu0 0.0
    %2857 = vmatprep.subr.mxu0 0.0
    %2858 = vmatpush1.msra.mxu0 0.0
    %2859 = vmatprep.subr.mxu0 0.0
    %2860 = vmatpush1.msra.mxu0 0.0
    %2861 = vmatprep.subr.mxu0 0.0
    %2862 = vmatpush1.msra.mxu0 0.0
    %2863 = vmatprep.subr.mxu0 0.0
    %2864 = vmatpush1.msra.mxu0 0.0
    %2865 = vmatprep.subr.mxu0 0.0
    %2866 = vmatpush1.msra.mxu0 0.0
    %2867 = vmatprep.subr.mxu0 0.0
    %2868 = vmatpush1.msra.mxu0 0.0
    %2869 = vmatprep.subr.mxu0 0.0
    %2870 = vmatpush1.msra.mxu0 0.0
    %2871 = vmatprep.subr.mxu0 0.0
    %2872 = vmatpush1.msra.mxu0 0.0
    %2873 = vmatprep.subr.mxu0 0.0
    %2874 = vmatpush1.msra.mxu0 0.0
    %2875 = vmatprep.subr.mxu0 0.0
    %2876 = vmatpush1.msra.mxu0 0.0
    %2877 = vmatprep.subr.mxu0 0.0
    %2878 = vmatpush1.msra.mxu0 0.0
    %2879 = vmatprep.subr.mxu0 0.0
    %2880 = vmatpush1.msra.mxu0 0.0
    %2881 = vmatprep.subr.mxu0 0.0
    %2882 = vmatpush1.msra.mxu0 0.0
    %2883 = vmatprep.subr.mxu0 0.0
    %2884 = vmatpush1.msra.mxu0 0.0
    %2885 = vmatprep.subr.mxu0 0.0
    %2886 = vmatpush1.msra.mxu0 0.0
    %2887 = vmatprep.subr.mxu0 0.0
    %2888 = vmatpush1.msra.mxu0 0.0
    %2889 = vmatprep.subr.mxu0 0.0
    %2890 = vmatpush1.msra.mxu0 0.0
    %2891 = vmatprep.subr.mxu0 0.0
    %2892 = vmatpush1.msra.mxu0 0.0
    %2893 = vmatprep.subr.mxu0 0.0
    %2894 = vmatpush1.msra.mxu0 0.0
    %2895 = vmatprep.subr.mxu0 0.0
    %2896 = vmatpush1.msra.mxu0 0.0
    %2897 = vmatprep.mubr.f32.mxu0 0.0
    %2898 = vmatmul.mubr.f32.gmra.mrb[0].mxu0 %v2828
    %v2899 = vpop.f32.mrb[0].mxu0
    %v2900 = vadd.f32 0.0, %v2899
    %v2901 = vpop.f32.mrb[0].mxu0
    %2902 = vmatprep.mubr.f32.mxu0 0.0
    %2903 = vmatmul.mubr.f32.gmra.mrb[0].mxu0 %v2831
    %v2904 = vpop.f32.mrb[0].mxu0
    %v2905 = vadd.f32 0.0, %v2904
    %v2906 = vpop.f32.mrb[0].mxu0
    %2907 = vdwg.mxu0
    %v2908 = vld [vmem:[%s37] sm:$0xff]
    %s2909 = scalar_lea.vmem %s25, 32
    %v2910 = vld [vmem:[%s2909] sm:$0xff]
    %v2911 = vld [vmem:[%s2909 + $0x8] sm:$0xff]
    %v2912 = vld [vmem:[%s2909 + $0x10] sm:$0xff]
    %v2913 = vld [vmem:[%s2909 + $0x18] sm:$0xff]
    %s2914 = scalar_lea.vmem %s31, 1
    %v2915 = vld [vmem:[%s2914] sm:$0x1]
    %v2917 = vlaneseq
    %v2918 = vshrl.u32 %v2917, 7
    %v2919 = vsub.s32 0, %v2918
    %v2920 = vrot.slane %v2915, %v2919
    %2922 = vmatprep.subr.mxu0 0.0
    %2923 = vmatpush1.msra.mxu0 %v2910
    %2924 = vmatprep.subr.mxu0 0.0
    %2925 = vmatpush1.msra.mxu0 %v2911
    %2926 = vmatprep.subr.mxu0 0.0
    %2927 = vmatpush1.msra.mxu0 %v2912
    %2928 = vmatprep.subr.mxu0 0.0
    %2929 = vmatpush1.msra.mxu0 %v2913
    %2930 = vmatprep.subr.mxu0 0.0
    %2931 = vmatpush1.msra.mxu0 0.0
    %2932 = vmatprep.subr.mxu0 0.0
    %2933 = vmatpush1.msra.mxu0 0.0
    %2934 = vmatprep.subr.mxu0 0.0
    %2935 = vmatpush1.msra.mxu0 0.0
    %2936 = vmatprep.subr.mxu0 0.0
    %2937 = vmatpush1.msra.mxu0 0.0
    %2938 = vmatprep.subr.mxu0 0.0
    %2939 = vmatpush1.msra.mxu0 0.0
    %2940 = vmatprep.subr.mxu0 0.0
    %2941 = vmatpush1.msra.mxu0 0.0
    %2942 = vmatprep.subr.mxu0 0.0
    %2943 = vmatpush1.msra.mxu0 0.0
    %2944 = vmatprep.subr.mxu0 0.0
    %2945 = vmatpush1.msra.mxu0 0.0
    %2946 = vmatprep.subr.mxu0 0.0
    %2947 = vmatpush1.msra.mxu0 0.0
    %2948 = vmatprep.subr.mxu0 0.0
    %2949 = vmatpush1.msra.mxu0 0.0
    %2950 = vmatprep.subr.mxu0 0.0
    %2951 = vmatpush1.msra.mxu0 0.0
    %2952 = vmatprep.subr.mxu0 0.0
    %2953 = vmatpush1.msra.mxu0 0.0
    %2954 = vmatprep.subr.mxu0 0.0
    %2955 = vmatpush1.msra.mxu0 0.0
    %2956 = vmatprep.subr.mxu0 0.0
    %2957 = vmatpush1.msra.mxu0 0.0
    %2958 = vmatprep.subr.mxu0 0.0
    %2959 = vmatpush1.msra.mxu0 0.0
    %2960 = vmatprep.subr.mxu0 0.0
    %2961 = vmatpush1.msra.mxu0 0.0
    %2962 = vmatprep.subr.mxu0 0.0
    %2963 = vmatpush1.msra.mxu0 0.0
    %2964 = vmatprep.subr.mxu0 0.0
    %2965 = vmatpush1.msra.mxu0 0.0
    %2966 = vmatprep.subr.mxu0 0.0
    %2967 = vmatpush1.msra.mxu0 0.0
    %2968 = vmatprep.subr.mxu0 0.0
    %2969 = vmatpush1.msra.mxu0 0.0
    %2970 = vmatprep.subr.mxu0 0.0
    %2971 = vmatpush1.msra.mxu0 0.0
    %2972 = vmatprep.subr.mxu0 0.0
    %2973 = vmatpush1.msra.mxu0 0.0
    %2974 = vmatprep.subr.mxu0 0.0
    %2975 = vmatpush1.msra.mxu0 0.0
    %2976 = vmatprep.subr.mxu0 0.0
    %2977 = vmatpush1.msra.mxu0 0.0
    %2978 = vmatprep.subr.mxu0 0.0
    %2979 = vmatpush1.msra.mxu0 0.0
    %2980 = vmatprep.subr.mxu0 0.0
    %2981 = vmatpush1.msra.mxu0 0.0
    %2982 = vmatprep.subr.mxu0 0.0
    %2983 = vmatpush1.msra.mxu0 0.0
    %2984 = vmatprep.subr.mxu0 0.0
    %2985 = vmatpush1.msra.mxu0 0.0
    %2986 = vmatprep.mubr.f32.mxu0 0.0
    %2987 = vmatmul.mubr.f32.gmra.mrb[0].mxu0 %v2430
    %v2988 = vpop.f32.mrb[0].mxu0
    %v2989 = vadd.f32 %v2920, %v2988
    %v2990 = vpop.f32.mrb[0].mxu0
    %2991 = vmatprep.mubr.f32.mxu0 0.0
    %2992 = vmatmul.mubr.f32.gmra.mrb[0].mxu0 %v2433
    %v2993 = vpop.f32.mrb[0].mxu0
    %v2994 = vadd.f32 %v2920, %v2993
    %v2995 = vpop.f32.mrb[0].mxu0
    %2996 = vdwg.mxu0
    %s2997 = scalar_lea.vmem %s27, 32
    %v2998 = vld [vmem:[%s2997] sm:$0xff]
    %v2999 = vld [vmem:[%s2997 + $0x8] sm:$0xff]
    %v3000 = vld [vmem:[%s2997 + $0x10] sm:$0xff]
    %v3001 = vld [vmem:[%s2997 + $0x18] sm:$0xff]
    %s3002 = scalar_lea.vmem %s33, 1
    %v3003 = vld [vmem:[%s3002] sm:$0x1]
    %v3005 = vlaneseq
    %v3006 = vshrl.u32 %v3005, 7
    %v3007 = vsub.s32 0, %v3006
    %v3008 = vrot.slane %v3003, %v3007
    %3010 = vmatprep.subr.mxu0 0.0
    %3011 = vmatpush1.msra.mxu0 %v2998
    %3012 = vmatprep.subr.mxu0 0.0
    %3013 = vmatpush1.msra.mxu0 %v2999
    %3014 = vmatprep.subr.mxu0 0.0
    %3015 = vmatpush1.msra.mxu0 %v3000
    %3016 = vmatprep.subr.mxu0 0.0
    %3017 = vmatpush1.msra.mxu0 %v3001
    %3018 = vmatprep.subr.mxu0 0.0
    %3019 = vmatpush1.msra.mxu0 0.0
    %3020 = vmatprep.subr.mxu0 0.0
    %3021 = vmatpush1.msra.mxu0 0.0
    %3022 = vmatprep.subr.mxu0 0.0
    %3023 = vmatpush1.msra.mxu0 0.0
    %3024 = vmatprep.subr.mxu0 0.0
    %3025 = vmatpush1.msra.mxu0 0.0
    %3026 = vmatprep.subr.mxu0 0.0
    %3027 = vmatpush1.msra.mxu0 0.0
    %3028 = vmatprep.subr.mxu0 0.0
    %3029 = vmatpush1.msra.mxu0 0.0
    %3030 = vmatprep.subr.mxu0 0.0
    %3031 = vmatpush1.msra.mxu0 0.0
    %3032 = vmatprep.subr.mxu0 0.0
    %3033 = vmatpush1.msra.mxu0 0.0
    %3034 = vmatprep.subr.mxu0 0.0
    %3035 = vmatpush1.msra.mxu0 0.0
    %3036 = vmatprep.subr.mxu0 0.0
    %3037 = vmatpush1.msra.mxu0 0.0
    %3038 = vmatprep.subr.mxu0 0.0
    %3039 = vmatpush1.msra.mxu0 0.0
    %3040 = vmatprep.subr.mxu0 0.0
    %3041 = vmatpush1.msra.mxu0 0.0
    %3042 = vmatprep.subr.mxu0 0.0
    %3043 = vmatpush1.msra.mxu0 0.0
    %3044 = vmatprep.subr.mxu0 0.0
    %3045 = vmatpush1.msra.mxu0 0.0
    %3046 = vmatprep.subr.mxu0 0.0
    %3047 = vmatpush1.msra.mxu0 0.0
    %3048 = vmatprep.subr.mxu0 0.0
    %3049 = vmatpush1.msra.mxu0 0.0
    %3050 = vmatprep.subr.mxu0 0.0
    %3051 = vmatpush1.msra.mxu0 0.0
    %3052 = vmatprep.subr.mxu0 0.0
    %3053 = vmatpush1.msra.mxu0 0.0
    %3054 = vmatprep.subr.mxu0 0.0
    %3055 = vmatpush1.msra.mxu0 0.0
    %3056 = vmatprep.subr.mxu0 0.0
    %3057 = vmatpush1.msra.mxu0 0.0
    %3058 = vmatprep.subr.mxu0 0.0
    %3059 = vmatpush1.msra.mxu0 0.0
    %3060 = vmatprep.subr.mxu0 0.0
    %3061 = vmatpush1.msra.mxu0 0.0
    %3062 = vmatprep.subr.mxu0 0.0
    %3063 = vmatpush1.msra.mxu0 0.0
    %3064 = vmatprep.subr.mxu0 0.0
    %3065 = vmatpush1.msra.mxu0 0.0
    %3066 = vmatprep.subr.mxu0 0.0
    %3067 = vmatpush1.msra.mxu0 0.0
    %3068 = vmatprep.subr.mxu0 0.0
    %3069 = vmatpush1.msra.mxu0 0.0
    %3070 = vmatprep.subr.mxu0 0.0
    %3071 = vmatpush1.msra.mxu0 0.0
    %3072 = vmatprep.subr.mxu0 0.0
    %3073 = vmatpush1.msra.mxu0 0.0
    %3074 = vmatprep.mubr.f32.mxu0 0.0
    %3075 = vmatmul.mubr.f32.gmra.mrb[0].mxu0 %v2522
    %v3076 = vpop.f32.mrb[0].mxu0
    %v3077 = vadd.f32 %v3008, %v3076
    %v3078 = vpop.f32.mrb[0].mxu0
    %3079 = vmatprep.mubr.f32.mxu0 0.0
    %3080 = vmatmul.mubr.f32.gmra.mrb[0].mxu0 %v2525
    %v3081 = vpop.f32.mrb[0].mxu0
    %v3082 = vadd.f32 %v3008, %v3081
    %v3083 = vpop.f32.mrb[0].mxu0
    %3084 = vmatprep.mubr.f32.mxu0 0.0
    %3085 = vmatmul.mubr.f32.gmra.mrb[0].mxu0 %v2528
    %v3086 = vpop.f32.mrb[0].mxu0
    %v3087 = vadd.f32 %v3008, %v3086
    %v3088 = vpop.f32.mrb[0].mxu0
    %3089 = vdwg.mxu0
    %s3090 = scalar_lea.vmem %s29, 32
    %v3091 = vld [vmem:[%s3090] sm:$0xff]
    %v3092 = vld [vmem:[%s3090 + $0x8] sm:$0xff]
    %v3093 = vld [vmem:[%s3090 + $0x10] sm:$0xff]
    %v3094 = vld [vmem:[%s3090 + $0x18] sm:$0xff]
    %s3095 = scalar_lea.vmem %s35, 1
    %v3096 = vld [vmem:[%s3095] sm:$0x1]
    %v3098 = vlaneseq
    %v3099 = vshrl.u32 %v3098, 7
    %v3100 = vsub.s32 0, %v3099
    %v3101 = vrot.slane %v3096, %v3100
    %3103 = vmatprep.subr.mxu0 0.0
    %3104 = vmatpush1.msra.mxu0 %v3091
    %3105 = vmatprep.subr.mxu0 0.0
    %3106 = vmatpush1.msra.mxu0 %v3092
    %3107 = vmatprep.subr.mxu0 0.0
    %3108 = vmatpush1.msra.mxu0 %v3093
    %3109 = vmatprep.subr.mxu0 0.0
    %3110 = vmatpush1.msra.mxu0 %v3094
    %3111 = vmatprep.subr.mxu0 0.0
    %3112 = vmatpush1.msra.mxu0 0.0
    %3113 = vmatprep.subr.mxu0 0.0
    %3114 = vmatpush1.msra.mxu0 0.0
    %3115 = vmatprep.subr.mxu0 0.0
    %3116 = vmatpush1.msra.mxu0 0.0
    %3117 = vmatprep.subr.mxu0 0.0
    %3118 = vmatpush1.msra.mxu0 0.0
    %3119 = vmatprep.subr.mxu0 0.0
    %3120 = vmatpush1.msra.mxu0 0.0
    %3121 = vmatprep.subr.mxu0 0.0
    %3122 = vmatpush1.msra.mxu0 0.0
    %3123 = vmatprep.subr.mxu0 0.0
    %3124 = vmatpush1.msra.mxu0 0.0
    %3125 = vmatprep.subr.mxu0 0.0
    %3126 = vmatpush1.msra.mxu0 0.0
    %3127 = vmatprep.subr.mxu0 0.0
    %3128 = vmatpush1.msra.mxu0 0.0
    %3129 = vmatprep.subr.mxu0 0.0
    %3130 = vmatpush1.msra.mxu0 0.0
    %3131 = vmatprep.subr.mxu0 0.0
    %3132 = vmatpush1.msra.mxu0 0.0
    %3133 = vmatprep.subr.mxu0 0.0
    %3134 = vmatpush1.msra.mxu0 0.0
    %3135 = vmatprep.subr.mxu0 0.0
    %3136 = vmatpush1.msra.mxu0 0.0
    %3137 = vmatprep.subr.mxu0 0.0
    %3138 = vmatpush1.msra.mxu0 0.0
    %3139 = vmatprep.subr.mxu0 0.0
    %3140 = vmatpush1.msra.mxu0 0.0
    %3141 = vmatprep.subr.mxu0 0.0
    %3142 = vmatpush1.msra.mxu0 0.0
    %3143 = vmatprep.subr.mxu0 0.0
    %3144 = vmatpush1.msra.mxu0 0.0
    %3145 = vmatprep.subr.mxu0 0.0
    %3146 = vmatpush1.msra.mxu0 0.0
    %3147 = vmatprep.subr.mxu0 0.0
    %3148 = vmatpush1.msra.mxu0 0.0
    %3149 = vmatprep.subr.mxu0 0.0
    %3150 = vmatpush1.msra.mxu0 0.0
    %3151 = vmatprep.subr.mxu0 0.0
    %3152 = vmatpush1.msra.mxu0 0.0
    %3153 = vmatprep.subr.mxu0 0.0
    %3154 = vmatpush1.msra.mxu0 0.0
    %3155 = vmatprep.subr.mxu0 0.0
    %3156 = vmatpush1.msra.mxu0 0.0
    %3157 = vmatprep.subr.mxu0 0.0
    %3158 = vmatpush1.msra.mxu0 0.0
    %3159 = vmatprep.subr.mxu0 0.0
    %3160 = vmatpush1.msra.mxu0 0.0
    %3161 = vmatprep.subr.mxu0 0.0
    %3162 = vmatpush1.msra.mxu0 0.0
    %3163 = vmatprep.subr.mxu0 0.0
    %3164 = vmatpush1.msra.mxu0 0.0
    %3165 = vmatprep.subr.mxu0 0.0
    %3166 = vmatpush1.msra.mxu0 0.0
    %3167 = vmatprep.mubr.f32.mxu0 0.0
    %3168 = vmatmul.mubr.f32.gmra.mrb[0].mxu0 %v2622
    %v3169 = vpop.f32.mrb[0].mxu0
    %v3170 = vadd.f32 %v3101, %v3169
    %v3171 = vpop.f32.mrb[0].mxu0
    %3172 = vmatprep.mubr.f32.mxu0 0.0
    %3173 = vmatmul.mubr.f32.gmra.mrb[0].mxu0 %v2625
    %v3174 = vpop.f32.mrb[0].mxu0
    %v3175 = vadd.f32 %v3101, %v3174
    %v3176 = vpop.f32.mrb[0].mxu0
    %3177 = vmatprep.mubr.f32.mxu0 0.0
    %3178 = vmatmul.mubr.f32.gmra.mrb[0].mxu0 %v2628
    %v3179 = vpop.f32.mrb[0].mxu0
    %v3180 = vadd.f32 %v3101, %v3179
    %v3181 = vpop.f32.mrb[0].mxu0
    %3182 = vdwg.mxu0
    %v3184 = vsel %vm453, %v2989, 0
    %v3187 = vsel %vm453, %v2994, 0
    %v3190 = vsel %vm453, %v3077, 0
    %v3193 = vsel %vm453, %v3082, 0
    %v3196 = vsel %vm453, %v3087, 0
    %3198 = vmatprep.subr.mxu0 0.0
    %3199 = vmatpush1.xpose.msra.mxu0 %v3190
    %3200 = vmatprep.subr.mxu0 0.0
    %3201 = vmatpush1.xpose.msra.mxu0 %v3193
    %3202 = vmatprep.subr.mxu0 0.0
    %3203 = vmatpush1.xpose.msra.mxu0 %v3196
    %3204 = vmatprep.subr.mxu0 0.0
    %3205 = vmatpush1.xpose.msra.mxu0 0.0
    %3206 = vmatprep.subr.mxu0 0.0
    %3207 = vmatpush1.xpose.msra.mxu0 0.0
    %3208 = vmatprep.subr.mxu0 0.0
    %3209 = vmatpush1.xpose.msra.mxu0 0.0
    %3210 = vmatprep.subr.mxu0 0.0
    %3211 = vmatpush1.xpose.msra.mxu0 0.0
    %3212 = vmatprep.subr.mxu0 0.0
    %3213 = vmatpush1.xpose.msra.mxu0 0.0
    %3214 = vmatprep.subr.mxu0 0.0
    %3215 = vmatpush1.xpose.msra.mxu0 0.0
    %3216 = vmatprep.subr.mxu0 0.0
    %3217 = vmatpush1.xpose.msra.mxu0 0.0
    %3218 = vmatprep.subr.mxu0 0.0
    %3219 = vmatpush1.xpose.msra.mxu0 0.0
    %3220 = vmatprep.subr.mxu0 0.0
    %3221 = vmatpush1.xpose.msra.mxu0 0.0
    %3222 = vmatprep.subr.mxu0 0.0
    %3223 = vmatpush1.xpose.msra.mxu0 0.0
    %3224 = vmatprep.subr.mxu0 0.0
    %3225 = vmatpush1.xpose.msra.mxu0 0.0
    %3226 = vmatprep.subr.mxu0 0.0
    %3227 = vmatpush1.xpose.msra.mxu0 0.0
    %3228 = vmatprep.subr.mxu0 0.0
    %3229 = vmatpush1.xpose.msra.mxu0 0.0
    %3230 = vmatprep.subr.mxu0 0.0
    %3231 = vmatpush1.xpose.msra.mxu0 0.0
    %3232 = vmatprep.subr.mxu0 0.0
    %3233 = vmatpush1.xpose.msra.mxu0 0.0
    %3234 = vmatprep.subr.mxu0 0.0
    %3235 = vmatpush1.xpose.msra.mxu0 0.0
    %3236 = vmatprep.subr.mxu0 0.0
    %3237 = vmatpush1.xpose.msra.mxu0 0.0
    %3238 = vmatprep.subr.mxu0 0.0
    %3239 = vmatpush1.xpose.msra.mxu0 0.0
    %3240 = vmatprep.subr.mxu0 0.0
    %3241 = vmatpush1.xpose.msra.mxu0 0.0
    %3242 = vmatprep.subr.mxu0 0.0
    %3243 = vmatpush1.xpose.msra.mxu0 0.0
    %3244 = vmatprep.subr.mxu0 0.0
    %3245 = vmatpush1.xpose.msra.mxu0 0.0
    %3246 = vmatprep.subr.mxu0 0.0
    %3247 = vmatpush1.xpose.msra.mxu0 0.0
    %3248 = vmatprep.subr.mxu0 0.0
    %3249 = vmatpush1.xpose.msra.mxu0 0.0
    %3250 = vmatprep.subr.mxu0 0.0
    %3251 = vmatpush1.xpose.msra.mxu0 0.0
    %3252 = vmatprep.subr.mxu0 0.0
    %3253 = vmatpush1.xpose.msra.mxu0 0.0
    %3254 = vmatprep.subr.mxu0 0.0
    %3255 = vmatpush1.xpose.msra.mxu0 0.0
    %3256 = vmatprep.subr.mxu0 0.0
    %3257 = vmatpush1.xpose.msra.mxu0 0.0
    %3258 = vmatprep.subr.mxu0 0.0
    %3259 = vmatpush1.xpose.msra.mxu0 0.0
    %3260 = vmatprep.subr.mxu0 0.0
    %3261 = vmatpush1.xpose.msra.mxu0 0.0
    %3262 = vmatprep.mubr.f32.mxu0 0.0
    %3263 = vmatmul.mubr.f32.gmra.mrb[0].mxu0 %v3184
    %v3264 = vpop.f32.mrb[0].mxu0
    %v3265 = vadd.f32 0.0, %v3264
    %v3266 = vpop.f32.mrb[0].mxu0
    %3267 = vmatprep.mubr.f32.mxu0 0.0
    %3268 = vmatmul.mubr.f32.gmra.mrb[0].mxu0 %v3187
    %v3269 = vpop.f32.mrb[0].mxu0
    %v3270 = vadd.f32 0.0, %v3269
    %v3271 = vpop.f32.mrb[0].mxu0
    %3272 = vdwg.mxu0
    %v3273 = vmul.f32 %v3265, 0.35355338
    %v3274 = vmul.f32 %v3270, 0.35355338
    %v3275 = vsel %vm178, %v3273, -inf
    %v3276 = vsel %vm179, %v3274, -inf
    %v3277 = vsel %vm2804, %v3275, -inf
    %3278 = vmax.xlane.f32.xlu0 %v3277
    %v3279 = vpop.xlane.xlu0 %3278
    %v3280 = vsel %vm2804, %v3276, -inf
    %3281 = vmax.xlane.f32.xlu0 %v3280
    %v3282 = vpop.xlane.xlu0 %3281
    %v3283 = vsub.f32 %v3275, %v3279
    %v3284 = vsub.f32 %v3276, %v3282
    %v3285 = vmul.f32 %v3283, 1.442695
    %v3286 = vpow.pop %v3285
    %v3287 = vmul.f32 %v3284, 1.442695
    %v3288 = vpow.pop %v3287
    %v3289 = vsel %vm2804, %v3286, 0.0
    %3290 = vadd.xlane.f32.xlu0 %v3289
    %v3291 = vpop.xlane.xlu0 %3290
    %v3292 = vsel %vm2804, %v3288, 0.0
    %3293 = vadd.xlane.f32.xlu0 %v3292
    %v3294 = vpop.xlane.xlu0 %3293
    %v3295 = vrcp.pop %v3291
    %v3296 = vrcp.pop %v3294
    %v3297 = vmul.f32 %v3286, %v3295
    %v3298 = vmul.f32 %v3288, %v3296
    %v3300 = vsel %vm2804, %v3297, 0
    %v3303 = vsel %vm2804, %v3298, 0
    %3305 = vmatprep.subr.mxu0 0.0
    %3306 = vmatpush1.msra.mxu0 %v3170
    %3307 = vmatprep.subr.mxu0 0.0
    %3308 = vmatpush1.msra.mxu0 %v3175
    %3309 = vmatprep.subr.mxu0 0.0
    %3310 = vmatpush1.msra.mxu0 %v3180
    %3311 = vmatprep.subr.mxu0 0.0
    %3312 = vmatpush1.msra.mxu0 0.0
    %3313 = vmatprep.subr.mxu0 0.0
    %3314 = vmatpush1.msra.mxu0 0.0
    %3315 = vmatprep.subr.mxu0 0.0
    %3316 = vmatpush1.msra.mxu0 0.0
    %3317 = vmatprep.subr.mxu0 0.0
    %3318 = vmatpush1.msra.mxu0 0.0
    %3319 = vmatprep.subr.mxu0 0.0
    %3320 = vmatpush1.msra.mxu0 0.0
    %3321 = vmatprep.subr.mxu0 0.0
    %3322 = vmatpush1.msra.mxu0 0.0
    %3323 = vmatprep.subr.mxu0 0.0
    %3324 = vmatpush1.msra.mxu0 0.0
    %3325 = vmatprep.subr.mxu0 0.0
    %3326 = vmatpush1.msra.mxu0 0.0
    %3327 = vmatprep.subr.mxu0 0.0
    %3328 = vmatpush1.msra.mxu0 0.0
    %3329 = vmatprep.subr.mxu0 0.0
    %3330 = vmatpush1.msra.mxu0 0.0
    %3331 = vmatprep.subr.mxu0 0.0
    %3332 = vmatpush1.msra.mxu0 0.0
    %3333 = vmatprep.subr.mxu0 0.0
    %3334 = vmatpush1.msra.mxu0 0.0
    %3335 = vmatprep.subr.mxu0 0.0
    %3336 = vmatpush1.msra.mxu0 0.0
    %3337 = vmatprep.subr.mxu0 0.0
    %3338 = vmatpush1.msra.mxu0 0.0
    %3339 = vmatprep.subr.mxu0 0.0
    %3340 = vmatpush1.msra.mxu0 0.0
    %3341 = vmatprep.subr.mxu0 0.0
    %3342 = vmatpush1.msra.mxu0 0.0
    %3343 = vmatprep.subr.mxu0 0.0
    %3344 = vmatpush1.msra.mxu0 0.0
    %3345 = vmatprep.subr.mxu0 0.0
    %3346 = vmatpush1.msra.mxu0 0.0
    %3347 = vmatprep.subr.mxu0 0.0
    %3348 = vmatpush1.msra.mxu0 0.0
    %3349 = vmatprep.subr.mxu0 0.0
    %3350 = vmatpush1.msra.mxu0 0.0
    %3351 = vmatprep.subr.mxu0 0.0
    %3352 = vmatpush1.msra.mxu0 0.0
    %3353 = vmatprep.subr.mxu0 0.0
    %3354 = vmatpush1.msra.mxu0 0.0
    %3355 = vmatprep.subr.mxu0 0.0
    %3356 = vmatpush1.msra.mxu0 0.0
    %3357 = vmatprep.subr.mxu0 0.0
    %3358 = vmatpush1.msra.mxu0 0.0
    %3359 = vmatprep.subr.mxu0 0.0
    %3360 = vmatpush1.msra.mxu0 0.0
    %3361 = vmatprep.subr.mxu0 0.0
    %3362 = vmatpush1.msra.mxu0 0.0
    %3363 = vmatprep.subr.mxu0 0.0
    %3364 = vmatpush1.msra.mxu0 0.0
    %3365 = vmatprep.subr.mxu0 0.0
    %3366 = vmatpush1.msra.mxu0 0.0
    %3367 = vmatprep.subr.mxu0 0.0
    %3368 = vmatpush1.msra.mxu0 0.0
    %3369 = vmatprep.mubr.f32.mxu0 0.0
    %3370 = vmatmul.mubr.f32.gmra.mrb[0].mxu0 %v3300
    %v3371 = vpop.f32.mrb[0].mxu0
    %v3372 = vadd.f32 0.0, %v3371
    %v3373 = vpop.f32.mrb[0].mxu0
    %3374 = vmatprep.mubr.f32.mxu0 0.0
    %3375 = vmatmul.mubr.f32.gmra.mrb[0].mxu0 %v3303
    %v3376 = vpop.f32.mrb[0].mxu0
    %v3377 = vadd.f32 0.0, %v3376
    %v3378 = vpop.f32.mrb[0].mxu0
    %3379 = vdwg.mxu0
    %s3380 = scalar_lea.vmem %s37, 8
    %v3381 = vld [vmem:[%s3380] sm:$0xff]
    %v3383 = vsel %vm453, %v3372, 0
    %v3386 = vsel %vm453, %v3377, 0
    %3388 = vmatprep.subr.mxu0 0.0
    %3389 = vmatpush1.msra.mxu0 %v3381
    %3390 = vmatprep.subr.mxu0 0.0
    %3391 = vmatpush1.msra.mxu0 0.0
    %3392 = vmatprep.subr.mxu0 0.0
    %3393 = vmatpush1.msra.mxu0 0.0
    %3394 = vmatprep.subr.mxu0 0.0
    %3395 = vmatpush1.msra.mxu0 0.0
    %3396 = vmatprep.subr.mxu0 0.0
    %3397 = vmatpush1.msra.mxu0 0.0
    %3398 = vmatprep.subr.mxu0 0.0
    %3399 = vmatpush1.msra.mxu0 0.0
    %3400 = vmatprep.subr.mxu0 0.0
    %3401 = vmatpush1.msra.mxu0 0.0
    %3402 = vmatprep.subr.mxu0 0.0
    %3403 = vmatpush1.msra.mxu0 0.0
    %3404 = vmatprep.subr.mxu0 0.0
    %3405 = vmatpush1.msra.mxu0 0.0
    %3406 = vmatprep.subr.mxu0 0.0
    %3407 = vmatpush1.msra.mxu0 0.0
    %3408 = vmatprep.subr.mxu0 0.0
    %3409 = vmatpush1.msra.mxu0 0.0
    %3410 = vmatprep.subr.mxu0 0.0
    %3411 = vmatpush1.msra.mxu0 0.0
    %3412 = vmatprep.subr.mxu0 0.0
    %3413 = vmatpush1.msra.mxu0 0.0
    %3414 = vmatprep.subr.mxu0 0.0
    %3415 = vmatpush1.msra.mxu0 0.0
    %3416 = vmatprep.subr.mxu0 0.0
    %3417 = vmatpush1.msra.mxu0 0.0
    %3418 = vmatprep.subr.mxu0 0.0
    %3419 = vmatpush1.msra.mxu0 0.0
    %3420 = vmatprep.subr.mxu0 0.0
    %3421 = vmatpush1.msra.mxu0 0.0
    %3422 = vmatprep.subr.mxu0 0.0
    %3423 = vmatpush1.msra.mxu0 0.0
    %3424 = vmatprep.subr.mxu0 0.0
    %3425 = vmatpush1.msra.mxu0 0.0
    %3426 = vmatprep.subr.mxu0 0.0
    %3427 = vmatpush1.msra.mxu0 0.0
    %3428 = vmatprep.subr.mxu0 0.0
    %3429 = vmatpush1.msra.mxu0 0.0
    %3430 = vmatprep.subr.mxu0 0.0
    %3431 = vmatpush1.msra.mxu0 0.0
    %3432 = vmatprep.subr.mxu0 0.0
    %3433 = vmatpush1.msra.mxu0 0.0
    %3434 = vmatprep.subr.mxu0 0.0
    %3435 = vmatpush1.msra.mxu0 0.0
    %3436 = vmatprep.subr.mxu0 0.0
    %3437 = vmatpush1.msra.mxu0 0.0
    %3438 = vmatprep.subr.mxu0 0.0
    %3439 = vmatpush1.msra.mxu0 0.0
    %3440 = vmatprep.subr.mxu0 0.0
    %3441 = vmatpush1.msra.mxu0 0.0
    %3442 = vmatprep.subr.mxu0 0.0
    %3443 = vmatpush1.msra.mxu0 0.0
    %3444 = vmatprep.subr.mxu0 0.0
    %3445 = vmatpush1.msra.mxu0 0.0
    %3446 = vmatprep.subr.mxu0 0.0
    %3447 = vmatpush1.msra.mxu0 0.0
    %3448 = vmatprep.subr.mxu0 0.0
    %3449 = vmatpush1.msra.mxu0 0.0
    %3450 = vmatprep.subr.mxu0 0.0
    %3451 = vmatpush1.msra.mxu0 0.0
    %3452 = vmatprep.mubr.f32.mxu0 0.0
    %3453 = vmatmul.mubr.f32.gmra.mrb[0].mxu0 %v3383
    %v3454 = vpop.f32.mrb[0].mxu0
    %v3455 = vadd.f32 0.0, %v3454
    %v3456 = vpop.f32.mrb[0].mxu0
    %3457 = vmatprep.mubr.f32.mxu0 0.0
    %3458 = vmatmul.mubr.f32.gmra.mrb[0].mxu0 %v3386
    %v3459 = vpop.f32.mrb[0].mxu0
    %v3460 = vadd.f32 0.0, %v3459
    %v3461 = vpop.f32.mrb[0].mxu0
    %3462 = vdwg.mxu0
    %v3464 = vsel %vm453, %v2900, 0
    %v3467 = vsel %vm453, %v2905, 0
    %3469 = vmatprep.subr.mxu0 0.0
    %3470 = vmatpush1.msra.mxu0 %v2908
    %3471 = vmatprep.subr.mxu0 0.0
    %3472 = vmatpush1.msra.mxu0 0.0
    %3473 = vmatprep.subr.mxu0 0.0
    %3474 = vmatpush1.msra.mxu0 0.0
    %3475 = vmatprep.subr.mxu0 0.0
    %3476 = vmatpush1.msra.mxu0 0.0
    %3477 = vmatprep.subr.mxu0 0.0
    %3478 = vmatpush1.msra.mxu0 0.0
    %3479 = vmatprep.subr.mxu0 0.0
    %3480 = vmatpush1.msra.mxu0 0.0
    %3481 = vmatprep.subr.mxu0 0.0
    %3482 = vmatpush1.msra.mxu0 0.0
    %3483 = vmatprep.subr.mxu0 0.0
    %3484 = vmatpush1.msra.mxu0 0.0
    %3485 = vmatprep.subr.mxu0 0.0
    %3486 = vmatpush1.msra.mxu0 0.0
    %3487 = vmatprep.subr.mxu0 0.0
    %3488 = vmatpush1.msra.mxu0 0.0
    %3489 = vmatprep.subr.mxu0 0.0
    %3490 = vmatpush1.msra.mxu0 0.0
    %3491 = vmatprep.subr.mxu0 0.0
    %3492 = vmatpush1.msra.mxu0 0.0
    %3493 = vmatprep.subr.mxu0 0.0
    %3494 = vmatpush1.msra.mxu0 0.0
    %3495 = vmatprep.subr.mxu0 0.0
    %3496 = vmatpush1.msra.mxu0 0.0
    %3497 = vmatprep.subr.mxu0 0.0
    %3498 = vmatpush1.msra.mxu0 0.0
    %3499 = vmatprep.subr.mxu0 0.0
    %3500 = vmatpush1.msra.mxu0 0.0
    %3501 = vmatprep.subr.mxu0 0.0
    %3502 = vmatpush1.msra.mxu0 0.0
    %3503 = vmatprep.subr.mxu0 0.0
    %3504 = vmatpush1.msra.mxu0 0.0
    %3505 = vmatprep.subr.mxu0 0.0
    %3506 = vmatpush1.msra.mxu0 0.0
    %3507 = vmatprep.subr.mxu0 0.0
    %3508 = vmatpush1.msra.mxu0 0.0
    %3509 = vmatprep.subr.mxu0 0.0
    %3510 = vmatpush1.msra.mxu0 0.0
    %3511 = vmatprep.subr.mxu0 0.0
    %3512 = vmatpush1.msra.mxu0 0.0
    %3513 = vmatprep.subr.mxu0 0.0
    %3514 = vmatpush1.msra.mxu0 0.0
    %3515 = vmatprep.subr.mxu0 0.0
    %3516 = vmatpush1.msra.mxu0 0.0
    %3517 = vmatprep.subr.mxu0 0.0
    %3518 = vmatpush1.msra.mxu0 0.0
    %3519 = vmatprep.subr.mxu0 0.0
    %3520 = vmatpush1.msra.mxu0 0.0
    %3521 = vmatprep.subr.mxu0 0.0
    %3522 = vmatpush1.msra.mxu0 0.0
    %3523 = vmatprep.subr.mxu0 0.0
    %3524 = vmatpush1.msra.mxu0 0.0
    %3525 = vmatprep.subr.mxu0 0.0
    %3526 = vmatpush1.msra.mxu0 0.0
    %3527 = vmatprep.subr.mxu0 0.0
    %3528 = vmatpush1.msra.mxu0 0.0
    %3529 = vmatprep.subr.mxu0 0.0
    %3530 = vmatpush1.msra.mxu0 0.0
    %3531 = vmatprep.subr.mxu0 0.0
    %3532 = vmatpush1.msra.mxu0 0.0
    %3533 = vmatprep.mubr.f32.mxu0 0.0
    %3534 = vmatmul.mubr.f32.gmra.mrb[0].mxu0 %v3464
    %v3535 = vpop.f32.mrb[0].mxu0
    %v3536 = vadd.f32 %v3455, %v3535
    %v3537 = vpop.f32.mrb[0].mxu0
    %3538 = vmatprep.mubr.f32.mxu0 0.0
    %3539 = vmatmul.mubr.f32.gmra.mrb[0].mxu0 %v3467
    %v3540 = vpop.f32.mrb[0].mxu0
    %v3541 = vadd.f32 %v3460, %v3540
    %v3542 = vpop.f32.mrb[0].mxu0
    %3543 = vdwg.mxu0
    %s3544 = scalar_lea.vmem %s25, 64
    %v3545 = vld [vmem:[%s3544] sm:$0xff]
    %v3546 = vld [vmem:[%s3544 + $0x8] sm:$0xff]
    %v3547 = vld [vmem:[%s3544 + $0x10] sm:$0xff]
    %v3548 = vld [vmem:[%s3544 + $0x18] sm:$0xff]
    %s3549 = scalar_lea.vmem %s31, 2
    %v3550 = vld [vmem:[%s3549] sm:$0x1]
    %v3552 = vlaneseq
    %v3553 = vshrl.u32 %v3552, 7
    %v3554 = vsub.s32 0, %v3553
    %v3555 = vrot.slane %v3550, %v3554
    %3557 = vmatprep.subr.mxu0 0.0
    %3558 = vmatpush1.msra.mxu0 %v3545
    %3559 = vmatprep.subr.mxu0 0.0
    %3560 = vmatpush1.msra.mxu0 %v3546
    %3561 = vmatprep.subr.mxu0 0.0
    %3562 = vmatpush1.msra.mxu0 %v3547
    %3563 = vmatprep.subr.mxu0 0.0
    %3564 = vmatpush1.msra.mxu0 %v3548
    %3565 = vmatprep.subr.mxu0 0.0
    %3566 = vmatpush1.msra.mxu0 0.0
    %3567 = vmatprep.subr.mxu0 0.0
    %3568 = vmatpush1.msra.mxu0 0.0
    %3569 = vmatprep.subr.mxu0 0.0
    %3570 = vmatpush1.msra.mxu0 0.0
    %3571 = vmatprep.subr.mxu0 0.0
    %3572 = vmatpush1.msra.mxu0 0.0
    %3573 = vmatprep.subr.mxu0 0.0
    %3574 = vmatpush1.msra.mxu0 0.0
    %3575 = vmatprep.subr.mxu0 0.0
    %3576 = vmatpush1.msra.mxu0 0.0
    %3577 = vmatprep.subr.mxu0 0.0
    %3578 = vmatpush1.msra.mxu0 0.0
    %3579 = vmatprep.subr.mxu0 0.0
    %3580 = vmatpush1.msra.mxu0 0.0
    %3581 = vmatprep.subr.mxu0 0.0
    %3582 = vmatpush1.msra.mxu0 0.0
    %3583 = vmatprep.subr.mxu0 0.0
    %3584 = vmatpush1.msra.mxu0 0.0
    %3585 = vmatprep.subr.mxu0 0.0
    %3586 = vmatpush1.msra.mxu0 0.0
    %3587 = vmatprep.subr.mxu0 0.0
    %3588 = vmatpush1.msra.mxu0 0.0
    %3589 = vmatprep.subr.mxu0 0.0
    %3590 = vmatpush1.msra.mxu0 0.0
    %3591 = vmatprep.subr.mxu0 0.0
    %3592 = vmatpush1.msra.mxu0 0.0
    %3593 = vmatprep.subr.mxu0 0.0
    %3594 = vmatpush1.msra.mxu0 0.0
    %3595 = vmatprep.subr.mxu0 0.0
    %3596 = vmatpush1.msra.mxu0 0.0
    %3597 = vmatprep.subr.mxu0 0.0
    %3598 = vmatpush1.msra.mxu0 0.0
    %3599 = vmatprep.subr.mxu0 0.0
    %3600 = vmatpush1.msra.mxu0 0.0
    %3601 = vmatprep.subr.mxu0 0.0
    %3602 = vmatpush1.msra.mxu0 0.0
    %3603 = vmatprep.subr.mxu0 0.0
    %3604 = vmatpush1.msra.mxu0 0.0
    %3605 = vmatprep.subr.mxu0 0.0
    %3606 = vmatpush1.msra.mxu0 0.0
    %3607 = vmatprep.subr.mxu0 0.0
    %3608 = vmatpush1.msra.mxu0 0.0
    %3609 = vmatprep.subr.mxu0 0.0
    %3610 = vmatpush1.msra.mxu0 0.0
    %3611 = vmatprep.subr.mxu0 0.0
    %3612 = vmatpush1.msra.mxu0 0.0
    %3613 = vmatprep.subr.mxu0 0.0
    %3614 = vmatpush1.msra.mxu0 0.0
    %3615 = vmatprep.subr.mxu0 0.0
    %3616 = vmatpush1.msra.mxu0 0.0
    %3617 = vmatprep.subr.mxu0 0.0
    %3618 = vmatpush1.msra.mxu0 0.0
    %3619 = vmatprep.subr.mxu0 0.0
    %3620 = vmatpush1.msra.mxu0 0.0
    %3621 = vmatprep.mubr.f32.mxu0 0.0
    %3622 = vmatmul.mubr.f32.gmra.mrb[0].mxu0 %v2430
    %v3623 = vpop.f32.mrb[0].mxu0
    %v3624 = vadd.f32 %v3555, %v3623
    %v3625 = vpop.f32.mrb[0].mxu0
    %3626 = vmatprep.mubr.f32.mxu0 0.0
    %3627 = vmatmul.mubr.f32.gmra.mrb[0].mxu0 %v2433
    %v3628 = vpop.f32.mrb[0].mxu0
    %v3629 = vadd.f32 %v3555, %v3628
    %v3630 = vpop.f32.mrb[0].mxu0
    %3631 = vdwg.mxu0
    %s3632 = scalar_lea.vmem %s27, 64
    %v3633 = vld [vmem:[%s3632] sm:$0xff]
    %v3634 = vld [vmem:[%s3632 + $0x8] sm:$0xff]
    %v3635 = vld [vmem:[%s3632 + $0x10] sm:$0xff]
    %v3636 = vld [vmem:[%s3632 + $0x18] sm:$0xff]
    %s3637 = scalar_lea.vmem %s33, 2
    %v3638 = vld [vmem:[%s3637] sm:$0x1]
    %v3640 = vlaneseq
    %v3641 = vshrl.u32 %v3640, 7
    %v3642 = vsub.s32 0, %v3641
    %v3643 = vrot.slane %v3638, %v3642
    %3645 = vmatprep.subr.mxu0 0.0
    %3646 = vmatpush1.msra.mxu0 %v3633
    %3647 = vmatprep.subr.mxu0 0.0
    %3648 = vmatpush1.msra.mxu0 %v3634
    %3649 = vmatprep.subr.mxu0 0.0
    %3650 = vmatpush1.msra.mxu0 %v3635
    %3651 = vmatprep.subr.mxu0 0.0
    %3652 = vmatpush1.msra.mxu0 %v3636
    %3653 = vmatprep.subr.mxu0 0.0
    %3654 = vmatpush1.msra.mxu0 0.0
    %3655 = vmatprep.subr.mxu0 0.0
    %3656 = vmatpush1.msra.mxu0 0.0
    %3657 = vmatprep.subr.mxu0 0.0
    %3658 = vmatpush1.msra.mxu0 0.0
    %3659 = vmatprep.subr.mxu0 0.0
    %3660 = vmatpush1.msra.mxu0 0.0
    %3661 = vmatprep.subr.mxu0 0.0
    %3662 = vmatpush1.msra.mxu0 0.0
    %3663 = vmatprep.subr.mxu0 0.0
    %3664 = vmatpush1.msra.mxu0 0.0
    %3665 = vmatprep.subr.mxu0 0.0
    %3666 = vmatpush1.msra.mxu0 0.0
    %3667 = vmatprep.subr.mxu0 0.0
    %3668 = vmatpush1.msra.mxu0 0.0
    %3669 = vmatprep.subr.mxu0 0.0
    %3670 = vmatpush1.msra.mxu0 0.0
    %3671 = vmatprep.subr.mxu0 0.0
    %3672 = vmatpush1.msra.mxu0 0.0
    %3673 = vmatprep.subr.mxu0 0.0
    %3674 = vmatpush1.msra.mxu0 0.0
    %3675 = vmatprep.subr.mxu0 0.0
    %3676 = vmatpush1.msra.mxu0 0.0
    %3677 = vmatprep.subr.mxu0 0.0
    %3678 = vmatpush1.msra.mxu0 0.0
    %3679 = vmatprep.subr.mxu0 0.0
    %3680 = vmatpush1.msra.mxu0 0.0
    %3681 = vmatprep.subr.mxu0 0.0
    %3682 = vmatpush1.msra.mxu0 0.0
    %3683 = vmatprep.subr.mxu0 0.0
    %3684 = vmatpush1.msra.mxu0 0.0
    %3685 = vmatprep.subr.mxu0 0.0
    %3686 = vmatpush1.msra.mxu0 0.0
    %3687 = vmatprep.subr.mxu0 0.0
    %3688 = vmatpush1.msra.mxu0 0.0
    %3689 = vmatprep.subr.mxu0 0.0
    %3690 = vmatpush1.msra.mxu0 0.0
    %3691 = vmatprep.subr.mxu0 0.0
    %3692 = vmatpush1.msra.mxu0 0.0
    %3693 = vmatprep.subr.mxu0 0.0
    %3694 = vmatpush1.msra.mxu0 0.0
    %3695 = vmatprep.subr.mxu0 0.0
    %3696 = vmatpush1.msra.mxu0 0.0
    %3697 = vmatprep.subr.mxu0 0.0
    %3698 = vmatpush1.msra.mxu0 0.0
    %3699 = vmatprep.subr.mxu0 0.0
    %3700 = vmatpush1.msra.mxu0 0.0
    %3701 = vmatprep.subr.mxu0 0.0
    %3702 = vmatpush1.msra.mxu0 0.0
    %3703 = vmatprep.subr.mxu0 0.0
    %3704 = vmatpush1.msra.mxu0 0.0
    %3705 = vmatprep.subr.mxu0 0.0
    %3706 = vmatpush1.msra.mxu0 0.0
    %3707 = vmatprep.subr.mxu0 0.0
    %3708 = vmatpush1.msra.mxu0 0.0
    %3709 = vmatprep.mubr.f32.mxu0 0.0
    %3710 = vmatmul.mubr.f32.gmra.mrb[0].mxu0 %v2522
    %v3711 = vpop.f32.mrb[0].mxu0
    %v3712 = vadd.f32 %v3643, %v3711
    %v3713 = vpop.f32.mrb[0].mxu0
    %3714 = vmatprep.mubr.f32.mxu0 0.0
    %3715 = vmatmul.mubr.f32.gmra.mrb[0].mxu0 %v2525
    %v3716 = vpop.f32.mrb[0].mxu0
    %v3717 = vadd.f32 %v3643, %v3716
    %v3718 = vpop.f32.mrb[0].mxu0
    %3719 = vmatprep.mubr.f32.mxu0 0.0
    %3720 = vmatmul.mubr.f32.gmra.mrb[0].mxu0 %v2528
    %v3721 = vpop.f32.mrb[0].mxu0
    %v3722 = vadd.f32 %v3643, %v3721
    %v3723 = vpop.f32.mrb[0].mxu0
    %3724 = vdwg.mxu0
    %s3725 = scalar_lea.vmem %s29, 64
    %v3726 = vld [vmem:[%s3725] sm:$0xff]
    %v3727 = vld [vmem:[%s3725 + $0x8] sm:$0xff]
    %v3728 = vld [vmem:[%s3725 + $0x10] sm:$0xff]
    %v3729 = vld [vmem:[%s3725 + $0x18] sm:$0xff]
    %s3730 = scalar_lea.vmem %s35, 2
    %v3731 = vld [vmem:[%s3730] sm:$0x1]
    %v3733 = vlaneseq
    %v3734 = vshrl.u32 %v3733, 7
    %v3735 = vsub.s32 0, %v3734
    %v3736 = vrot.slane %v3731, %v3735
    %3738 = vmatprep.subr.mxu0 0.0
    %3739 = vmatpush1.msra.mxu0 %v3726
    %3740 = vmatprep.subr.mxu0 0.0
    %3741 = vmatpush1.msra.mxu0 %v3727
    %3742 = vmatprep.subr.mxu0 0.0
    %3743 = vmatpush1.msra.mxu0 %v3728
    %3744 = vmatprep.subr.mxu0 0.0
    %3745 = vmatpush1.msra.mxu0 %v3729
    %3746 = vmatprep.subr.mxu0 0.0
    %3747 = vmatpush1.msra.mxu0 0.0
    %3748 = vmatprep.subr.mxu0 0.0
    %3749 = vmatpush1.msra.mxu0 0.0
    %3750 = vmatprep.subr.mxu0 0.0
    %3751 = vmatpush1.msra.mxu0 0.0
    %3752 = vmatprep.subr.mxu0 0.0
    %3753 = vmatpush1.msra.mxu0 0.0
    %3754 = vmatprep.subr.mxu0 0.0
    %3755 = vmatpush1.msra.mxu0 0.0
    %3756 = vmatprep.subr.mxu0 0.0
    %3757 = vmatpush1.msra.mxu0 0.0
    %3758 = vmatprep.subr.mxu0 0.0
    %3759 = vmatpush1.msra.mxu0 0.0
    %3760 = vmatprep.subr.mxu0 0.0
    %3761 = vmatpush1.msra.mxu0 0.0
    %3762 = vmatprep.subr.mxu0 0.0
    %3763 = vmatpush1.msra.mxu0 0.0
    %3764 = vmatprep.subr.mxu0 0.0
    %3765 = vmatpush1.msra.mxu0 0.0
    %3766 = vmatprep.subr.mxu0 0.0
    %3767 = vmatpush1.msra.mxu0 0.0
    %3768 = vmatprep.subr.mxu0 0.0
    %3769 = vmatpush1.msra.mxu0 0.0
    %3770 = vmatprep.subr.mxu0 0.0
    %3771 = vmatpush1.msra.mxu0 0.0
    %3772 = vmatprep.subr.mxu0 0.0
    %3773 = vmatpush1.msra.mxu0 0.0
    %3774 = vmatprep.subr.mxu0 0.0
    %3775 = vmatpush1.msra.mxu0 0.0
    %3776 = vmatprep.subr.mxu0 0.0
    %3777 = vmatpush1.msra.mxu0 0.0
    %3778 = vmatprep.subr.mxu0 0.0
    %3779 = vmatpush1.msra.mxu0 0.0
    %3780 = vmatprep.subr.mxu0 0.0
    %3781 = vmatpush1.msra.mxu0 0.0
    %3782 = vmatprep.subr.mxu0 0.0
    %3783 = vmatpush1.msra.mxu0 0.0
    %3784 = vmatprep.subr.mxu0 0.0
    %3785 = vmatpush1.msra.mxu0 0.0
    %3786 = vmatprep.subr.mxu0 0.0
    %3787 = vmatpush1.msra.mxu0 0.0
    %3788 = vmatprep.subr.mxu0 0.0
    %3789 = vmatpush1.msra.mxu0 0.0
    %3790 = vmatprep.subr.mxu0 0.0
    %3791 = vmatpush1.msra.mxu0 0.0
    %3792 = vmatprep.subr.mxu0 0.0
    %3793 = vmatpush1.msra.mxu0 0.0
    %3794 = vmatprep.subr.mxu0 0.0
    %3795 = vmatpush1.msra.mxu0 0.0
    %3796 = vmatprep.subr.mxu0 0.0
    %3797 = vmatpush1.msra.mxu0 0.0
    %3798 = vmatprep.subr.mxu0 0.0
    %3799 = vmatpush1.msra.mxu0 0.0
    %3800 = vmatprep.subr.mxu0 0.0
    %3801 = vmatpush1.msra.mxu0 0.0
    %3802 = vmatprep.mubr.f32.mxu0 0.0
    %3803 = vmatmul.mubr.f32.gmra.mrb[0].mxu0 %v2622
    %v3804 = vpop.f32.mrb[0].mxu0
    %v3805 = vadd.f32 %v3736, %v3804
    %v3806 = vpop.f32.mrb[0].mxu0
    %3807 = vmatprep.mubr.f32.mxu0 0.0
    %3808 = vmatmul.mubr.f32.gmra.mrb[0].mxu0 %v2625
    %v3809 = vpop.f32.mrb[0].mxu0
    %v3810 = vadd.f32 %v3736, %v3809
    %v3811 = vpop.f32.mrb[0].mxu0
    %3812 = vmatprep.mubr.f32.mxu0 0.0
    %3813 = vmatmul.mubr.f32.gmra.mrb[0].mxu0 %v2628
    %v3814 = vpop.f32.mrb[0].mxu0
    %v3815 = vadd.f32 %v3736, %v3814
    %v3816 = vpop.f32.mrb[0].mxu0
    %3817 = vdwg.mxu0
    %v3819 = vsel %vm453, %v3624, 0
    %v3822 = vsel %vm453, %v3629, 0
    %v3825 = vsel %vm453, %v3712, 0
    %v3828 = vsel %vm453, %v3717, 0
    %v3831 = vsel %vm453, %v3722, 0
    %3833 = vmatprep.subr.mxu0 0.0
    %3834 = vmatpush1.xpose.msra.mxu0 %v3825
    %3835 = vmatprep.subr.mxu0 0.0
    %3836 = vmatpush1.xpose.msra.mxu0 %v3828
    %3837 = vmatprep.subr.mxu0 0.0
    %3838 = vmatpush1.xpose.msra.mxu0 %v3831
    %3839 = vmatprep.subr.mxu0 0.0
    %3840 = vmatpush1.xpose.msra.mxu0 0.0
    %3841 = vmatprep.subr.mxu0 0.0
    %3842 = vmatpush1.xpose.msra.mxu0 0.0
    %3843 = vmatprep.subr.mxu0 0.0
    %3844 = vmatpush1.xpose.msra.mxu0 0.0
    %3845 = vmatprep.subr.mxu0 0.0
    %3846 = vmatpush1.xpose.msra.mxu0 0.0
    %3847 = vmatprep.subr.mxu0 0.0
    %3848 = vmatpush1.xpose.msra.mxu0 0.0
    %3849 = vmatprep.subr.mxu0 0.0
    %3850 = vmatpush1.xpose.msra.mxu0 0.0
    %3851 = vmatprep.subr.mxu0 0.0
    %3852 = vmatpush1.xpose.msra.mxu0 0.0
    %3853 = vmatprep.subr.mxu0 0.0
    %3854 = vmatpush1.xpose.msra.mxu0 0.0
    %3855 = vmatprep.subr.mxu0 0.0
    %3856 = vmatpush1.xpose.msra.mxu0 0.0
    %3857 = vmatprep.subr.mxu0 0.0
    %3858 = vmatpush1.xpose.msra.mxu0 0.0
    %3859 = vmatprep.subr.mxu0 0.0
    %3860 = vmatpush1.xpose.msra.mxu0 0.0
    %3861 = vmatprep.subr.mxu0 0.0
    %3862 = vmatpush1.xpose.msra.mxu0 0.0
    %3863 = vmatprep.subr.mxu0 0.0
    %3864 = vmatpush1.xpose.msra.mxu0 0.0
    %3865 = vmatprep.subr.mxu0 0.0
    %3866 = vmatpush1.xpose.msra.mxu0 0.0
    %3867 = vmatprep.subr.mxu0 0.0
    %3868 = vmatpush1.xpose.msra.mxu0 0.0
    %3869 = vmatprep.subr.mxu0 0.0
    %3870 = vmatpush1.xpose.msra.mxu0 0.0
    %3871 = vmatprep.subr.mxu0 0.0
    %3872 = vmatpush1.xpose.msra.mxu0 0.0
    %3873 = vmatprep.subr.mxu0 0.0
    %3874 = vmatpush1.xpose.msra.mxu0 0.0
    %3875 = vmatprep.subr.mxu0 0.0
    %3876 = vmatpush1.xpose.msra.mxu0 0.0
    %3877 = vmatprep.subr.mxu0 0.0
    %3878 = vmatpush1.xpose.msra.mxu0 0.0
    %3879 = vmatprep.subr.mxu0 0.0
    %3880 = vmatpush1.xpose.msra.mxu0 0.0
    %3881 = vmatprep.subr.mxu0 0.0
    %3882 = vmatpush1.xpose.msra.mxu0 0.0
    %3883 = vmatprep.subr.mxu0 0.0
    %3884 = vmatpush1.xpose.msra.mxu0 0.0
    %3885 = vmatprep.subr.mxu0 0.0
    %3886 = vmatpush1.xpose.msra.mxu0 0.0
    %3887 = vmatprep.subr.mxu0 0.0
    %3888 = vmatpush1.xpose.msra.mxu0 0.0
    %3889 = vmatprep.subr.mxu0 0.0
    %3890 = vmatpush1.xpose.msra.mxu0 0.0
    %3891 = vmatprep.subr.mxu0 0.0
    %3892 = vmatpush1.xpose.msra.mxu0 0.0
    %3893 = vmatprep.subr.mxu0 0.0
    %3894 = vmatpush1.xpose.msra.mxu0 0.0
    %3895 = vmatprep.subr.mxu0 0.0
    %3896 = vmatpush1.xpose.msra.mxu0 0.0
    %3897 = vmatprep.mubr.f32.mxu0 0.0
    %3898 = vmatmul.mubr.f32.gmra.mrb[0].mxu0 %v3819
    %v3899 = vpop.f32.mrb[0].mxu0
    %v3900 = vadd.f32 0.0, %v3899
    %v3901 = vpop.f32.mrb[0].mxu0
    %3902 = vmatprep.mubr.f32.mxu0 0.0
    %3903 = vmatmul.mubr.f32.gmra.mrb[0].mxu0 %v3822
    %v3904 = vpop.f32.mrb[0].mxu0
    %v3905 = vadd.f32 0.0, %v3904
    %v3906 = vpop.f32.mrb[0].mxu0
    %3907 = vdwg.mxu0
    %v3908 = vmul.f32 %v3900, 0.35355338
    %v3909 = vmul.f32 %v3905, 0.35355338
    %v3910 = vsel %vm178, %v3908, -inf
    %v3911 = vsel %vm179, %v3909, -inf
    %v3912 = vsel %vm2804, %v3910, -inf
    %3913 = vmax.xlane.f32.xlu0 %v3912
    %v3914 = vpop.xlane.xlu0 %3913
    %v3915 = vsel %vm2804, %v3911, -inf
    %3916 = vmax.xlane.f32.xlu0 %v3915
    %v3917 = vpop.xlane.xlu0 %3916
    %v3918 = vsub.f32 %v3910, %v3914
    %v3919 = vsub.f32 %v3911, %v3917
    %v3920 = vmul.f32 %v3918, 1.442695
    %v3921 = vpow.pop %v3920
    %v3922 = vmul.f32 %v3919, 1.442695
    %v3923 = vpow.pop %v3922
    %v3924 = vsel %vm2804, %v3921, 0.0
    %3925 = vadd.xlane.f32.xlu0 %v3924
    %v3926 = vpop.xlane.xlu0 %3925
    %v3927 = vsel %vm2804, %v3923, 0.0
    %3928 = vadd.xlane.f32.xlu0 %v3927
    %v3929 = vpop.xlane.xlu0 %3928
    %v3930 = vrcp.pop %v3926
    %v3931 = vrcp.pop %v3929
    %v3932 = vmul.f32 %v3921, %v3930
    %v3933 = vmul.f32 %v3923, %v3931
    %v3935 = vsel %vm2804, %v3932, 0
    %v3938 = vsel %vm2804, %v3933, 0
    %3940 = vmatprep.subr.mxu0 0.0
    %3941 = vmatpush1.msra.mxu0 %v3805
    %3942 = vmatprep.subr.mxu0 0.0
    %3943 = vmatpush1.msra.mxu0 %v3810
    %3944 = vmatprep.subr.mxu0 0.0
    %3945 = vmatpush1.msra.mxu0 %v3815
    %3946 = vmatprep.subr.mxu0 0.0
    %3947 = vmatpush1.msra.mxu0 0.0
    %3948 = vmatprep.subr.mxu0 0.0
    %3949 = vmatpush1.msra.mxu0 0.0
    %3950 = vmatprep.subr.mxu0 0.0
    %3951 = vmatpush1.msra.mxu0 0.0
    %3952 = vmatprep.subr.mxu0 0.0
    %3953 = vmatpush1.msra.mxu0 0.0
    %3954 = vmatprep.subr.mxu0 0.0
    %3955 = vmatpush1.msra.mxu0 0.0
    %3956 = vmatprep.subr.mxu0 0.0
    %3957 = vmatpush1.msra.mxu0 0.0
    %3958 = vmatprep.subr.mxu0 0.0
    %3959 = vmatpush1.msra.mxu0 0.0
    %3960 = vmatprep.subr.mxu0 0.0
    %3961 = vmatpush1.msra.mxu0 0.0
    %3962 = vmatprep.subr.mxu0 0.0
    %3963 = vmatpush1.msra.mxu0 0.0
    %3964 = vmatprep.subr.mxu0 0.0
    %3965 = vmatpush1.msra.mxu0 0.0
    %3966 = vmatprep.subr.mxu0 0.0
    %3967 = vmatpush1.msra.mxu0 0.0
    %3968 = vmatprep.subr.mxu0 0.0
    %3969 = vmatpush1.msra.mxu0 0.0
    %3970 = vmatprep.subr.mxu0 0.0
    %3971 = vmatpush1.msra.mxu0 0.0
    %3972 = vmatprep.subr.mxu0 0.0
    %3973 = vmatpush1.msra.mxu0 0.0
    %3974 = vmatprep.subr.mxu0 0.0
    %3975 = vmatpush1.msra.mxu0 0.0
    %3976 = vmatprep.subr.mxu0 0.0
    %3977 = vmatpush1.msra.mxu0 0.0
    %3978 = vmatprep.subr.mxu0 0.0
    %3979 = vmatpush1.msra.mxu0 0.0
    %3980 = vmatprep.subr.mxu0 0.0
    %3981 = vmatpush1.msra.mxu0 0.0
    %3982 = vmatprep.subr.mxu0 0.0
    %3983 = vmatpush1.msra.mxu0 0.0
    %3984 = vmatprep.subr.mxu0 0.0
    %3985 = vmatpush1.msra.mxu0 0.0
    %3986 = vmatprep.subr.mxu0 0.0
    %3987 = vmatpush1.msra.mxu0 0.0
    %3988 = vmatprep.subr.mxu0 0.0
    %3989 = vmatpush1.msra.mxu0 0.0
    %3990 = vmatprep.subr.mxu0 0.0
    %3991 = vmatpush1.msra.mxu0 0.0
    %3992 = vmatprep.subr.mxu0 0.0
    %3993 = vmatpush1.msra.mxu0 0.0
    %3994 = vmatprep.subr.mxu0 0.0
    %3995 = vmatpush1.msra.mxu0 0.0
    %3996 = vmatprep.subr.mxu0 0.0
    %3997 = vmatpush1.msra.mxu0 0.0
    %3998 = vmatprep.subr.mxu0 0.0
    %3999 = vmatpush1.msra.mxu0 0.0
    %4000 = vmatprep.subr.mxu0 0.0
    %4001 = vmatpush1.msra.mxu0 0.0
    %4002 = vmatprep.subr.mxu0 0.0
    %4003 = vmatpush1.msra.mxu0 0.0
    %4004 = vmatprep.mubr.f32.mxu0 0.0
    %4005 = vmatmul.mubr.f32.gmra.mrb[0].mxu0 %v3935
    %v4006 = vpop.f32.mrb[0].mxu0
    %v4007 = vadd.f32 0.0, %v4006
    %v4008 = vpop.f32.mrb[0].mxu0
    %4009 = vmatprep.mubr.f32.mxu0 0.0
    %4010 = vmatmul.mubr.f32.gmra.mrb[0].mxu0 %v3938
    %v4011 = vpop.f32.mrb[0].mxu0
    %v4012 = vadd.f32 0.0, %v4011
    %v4013 = vpop.f32.mrb[0].mxu0
    %4014 = vdwg.mxu0
    %s4015 = scalar_lea.vmem %s37, 16
    %v4016 = vld [vmem:[%s4015] sm:$0xff]
    %v4018 = vsel %vm453, %v4007, 0
    %v4021 = vsel %vm453, %v4012, 0
    %4023 = vmatprep.subr.mxu0 0.0
    %4024 = vmatpush1.msra.mxu0 %v4016
    %4025 = vmatprep.subr.mxu0 0.0
    %4026 = vmatpush1.msra.mxu0 0.0
    %4027 = vmatprep.subr.mxu0 0.0
    %4028 = vmatpush1.msra.mxu0 0.0
    %4029 = vmatprep.subr.mxu0 0.0
    %4030 = vmatpush1.msra.mxu0 0.0
    %4031 = vmatprep.subr.mxu0 0.0
    %4032 = vmatpush1.msra.mxu0 0.0
    %4033 = vmatprep.subr.mxu0 0.0
    %4034 = vmatpush1.msra.mxu0 0.0
    %4035 = vmatprep.subr.mxu0 0.0
    %4036 = vmatpush1.msra.mxu0 0.0
    %4037 = vmatprep.subr.mxu0 0.0
    %4038 = vmatpush1.msra.mxu0 0.0
    %4039 = vmatprep.subr.mxu0 0.0
    %4040 = vmatpush1.msra.mxu0 0.0
    %4041 = vmatprep.subr.mxu0 0.0
    %4042 = vmatpush1.msra.mxu0 0.0
    %4043 = vmatprep.subr.mxu0 0.0
    %4044 = vmatpush1.msra.mxu0 0.0
    %4045 = vmatprep.subr.mxu0 0.0
    %4046 = vmatpush1.msra.mxu0 0.0
    %4047 = vmatprep.subr.mxu0 0.0
    %4048 = vmatpush1.msra.mxu0 0.0
    %4049 = vmatprep.subr.mxu0 0.0
    %4050 = vmatpush1.msra.mxu0 0.0
    %4051 = vmatprep.subr.mxu0 0.0
    %4052 = vmatpush1.msra.mxu0 0.0
    %4053 = vmatprep.subr.mxu0 0.0
    %4054 = vmatpush1.msra.mxu0 0.0
    %4055 = vmatprep.subr.mxu0 0.0
    %4056 = vmatpush1.msra.mxu0 0.0
    %4057 = vmatprep.subr.mxu0 0.0
    %4058 = vmatpush1.msra.mxu0 0.0
    %4059 = vmatprep.subr.mxu0 0.0
    %4060 = vmatpush1.msra.mxu0 0.0
    %4061 = vmatprep.subr.mxu0 0.0
    %4062 = vmatpush1.msra.mxu0 0.0
    %4063 = vmatprep.subr.mxu0 0.0
    %4064 = vmatpush1.msra.mxu0 0.0
    %4065 = vmatprep.subr.mxu0 0.0
    %4066 = vmatpush1.msra.mxu0 0.0
    %4067 = vmatprep.subr.mxu0 0.0
    %4068 = vmatpush1.msra.mxu0 0.0
    %4069 = vmatprep.subr.mxu0 0.0
    %4070 = vmatpush1.msra.mxu0 0.0
    %4071 = vmatprep.subr.mxu0 0.0
    %4072 = vmatpush1.msra.mxu0 0.0
    %4073 = vmatprep.subr.mxu0 0.0
    %4074 = vmatpush1.msra.mxu0 0.0
    %4075 = vmatprep.subr.mxu0 0.0
    %4076 = vmatpush1.msra.mxu0 0.0
    %4077 = vmatprep.subr.mxu0 0.0
    %4078 = vmatpush1.msra.mxu0 0.0
    %4079 = vmatprep.subr.mxu0 0.0
    %4080 = vmatpush1.msra.mxu0 0.0
    %4081 = vmatprep.subr.mxu0 0.0
    %4082 = vmatpush1.msra.mxu0 0.0
    %4083 = vmatprep.subr.mxu0 0.0
    %4084 = vmatpush1.msra.mxu0 0.0
    %4085 = vmatprep.subr.mxu0 0.0
    %4086 = vmatpush1.msra.mxu0 0.0
    %4087 = vmatprep.mubr.f32.mxu0 0.0
    %4088 = vmatmul.mubr.f32.gmra.mrb[0].mxu0 %v4018
    %v4089 = vpop.f32.mrb[0].mxu0
    %v4090 = vadd.f32 0.0, %v4089
    %v4091 = vpop.f32.mrb[0].mxu0
    %4092 = vmatprep.mubr.f32.mxu0 0.0
    %4093 = vmatmul.mubr.f32.gmra.mrb[0].mxu0 %v4021
    %v4094 = vpop.f32.mrb[0].mxu0
    %v4095 = vadd.f32 0.0, %v4094
    %v4096 = vpop.f32.mrb[0].mxu0
    %4097 = vdwg.mxu0
    %v4098 = vadd.f32 %v3536, %v4090
    %v4099 = vadd.f32 %v3541, %v4095
    %s4100 = scalar_lea.vmem %s25, 96
    %v4101 = vld [vmem:[%s4100] sm:$0xff]
    %v4102 = vld [vmem:[%s4100 + $0x8] sm:$0xff]
    %v4103 = vld [vmem:[%s4100 + $0x10] sm:$0xff]
    %v4104 = vld [vmem:[%s4100 + $0x18] sm:$0xff]
    %s4105 = scalar_lea.vmem %s31, 3
    %v4106 = vld [vmem:[%s4105] sm:$0x1]
    %v4108 = vlaneseq
    %v4109 = vshrl.u32 %v4108, 7
    %v4110 = vsub.s32 0, %v4109
    %v4111 = vrot.slane %v4106, %v4110
    %4113 = vmatprep.subr.mxu0 0.0
    %4114 = vmatpush1.msra.mxu0 %v4101
    %4115 = vmatprep.subr.mxu0 0.0
    %4116 = vmatpush1.msra.mxu0 %v4102
    %4117 = vmatprep.subr.mxu0 0.0
    %4118 = vmatpush1.msra.mxu0 %v4103
    %4119 = vmatprep.subr.mxu0 0.0
    %4120 = vmatpush1.msra.mxu0 %v4104
    %4121 = vmatprep.subr.mxu0 0.0
    %4122 = vmatpush1.msra.mxu0 0.0
    %4123 = vmatprep.subr.mxu0 0.0
    %4124 = vmatpush1.msra.mxu0 0.0
    %4125 = vmatprep.subr.mxu0 0.0
    %4126 = vmatpush1.msra.mxu0 0.0
    %4127 = vmatprep.subr.mxu0 0.0
    %4128 = vmatpush1.msra.mxu0 0.0
    %4129 = vmatprep.subr.mxu0 0.0
    %4130 = vmatpush1.msra.mxu0 0.0
    %4131 = vmatprep.subr.mxu0 0.0
    %4132 = vmatpush1.msra.mxu0 0.0
    %4133 = vmatprep.subr.mxu0 0.0
    %4134 = vmatpush1.msra.mxu0 0.0
    %4135 = vmatprep.subr.mxu0 0.0
    %4136 = vmatpush1.msra.mxu0 0.0
    %4137 = vmatprep.subr.mxu0 0.0
    %4138 = vmatpush1.msra.mxu0 0.0
    %4139 = vmatprep.subr.mxu0 0.0
    %4140 = vmatpush1.msra.mxu0 0.0
    %4141 = vmatprep.subr.mxu0 0.0
    %4142 = vmatpush1.msra.mxu0 0.0
    %4143 = vmatprep.subr.mxu0 0.0
    %4144 = vmatpush1.msra.mxu0 0.0
    %4145 = vmatprep.subr.mxu0 0.0
    %4146 = vmatpush1.msra.mxu0 0.0
    %4147 = vmatprep.subr.mxu0 0.0
    %4148 = vmatpush1.msra.mxu0 0.0
    %4149 = vmatprep.subr.mxu0 0.0
    %4150 = vmatpush1.msra.mxu0 0.0
    %4151 = vmatprep.subr.mxu0 0.0
    %4152 = vmatpush1.msra.mxu0 0.0
    %4153 = vmatprep.subr.mxu0 0.0
    %4154 = vmatpush1.msra.mxu0 0.0
    %4155 = vmatprep.subr.mxu0 0.0
    %4156 = vmatpush1.msra.mxu0 0.0
    %4157 = vmatprep.subr.mxu0 0.0
    %4158 = vmatpush1.msra.mxu0 0.0
    %4159 = vmatprep.subr.mxu0 0.0
    %4160 = vmatpush1.msra.mxu0 0.0
    %4161 = vmatprep.subr.mxu0 0.0
    %4162 = vmatpush1.msra.mxu0 0.0
    %4163 = vmatprep.subr.mxu0 0.0
    %4164 = vmatpush1.msra.mxu0 0.0
    %4165 = vmatprep.subr.mxu0 0.0
    %4166 = vmatpush1.msra.mxu0 0.0
    %4167 = vmatprep.subr.mxu0 0.0
    %4168 = vmatpush1.msra.mxu0 0.0
    %4169 = vmatprep.subr.mxu0 0.0
    %4170 = vmatpush1.msra.mxu0 0.0
    %4171 = vmatprep.subr.mxu0 0.0
    %4172 = vmatpush1.msra.mxu0 0.0
    %4173 = vmatprep.subr.mxu0 0.0
    %4174 = vmatpush1.msra.mxu0 0.0
    %4175 = vmatprep.subr.mxu0 0.0
    %4176 = vmatpush1.msra.mxu0 0.0
    %4177 = vmatprep.mubr.f32.mxu0 0.0
    %4178 = vmatmul.mubr.f32.gmra.mrb[0].mxu0 %v2430
    %v4179 = vpop.f32.mrb[0].mxu0
    %v4180 = vadd.f32 %v4111, %v4179
    %v4181 = vpop.f32.mrb[0].mxu0
    %4182 = vmatprep.mubr.f32.mxu0 0.0
    %4183 = vmatmul.mubr.f32.gmra.mrb[0].mxu0 %v2433
    %v4184 = vpop.f32.mrb[0].mxu0
    %v4185 = vadd.f32 %v4111, %v4184
    %v4186 = vpop.f32.mrb[0].mxu0
    %4187 = vdwg.mxu0
    %s4188 = scalar_lea.vmem %s27, 96
    %v4189 = vld [vmem:[%s4188] sm:$0xff]
    %v4190 = vld [vmem:[%s4188 + $0x8] sm:$0xff]
    %v4191 = vld [vmem:[%s4188 + $0x10] sm:$0xff]
    %v4192 = vld [vmem:[%s4188 + $0x18] sm:$0xff]
    %s4193 = scalar_lea.vmem %s33, 3
    %v4194 = vld [vmem:[%s4193] sm:$0x1]
    %v4196 = vlaneseq
    %v4197 = vshrl.u32 %v4196, 7
    %v4198 = vsub.s32 0, %v4197
    %v4199 = vrot.slane %v4194, %v4198
    %4201 = vmatprep.subr.mxu0 0.0
    %4202 = vmatpush1.msra.mxu0 %v4189
    %4203 = vmatprep.subr.mxu0 0.0
    %4204 = vmatpush1.msra.mxu0 %v4190
    %4205 = vmatprep.subr.mxu0 0.0
    %4206 = vmatpush1.msra.mxu0 %v4191
    %4207 = vmatprep.subr.mxu0 0.0
    %4208 = vmatpush1.msra.mxu0 %v4192
    %4209 = vmatprep.subr.mxu0 0.0
    %4210 = vmatpush1.msra.mxu0 0.0
    %4211 = vmatprep.subr.mxu0 0.0
    %4212 = vmatpush1.msra.mxu0 0.0
    %4213 = vmatprep.subr.mxu0 0.0
    %4214 = vmatpush1.msra.mxu0 0.0
    %4215 = vmatprep.subr.mxu0 0.0
    %4216 = vmatpush1.msra.mxu0 0.0
    %4217 = vmatprep.subr.mxu0 0.0
    %4218 = vmatpush1.msra.mxu0 0.0
    %4219 = vmatprep.subr.mxu0 0.0
    %4220 = vmatpush1.msra.mxu0 0.0
    %4221 = vmatprep.subr.mxu0 0.0
    %4222 = vmatpush1.msra.mxu0 0.0
    %4223 = vmatprep.subr.mxu0 0.0
    %4224 = vmatpush1.msra.mxu0 0.0
    %4225 = vmatprep.subr.mxu0 0.0
    %4226 = vmatpush1.msra.mxu0 0.0
    %4227 = vmatprep.subr.mxu0 0.0
    %4228 = vmatpush1.msra.mxu0 0.0
    %4229 = vmatprep.subr.mxu0 0.0
    %4230 = vmatpush1.msra.mxu0 0.0
    %4231 = vmatprep.subr.mxu0 0.0
    %4232 = vmatpush1.msra.mxu0 0.0
    %4233 = vmatprep.subr.mxu0 0.0
    %4234 = vmatpush1.msra.mxu0 0.0
    %4235 = vmatprep.subr.mxu0 0.0
    %4236 = vmatpush1.msra.mxu0 0.0
    %4237 = vmatprep.subr.mxu0 0.0
    %4238 = vmatpush1.msra.mxu0 0.0
    %4239 = vmatprep.subr.mxu0 0.0
    %4240 = vmatpush1.msra.mxu0 0.0
    %4241 = vmatprep.subr.mxu0 0.0
    %4242 = vmatpush1.msra.mxu0 0.0
    %4243 = vmatprep.subr.mxu0 0.0
    %4244 = vmatpush1.msra.mxu0 0.0
    %4245 = vmatprep.subr.mxu0 0.0
    %4246 = vmatpush1.msra.mxu0 0.0
    %4247 = vmatprep.subr.mxu0 0.0
    %4248 = vmatpush1.msra.mxu0 0.0
    %4249 = vmatprep.subr.mxu0 0.0
    %4250 = vmatpush1.msra.mxu0 0.0
    %4251 = vmatprep.subr.mxu0 0.0
    %4252 = vmatpush1.msra.mxu0 0.0
    %4253 = vmatprep.subr.mxu0 0.0
    %4254 = vmatpush1.msra.mxu0 0.0
    %4255 = vmatprep.subr.mxu0 0.0
    %4256 = vmatpush1.msra.mxu0 0.0
    %4257 = vmatprep.subr.mxu0 0.0
    %4258 = vmatpush1.msra.mxu0 0.0
    %4259 = vmatprep.subr.mxu0 0.0
    %4260 = vmatpush1.msra.mxu0 0.0
    %4261 = vmatprep.subr.mxu0 0.0
    %4262 = vmatpush1.msra.mxu0 0.0
    %4263 = vmatprep.subr.mxu0 0.0
    %4264 = vmatpush1.msra.mxu0 0.0
    %4265 = vmatprep.mubr.f32.mxu0 0.0
    %4266 = vmatmul.mubr.f32.gmra.mrb[0].mxu0 %v2522
    %v4267 = vpop.f32.mrb[0].mxu0
    %v4268 = vadd.f32 %v4199, %v4267
    %v4269 = vpop.f32.mrb[0].mxu0
    %4270 = vmatprep.mubr.f32.mxu0 0.0
    %4271 = vmatmul.mubr.f32.gmra.mrb[0].mxu0 %v2525
    %v4272 = vpop.f32.mrb[0].mxu0
    %v4273 = vadd.f32 %v4199, %v4272
    %v4274 = vpop.f32.mrb[0].mxu0
    %4275 = vmatprep.mubr.f32.mxu0 0.0
    %4276 = vmatmul.mubr.f32.gmra.mrb[0].mxu0 %v2528
    %v4277 = vpop.f32.mrb[0].mxu0
    %v4278 = vadd.f32 %v4199, %v4277
    %v4279 = vpop.f32.mrb[0].mxu0
    %4280 = vdwg.mxu0
    %s4281 = scalar_lea.vmem %s29, 96
    %v4282 = vld [vmem:[%s4281] sm:$0xff]
    %v4283 = vld [vmem:[%s4281 + $0x8] sm:$0xff]
    %v4284 = vld [vmem:[%s4281 + $0x10] sm:$0xff]
    %v4285 = vld [vmem:[%s4281 + $0x18] sm:$0xff]
    %s4286 = scalar_lea.vmem %s35, 3
    %v4287 = vld [vmem:[%s4286] sm:$0x1]
    %v4289 = vlaneseq
    %v4290 = vshrl.u32 %v4289, 7
    %v4291 = vsub.s32 0, %v4290
    %v4292 = vrot.slane %v4287, %v4291
    %4294 = vmatprep.subr.mxu0 0.0
    %4295 = vmatpush1.msra.mxu0 %v4282
    %4296 = vmatprep.subr.mxu0 0.0
    %4297 = vmatpush1.msra.mxu0 %v4283
    %4298 = vmatprep.subr.mxu0 0.0
    %4299 = vmatpush1.msra.mxu0 %v4284
    %4300 = vmatprep.subr.mxu0 0.0
    %4301 = vmatpush1.msra.mxu0 %v4285
    %4302 = vmatprep.subr.mxu0 0.0
    %4303 = vmatpush1.msra.mxu0 0.0
    %4304 = vmatprep.subr.mxu0 0.0
    %4305 = vmatpush1.msra.mxu0 0.0
    %4306 = vmatprep.subr.mxu0 0.0
    %4307 = vmatpush1.msra.mxu0 0.0
    %4308 = vmatprep.subr.mxu0 0.0
    %4309 = vmatpush1.msra.mxu0 0.0
    %4310 = vmatprep.subr.mxu0 0.0
    %4311 = vmatpush1.msra.mxu0 0.0
    %4312 = vmatprep.subr.mxu0 0.0
    %4313 = vmatpush1.msra.mxu0 0.0
    %4314 = vmatprep.subr.mxu0 0.0
    %4315 = vmatpush1.msra.mxu0 0.0
    %4316 = vmatprep.subr.mxu0 0.0
    %4317 = vmatpush1.msra.mxu0 0.0
    %4318 = vmatprep.subr.mxu0 0.0
    %4319 = vmatpush1.msra.mxu0 0.0
    %4320 = vmatprep.subr.mxu0 0.0
    %4321 = vmatpush1.msra.mxu0 0.0
    %4322 = vmatprep.subr.mxu0 0.0
    %4323 = vmatpush1.msra.mxu0 0.0
    %4324 = vmatprep.subr.mxu0 0.0
    %4325 = vmatpush1.msra.mxu0 0.0
    %4326 = vmatprep.subr.mxu0 0.0
    %4327 = vmatpush1.msra.mxu0 0.0
    %4328 = vmatprep.subr.mxu0 0.0
    %4329 = vmatpush1.msra.mxu0 0.0
    %4330 = vmatprep.subr.mxu0 0.0
    %4331 = vmatpush1.msra.mxu0 0.0
    %4332 = vmatprep.subr.mxu0 0.0
    %4333 = vmatpush1.msra.mxu0 0.0
    %4334 = vmatprep.subr.mxu0 0.0
    %4335 = vmatpush1.msra.mxu0 0.0
    %4336 = vmatprep.subr.mxu0 0.0
    %4337 = vmatpush1.msra.mxu0 0.0
    %4338 = vmatprep.subr.mxu0 0.0
    %4339 = vmatpush1.msra.mxu0 0.0
    %4340 = vmatprep.subr.mxu0 0.0
    %4341 = vmatpush1.msra.mxu0 0.0
    %4342 = vmatprep.subr.mxu0 0.0
    %4343 = vmatpush1.msra.mxu0 0.0
    %4344 = vmatprep.subr.mxu0 0.0
    %4345 = vmatpush1.msra.mxu0 0.0
    %4346 = vmatprep.subr.mxu0 0.0
    %4347 = vmatpush1.msra.mxu0 0.0
    %4348 = vmatprep.subr.mxu0 0.0
    %4349 = vmatpush1.msra.mxu0 0.0
    %4350 = vmatprep.subr.mxu0 0.0
    %4351 = vmatpush1.msra.mxu0 0.0
    %4352 = vmatprep.subr.mxu0 0.0
    %4353 = vmatpush1.msra.mxu0 0.0
    %4354 = vmatprep.subr.mxu0 0.0
    %4355 = vmatpush1.msra.mxu0 0.0
    %4356 = vmatprep.subr.mxu0 0.0
    %4357 = vmatpush1.msra.mxu0 0.0
    %4358 = vmatprep.mubr.f32.mxu0 0.0
    %4359 = vmatmul.mubr.f32.gmra.mrb[0].mxu0 %v2622
    %v4360 = vpop.f32.mrb[0].mxu0
    %v4361 = vadd.f32 %v4292, %v4360
    %v4362 = vpop.f32.mrb[0].mxu0
    %4363 = vmatprep.mubr.f32.mxu0 0.0
    %4364 = vmatmul.mubr.f32.gmra.mrb[0].mxu0 %v2625
    %v4365 = vpop.f32.mrb[0].mxu0
    %v4366 = vadd.f32 %v4292, %v4365
    %v4367 = vpop.f32.mrb[0].mxu0
    %4368 = vmatprep.mubr.f32.mxu0 0.0
    %4369 = vmatmul.mubr.f32.gmra.mrb[0].mxu0 %v2628
    %v4370 = vpop.f32.mrb[0].mxu0
    %v4371 = vadd.f32 %v4292, %v4370
    %v4372 = vpop.f32.mrb[0].mxu0
    %4373 = vdwg.mxu0
    %v4375 = vsel %vm453, %v4180, 0
    %v4378 = vsel %vm453, %v4185, 0
    %v4381 = vsel %vm453, %v4268, 0
    %v4384 = vsel %vm453, %v4273, 0
    %v4387 = vsel %vm453, %v4278, 0
    %4389 = vmatprep.subr.mxu0 0.0
    %4390 = vmatpush1.xpose.msra.mxu0 %v4381
    %4391 = vmatprep.subr.mxu0 0.0
    %4392 = vmatpush1.xpose.msra.mxu0 %v4384
    %4393 = vmatprep.subr.mxu0 0.0
    %4394 = vmatpush1.xpose.msra.mxu0 %v4387
    %4395 = vmatprep.subr.mxu0 0.0
    %4396 = vmatpush1.xpose.msra.mxu0 0.0
    %4397 = vmatprep.subr.mxu0 0.0
    %4398 = vmatpush1.xpose.msra.mxu0 0.0
    %4399 = vmatprep.subr.mxu0 0.0
    %4400 = vmatpush1.xpose.msra.mxu0 0.0
    %4401 = vmatprep.subr.mxu0 0.0
    %4402 = vmatpush1.xpose.msra.mxu0 0.0
    %4403 = vmatprep.subr.mxu0 0.0
    %4404 = vmatpush1.xpose.msra.mxu0 0.0
    %4405 = vmatprep.subr.mxu0 0.0
    %4406 = vmatpush1.xpose.msra.mxu0 0.0
    %4407 = vmatprep.subr.mxu0 0.0
    %4408 = vmatpush1.xpose.msra.mxu0 0.0
    %4409 = vmatprep.subr.mxu0 0.0
    %4410 = vmatpush1.xpose.msra.mxu0 0.0
    %4411 = vmatprep.subr.mxu0 0.0
    %4412 = vmatpush1.xpose.msra.mxu0 0.0
    %4413 = vmatprep.subr.mxu0 0.0
    %4414 = vmatpush1.xpose.msra.mxu0 0.0
    %4415 = vmatprep.subr.mxu0 0.0
    %4416 = vmatpush1.xpose.msra.mxu0 0.0
    %4417 = vmatprep.subr.mxu0 0.0
    %4418 = vmatpush1.xpose.msra.mxu0 0.0
    %4419 = vmatprep.subr.mxu0 0.0
    %4420 = vmatpush1.xpose.msra.mxu0 0.0
    %4421 = vmatprep.subr.mxu0 0.0
    %4422 = vmatpush1.xpose.msra.mxu0 0.0
    %4423 = vmatprep.subr.mxu0 0.0
    %4424 = vmatpush1.xpose.msra.mxu0 0.0
    %4425 = vmatprep.subr.mxu0 0.0
    %4426 = vmatpush1.xpose.msra.mxu0 0.0
    %4427 = vmatprep.subr.mxu0 0.0
    %4428 = vmatpush1.xpose.msra.mxu0 0.0
    %4429 = vmatprep.subr.mxu0 0.0
    %4430 = vmatpush1.xpose.msra.mxu0 0.0
    %4431 = vmatprep.subr.mxu0 0.0
    %4432 = vmatpush1.xpose.msra.mxu0 0.0
    %4433 = vmatprep.subr.mxu0 0.0
    %4434 = vmatpush1.xpose.msra.mxu0 0.0
    %4435 = vmatprep.subr.mxu0 0.0
    %4436 = vmatpush1.xpose.msra.mxu0 0.0
    %4437 = vmatprep.subr.mxu0 0.0
    %4438 = vmatpush1.xpose.msra.mxu0 0.0
    %4439 = vmatprep.subr.mxu0 0.0
    %4440 = vmatpush1.xpose.msra.mxu0 0.0
    %4441 = vmatprep.subr.mxu0 0.0
    %4442 = vmatpush1.xpose.msra.mxu0 0.0
    %4443 = vmatprep.subr.mxu0 0.0
    %4444 = vmatpush1.xpose.msra.mxu0 0.0
    %4445 = vmatprep.subr.mxu0 0.0
    %4446 = vmatpush1.xpose.msra.mxu0 0.0
    %4447 = vmatprep.subr.mxu0 0.0
    %4448 = vmatpush1.xpose.msra.mxu0 0.0
    %4449 = vmatprep.subr.mxu0 0.0
    %4450 = vmatpush1.xpose.msra.mxu0 0.0
    %4451 = vmatprep.subr.mxu0 0.0
    %4452 = vmatpush1.xpose.msra.mxu0 0.0
    %4453 = vmatprep.mubr.f32.mxu0 0.0
    %4454 = vmatmul.mubr.f32.gmra.mrb[0].mxu0 %v4375
    %v4455 = vpop.f32.mrb[0].mxu0
    %v4456 = vadd.f32 0.0, %v4455
    %v4457 = vpop.f32.mrb[0].mxu0
    %4458 = vmatprep.mubr.f32.mxu0 0.0
    %4459 = vmatmul.mubr.f32.gmra.mrb[0].mxu0 %v4378
    %v4460 = vpop.f32.mrb[0].mxu0
    %v4461 = vadd.f32 0.0, %v4460
    %v4462 = vpop.f32.mrb[0].mxu0
    %4463 = vdwg.mxu0
    %v4464 = vmul.f32 %v4456, 0.35355338
    %v4465 = vmul.f32 %v4461, 0.35355338
    %v4466 = vsel %vm178, %v4464, -inf
    %v4467 = vsel %vm179, %v4465, -inf
    %v4468 = vsel %vm2804, %v4466, -inf
    %4469 = vmax.xlane.f32.xlu0 %v4468
    %v4470 = vpop.xlane.xlu0 %4469
    %v4471 = vsel %vm2804, %v4467, -inf
    %4472 = vmax.xlane.f32.xlu0 %v4471
    %v4473 = vpop.xlane.xlu0 %4472
    %v4474 = vsub.f32 %v4466, %v4470
    %v4475 = vsub.f32 %v4467, %v4473
    %v4476 = vmul.f32 %v4474, 1.442695
    %v4477 = vpow.pop %v4476
    %v4478 = vmul.f32 %v4475, 1.442695
    %v4479 = vpow.pop %v4478
    %v4480 = vsel %vm2804, %v4477, 0.0
    %4481 = vadd.xlane.f32.xlu0 %v4480
    %v4482 = vpop.xlane.xlu0 %4481
    %v4483 = vsel %vm2804, %v4479, 0.0
    %4484 = vadd.xlane.f32.xlu0 %v4483
    %v4485 = vpop.xlane.xlu0 %4484
    %v4486 = vrcp.pop %v4482
    %v4487 = vrcp.pop %v4485
    %v4488 = vmul.f32 %v4477, %v4486
    %v4489 = vmul.f32 %v4479, %v4487
    %v4491 = vsel %vm2804, %v4488, 0
    %v4494 = vsel %vm2804, %v4489, 0
    %4496 = vmatprep.subr.mxu0 0.0
    %4497 = vmatpush1.msra.mxu0 %v4361
    %4498 = vmatprep.subr.mxu0 0.0
    %4499 = vmatpush1.msra.mxu0 %v4366
    %4500 = vmatprep.subr.mxu0 0.0
    %4501 = vmatpush1.msra.mxu0 %v4371
    %4502 = vmatprep.subr.mxu0 0.0
    %4503 = vmatpush1.msra.mxu0 0.0
    %4504 = vmatprep.subr.mxu0 0.0
    %4505 = vmatpush1.msra.mxu0 0.0
    %4506 = vmatprep.subr.mxu0 0.0
    %4507 = vmatpush1.msra.mxu0 0.0
    %4508 = vmatprep.subr.mxu0 0.0
    %4509 = vmatpush1.msra.mxu0 0.0
    %4510 = vmatprep.subr.mxu0 0.0
    %4511 = vmatpush1.msra.mxu0 0.0
    %4512 = vmatprep.subr.mxu0 0.0
    %4513 = vmatpush1.msra.mxu0 0.0
    %4514 = vmatprep.subr.mxu0 0.0
    %4515 = vmatpush1.msra.mxu0 0.0
    %4516 = vmatprep.subr.mxu0 0.0
    %4517 = vmatpush1.msra.mxu0 0.0
    %4518 = vmatprep.subr.mxu0 0.0
    %4519 = vmatpush1.msra.mxu0 0.0
    %4520 = vmatprep.subr.mxu0 0.0
    %4521 = vmatpush1.msra.mxu0 0.0
    %4522 = vmatprep.subr.mxu0 0.0
    %4523 = vmatpush1.msra.mxu0 0.0
    %4524 = vmatprep.subr.mxu0 0.0
    %4525 = vmatpush1.msra.mxu0 0.0
    %4526 = vmatprep.subr.mxu0 0.0
    %4527 = vmatpush1.msra.mxu0 0.0
    %4528 = vmatprep.subr.mxu0 0.0
    %4529 = vmatpush1.msra.mxu0 0.0
    %4530 = vmatprep.subr.mxu0 0.0
    %4531 = vmatpush1.msra.mxu0 0.0
    %4532 = vmatprep.subr.mxu0 0.0
    %4533 = vmatpush1.msra.mxu0 0.0
    %4534 = vmatprep.subr.mxu0 0.0
    %4535 = vmatpush1.msra.mxu0 0.0
    %4536 = vmatprep.subr.mxu0 0.0
    %4537 = vmatpush1.msra.mxu0 0.0
    %4538 = vmatprep.subr.mxu0 0.0
    %4539 = vmatpush1.msra.mxu0 0.0
    %4540 = vmatprep.subr.mxu0 0.0
    %4541 = vmatpush1.msra.mxu0 0.0
    %4542 = vmatprep.subr.mxu0 0.0
    %4543 = vmatpush1.msra.mxu0 0.0
    %4544 = vmatprep.subr.mxu0 0.0
    %4545 = vmatpush1.msra.mxu0 0.0
    %4546 = vmatprep.subr.mxu0 0.0
    %4547 = vmatpush1.msra.mxu0 0.0
    %4548 = vmatprep.subr.mxu0 0.0
    %4549 = vmatpush1.msra.mxu0 0.0
    %4550 = vmatprep.subr.mxu0 0.0
    %4551 = vmatpush1.msra.mxu0 0.0
    %4552 = vmatprep.subr.mxu0 0.0
    %4553 = vmatpush1.msra.mxu0 0.0
    %4554 = vmatprep.subr.mxu0 0.0
    %4555 = vmatpush1.msra.mxu0 0.0
    %4556 = vmatprep.subr.mxu0 0.0
    %4557 = vmatpush1.msra.mxu0 0.0
    %4558 = vmatprep.subr.mxu0 0.0
    %4559 = vmatpush1.msra.mxu0 0.0
    %4560 = vmatprep.mubr.f32.mxu0 0.0
    %4561 = vmatmul.mubr.f32.gmra.mrb[0].mxu0 %v4491
    %v4562 = vpop.f32.mrb[0].mxu0
    %v4563 = vadd.f32 0.0, %v4562
    %v4564 = vpop.f32.mrb[0].mxu0
    %4565 = vmatprep.mubr.f32.mxu0 0.0
    %4566 = vmatmul.mubr.f32.gmra.mrb[0].mxu0 %v4494
    %v4567 = vpop.f32.mrb[0].mxu0
    %v4568 = vadd.f32 0.0, %v4567
    %v4569 = vpop.f32.mrb[0].mxu0
    %4570 = vdwg.mxu0
    %s4571 = scalar_lea.vmem %s37, 24
    %v4572 = vld [vmem:[%s4571] sm:$0xff]
    %v4574 = vsel %vm453, %v4563, 0
    %v4577 = vsel %vm453, %v4568, 0
    %4579 = vmatprep.subr.mxu0 0.0
    %4580 = vmatpush1.msra.mxu0 %v4572
    %4581 = vmatprep.subr.mxu0 0.0
    %4582 = vmatpush1.msra.mxu0 0.0
    %4583 = vmatprep.subr.mxu0 0.0
    %4584 = vmatpush1.msra.mxu0 0.0
    %4585 = vmatprep.subr.mxu0 0.0
    %4586 = vmatpush1.msra.mxu0 0.0
    %4587 = vmatprep.subr.mxu0 0.0
    %4588 = vmatpush1.msra.mxu0 0.0
    %4589 = vmatprep.subr.mxu0 0.0
    %4590 = vmatpush1.msra.mxu0 0.0
    %4591 = vmatprep.subr.mxu0 0.0
    %4592 = vmatpush1.msra.mxu0 0.0
    %4593 = vmatprep.subr.mxu0 0.0
    %4594 = vmatpush1.msra.mxu0 0.0
    %4595 = vmatprep.subr.mxu0 0.0
    %4596 = vmatpush1.msra.mxu0 0.0
    %4597 = vmatprep.subr.mxu0 0.0
    %4598 = vmatpush1.msra.mxu0 0.0
    %4599 = vmatprep.subr.mxu0 0.0
    %4600 = vmatpush1.msra.mxu0 0.0
    %4601 = vmatprep.subr.mxu0 0.0
    %4602 = vmatpush1.msra.mxu0 0.0
    %4603 = vmatprep.subr.mxu0 0.0
    %4604 = vmatpush1.msra.mxu0 0.0
    %4605 = vmatprep.subr.mxu0 0.0
    %4606 = vmatpush1.msra.mxu0 0.0
    %4607 = vmatprep.subr.mxu0 0.0
    %4608 = vmatpush1.msra.mxu0 0.0
    %4609 = vmatprep.subr.mxu0 0.0
    %4610 = vmatpush1.msra.mxu0 0.0
    %4611 = vmatprep.subr.mxu0 0.0
    %4612 = vmatpush1.msra.mxu0 0.0
    %4613 = vmatprep.subr.mxu0 0.0
    %4614 = vmatpush1.msra.mxu0 0.0
    %4615 = vmatprep.subr.mxu0 0.0
    %4616 = vmatpush1.msra.mxu0 0.0
    %4617 = vmatprep.subr.mxu0 0.0
    %4618 = vmatpush1.msra.mxu0 0.0
    %4619 = vmatprep.subr.mxu0 0.0
    %4620 = vmatpush1.msra.mxu0 0.0
    %4621 = vmatprep.subr.mxu0 0.0
    %4622 = vmatpush1.msra.mxu0 0.0
    %4623 = vmatprep.subr.mxu0 0.0
    %4624 = vmatpush1.msra.mxu0 0.0
    %4625 = vmatprep.subr.mxu0 0.0
    %4626 = vmatpush1.msra.mxu0 0.0
    %4627 = vmatprep.subr.mxu0 0.0
    %4628 = vmatpush1.msra.mxu0 0.0
    %4629 = vmatprep.subr.mxu0 0.0
    %4630 = vmatpush1.msra.mxu0 0.0
    %4631 = vmatprep.subr.mxu0 0.0
    %4632 = vmatpush1.msra.mxu0 0.0
    %4633 = vmatprep.subr.mxu0 0.0
    %4634 = vmatpush1.msra.mxu0 0.0
    %4635 = vmatprep.subr.mxu0 0.0
    %4636 = vmatpush1.msra.mxu0 0.0
    %4637 = vmatprep.subr.mxu0 0.0
    %4638 = vmatpush1.msra.mxu0 0.0
    %4639 = vmatprep.subr.mxu0 0.0
    %4640 = vmatpush1.msra.mxu0 0.0
    %4641 = vmatprep.subr.mxu0 0.0
    %4642 = vmatpush1.msra.mxu0 0.0
    %4643 = vmatprep.mubr.f32.mxu0 0.0
    %4644 = vmatmul.mubr.f32.gmra.mrb[0].mxu0 %v4574
    %v4645 = vpop.f32.mrb[0].mxu0
    %v4646 = vadd.f32 0.0, %v4645
    %v4647 = vpop.f32.mrb[0].mxu0
    %4648 = vmatprep.mubr.f32.mxu0 0.0
    %4649 = vmatmul.mubr.f32.gmra.mrb[0].mxu0 %v4577
    %v4650 = vpop.f32.mrb[0].mxu0
    %v4651 = vadd.f32 0.0, %v4650
    %v4652 = vpop.f32.mrb[0].mxu0
    %4653 = vdwg.mxu0
    %v4654 = vadd.f32 %v4098, %v4646
    %v4655 = vadd.f32 %v4099, %v4651
    %v4656 = vld [vmem:[%s39] sm:$0x1]
    %v4658 = vlaneseq
    %v4659 = vshrl.u32 %v4658, 7
    %v4660 = vsub.s32 0, %v4659
    %v4661 = vrot.slane %v4656, %v4660
    %v4663 = vadd.f32 %v4654, %v4661
    %v4664 = vadd.f32 %v4655, %v4661
    %v4665 = vadd.f32 %v2411, %v4663
    %v4666 = vadd.f32 %v2412, %v4664
    %v4667 = vsel %vm193, %v4665, 0.0
    %4668 = vadd.xlane.f32.xlu0 %v4667
    %v4669 = vpop.xlane.xlu0 %4668
    %v4670 = vsel %vm193, %v4666, 0.0
    %4671 = vadd.xlane.f32.xlu0 %v4670
    %v4672 = vpop.xlane.xlu0 %4671
    %v4673 = vmul.f32 %v4669, 0.03125
    %v4674 = vmul.f32 %v4672, 0.03125
    %v4675 = vsub.f32 %v4665, %v4673
    %v4676 = vsub.f32 %v4666, %v4674
    %v4677 = vmul.f32 %v4675, %v4675
    %v4678 = vmul.f32 %v4676, %v4676
    %v4679 = vsel %vm193, %v4677, 0.0
    %4680 = vadd.xlane.f32.xlu0 %v4679
    %v4681 = vpop.xlane.xlu0 %4680
    %v4682 = vsel %vm193, %v4678, 0.0
    %4683 = vadd.xlane.f32.xlu0 %v4682
    %v4684 = vpop.xlane.xlu0 %4683
    %v4685 = vmul.f32 %v4681, 0.03125
    %v4686 = vmul.f32 %v4684, 0.03125
    %v4687 = vadd.f32 %v4685, 1e-05
    %v4688 = vadd.f32 %v4686, 1e-05
    %v4689 = vrsqrt.pop %v4687
    %v4690 = vrsqrt.pop %v4688
    %v4691 = vmul.f32 %v4675, %v4689
    %v4692 = vmul.f32 %v4676, %v4690
    %v4693 = vld [vmem:[%s53] sm:$0x1]
    %v4695 = vlaneseq
    %v4696 = vshrl.u32 %v4695, 7
    %v4697 = vsub.s32 0, %v4696
    %v4698 = vrot.slane %v4693, %v4697
    %v4700 = vmul.f32 %v4691, %v4698
    %v4701 = vmul.f32 %v4692, %v4698
    %v4702 = vld [vmem:[%s55] sm:$0x1]
    %v4704 = vlaneseq
    %v4705 = vshrl.u32 %v4704, 7
    %v4706 = vsub.s32 0, %v4705
    %v4707 = vrot.slane %v4702, %v4706
    %v4709 = vadd.f32 %v4700, %v4707
    %v4710 = vadd.f32 %v4701, %v4707
    %v4711 = vld [vmem:[%s41] sm:$0xff]
    %v4712 = vld [vmem:[%s41 + $0x8] sm:$0xff]
    %v4713 = vld [vmem:[%s41 + $0x10] sm:$0xff]
    %v4714 = vld [vmem:[%s41 + $0x18] sm:$0xff]
    %v4715 = vld [vmem:[%s43] sm:$0x1]
    %v4717 = vlaneseq
    %v4718 = vshrl.u32 %v4717, 7
    %v4719 = vsub.s32 0, %v4718
    %v4720 = vrot.slane %v4715, %v4719
    %v4723 = vsel %vm193, %v4709, 0
    %v4726 = vsel %vm193, %v4710, 0
    %4728 = vmatprep.subr.mxu0 0.0
    %4729 = vmatpush1.msra.mxu0 %v4711
    %4730 = vmatprep.subr.mxu0 0.0
    %4731 = vmatpush1.msra.mxu0 %v4712
    %4732 = vmatprep.subr.mxu0 0.0
    %4733 = vmatpush1.msra.mxu0 %v4713
    %4734 = vmatprep.subr.mxu0 0.0
    %4735 = vmatpush1.msra.mxu0 %v4714
    %4736 = vmatprep.subr.mxu0 0.0
    %4737 = vmatpush1.msra.mxu0 0.0
    %4738 = vmatprep.subr.mxu0 0.0
    %4739 = vmatpush1.msra.mxu0 0.0
    %4740 = vmatprep.subr.mxu0 0.0
    %4741 = vmatpush1.msra.mxu0 0.0
    %4742 = vmatprep.subr.mxu0 0.0
    %4743 = vmatpush1.msra.mxu0 0.0
    %4744 = vmatprep.subr.mxu0 0.0
    %4745 = vmatpush1.msra.mxu0 0.0
    %4746 = vmatprep.subr.mxu0 0.0
    %4747 = vmatpush1.msra.mxu0 0.0
    %4748 = vmatprep.subr.mxu0 0.0
    %4749 = vmatpush1.msra.mxu0 0.0
    %4750 = vmatprep.subr.mxu0 0.0
    %4751 = vmatpush1.msra.mxu0 0.0
    %4752 = vmatprep.subr.mxu0 0.0
    %4753 = vmatpush1.msra.mxu0 0.0
    %4754 = vmatprep.subr.mxu0 0.0
    %4755 = vmatpush1.msra.mxu0 0.0
    %4756 = vmatprep.subr.mxu0 0.0
    %4757 = vmatpush1.msra.mxu0 0.0
    %4758 = vmatprep.subr.mxu0 0.0
    %4759 = vmatpush1.msra.mxu0 0.0
    %4760 = vmatprep.subr.mxu0 0.0
    %4761 = vmatpush1.msra.mxu0 0.0
    %4762 = vmatprep.subr.mxu0 0.0
    %4763 = vmatpush1.msra.mxu0 0.0
    %4764 = vmatprep.subr.mxu0 0.0
    %4765 = vmatpush1.msra.mxu0 0.0
    %4766 = vmatprep.subr.mxu0 0.0
    %4767 = vmatpush1.msra.mxu0 0.0
    %4768 = vmatprep.subr.mxu0 0.0
    %4769 = vmatpush1.msra.mxu0 0.0
    %4770 = vmatprep.subr.mxu0 0.0
    %4771 = vmatpush1.msra.mxu0 0.0
    %4772 = vmatprep.subr.mxu0 0.0
    %4773 = vmatpush1.msra.mxu0 0.0
    %4774 = vmatprep.subr.mxu0 0.0
    %4775 = vmatpush1.msra.mxu0 0.0
    %4776 = vmatprep.subr.mxu0 0.0
    %4777 = vmatpush1.msra.mxu0 0.0
    %4778 = vmatprep.subr.mxu0 0.0
    %4779 = vmatpush1.msra.mxu0 0.0
    %4780 = vmatprep.subr.mxu0 0.0
    %4781 = vmatpush1.msra.mxu0 0.0
    %4782 = vmatprep.subr.mxu0 0.0
    %4783 = vmatpush1.msra.mxu0 0.0
    %4784 = vmatprep.subr.mxu0 0.0
    %4785 = vmatpush1.msra.mxu0 0.0
    %4786 = vmatprep.subr.mxu0 0.0
    %4787 = vmatpush1.msra.mxu0 0.0
    %4788 = vmatprep.subr.mxu0 0.0
    %4789 = vmatpush1.msra.mxu0 0.0
    %4790 = vmatprep.subr.mxu0 0.0
    %4791 = vmatpush1.msra.mxu0 0.0
    %4792 = vmatprep.mubr.f32.mxu0 0.0
    %4793 = vmatmul.mubr.f32.gmra.mrb[0].mxu0 %v4723
    %v4794 = vpop.f32.mrb[0].mxu0
    %v4795 = vadd.f32 %v4720, %v4794
    %v4796 = vpop.f32.mrb[0].mxu0
    %4797 = vmatprep.mubr.f32.mxu0 0.0
    %4798 = vmatmul.mubr.f32.gmra.mrb[0].mxu0 %v4726
    %v4799 = vpop.f32.mrb[0].mxu0
    %v4800 = vadd.f32 %v4720, %v4799
    %v4801 = vpop.f32.mrb[0].mxu0
    %4802 = vdwg.mxu0
    %v4803 = vmax.f32 %v4795, 0.0
    %v4804 = vmax.f32 %v4800, 0.0
    %v4805 = vld [vmem:[%s45] sm:$0xff]
    %v4806 = vld [vmem:[%s45 + $0x8] sm:$0xff]
    %v4807 = vld [vmem:[%s45 + $0x10] sm:$0xff]
    %v4808 = vld [vmem:[%s45 + $0x18] sm:$0xff]
    %v4809 = vld [vmem:[%s45 + $0x20] sm:$0xff]
    %v4810 = vld [vmem:[%s45 + $0x28] sm:$0xff]
    %v4811 = vld [vmem:[%s45 + $0x30] sm:$0xff]
    %v4812 = vld [vmem:[%s45 + $0x38] sm:$0xff]
    %v4813 = vld [vmem:[%s47] sm:$0x1]
    %v4815 = vlaneseq
    %v4816 = vshrl.u32 %v4815, 7
    %v4817 = vsub.s32 0, %v4816
    %v4818 = vrot.slane %v4813, %v4817
    %vm4820 = vcmask 523264
    %v4822 = vsel %vm4820, %v4803, 0
    %v4825 = vsel %vm4820, %v4804, 0
    %4827 = vmatprep.subr.mxu0 0.0
    %4828 = vmatpush1.msra.mxu0 %v4805
    %4829 = vmatprep.subr.mxu0 0.0
    %4830 = vmatpush1.msra.mxu0 %v4806
    %4831 = vmatprep.subr.mxu0 0.0
    %4832 = vmatpush1.msra.mxu0 %v4807
    %4833 = vmatprep.subr.mxu0 0.0
    %4834 = vmatpush1.msra.mxu0 %v4808
    %4835 = vmatprep.subr.mxu0 0.0
    %4836 = vmatpush1.msra.mxu0 %v4809
    %4837 = vmatprep.subr.mxu0 0.0
    %4838 = vmatpush1.msra.mxu0 %v4810
    %4839 = vmatprep.subr.mxu0 0.0
    %4840 = vmatpush1.msra.mxu0 %v4811
    %4841 = vmatprep.subr.mxu0 0.0
    %4842 = vmatpush1.msra.mxu0 %v4812
    %4843 = vmatprep.subr.mxu0 0.0
    %4844 = vmatpush1.msra.mxu0 0.0
    %4845 = vmatprep.subr.mxu0 0.0
    %4846 = vmatpush1.msra.mxu0 0.0
    %4847 = vmatprep.subr.mxu0 0.0
    %4848 = vmatpush1.msra.mxu0 0.0
    %4849 = vmatprep.subr.mxu0 0.0
    %4850 = vmatpush1.msra.mxu0 0.0
    %4851 = vmatprep.subr.mxu0 0.0
    %4852 = vmatpush1.msra.mxu0 0.0
    %4853 = vmatprep.subr.mxu0 0.0
    %4854 = vmatpush1.msra.mxu0 0.0
    %4855 = vmatprep.subr.mxu0 0.0
    %4856 = vmatpush1.msra.mxu0 0.0
    %4857 = vmatprep.subr.mxu0 0.0
    %4858 = vmatpush1.msra.mxu0 0.0
    %4859 = vmatprep.subr.mxu0 0.0
    %4860 = vmatpush1.msra.mxu0 0.0
    %4861 = vmatprep.subr.mxu0 0.0
    %4862 = vmatpush1.msra.mxu0 0.0
    %4863 = vmatprep.subr.mxu0 0.0
    %4864 = vmatpush1.msra.mxu0 0.0
    %4865 = vmatprep.subr.mxu0 0.0
    %4866 = vmatpush1.msra.mxu0 0.0
    %4867 = vmatprep.subr.mxu0 0.0
    %4868 = vmatpush1.msra.mxu0 0.0
    %4869 = vmatprep.subr.mxu0 0.0
    %4870 = vmatpush1.msra.mxu0 0.0
    %4871 = vmatprep.subr.mxu0 0.0
    %4872 = vmatpush1.msra.mxu0 0.0
    %4873 = vmatprep.subr.mxu0 0.0
    %4874 = vmatpush1.msra.mxu0 0.0
    %4875 = vmatprep.subr.mxu0 0.0
    %4876 = vmatpush1.msra.mxu0 0.0
    %4877 = vmatprep.subr.mxu0 0.0
    %4878 = vmatpush1.msra.mxu0 0.0
    %4879 = vmatprep.subr.mxu0 0.0
    %4880 = vmatpush1.msra.mxu0 0.0
    %4881 = vmatprep.subr.mxu0 0.0
    %4882 = vmatpush1.msra.mxu0 0.0
    %4883 = vmatprep.subr.mxu0 0.0
    %4884 = vmatpush1.msra.mxu0 0.0
    %4885 = vmatprep.subr.mxu0 0.0
    %4886 = vmatpush1.msra.mxu0 0.0
    %4887 = vmatprep.subr.mxu0 0.0
    %4888 = vmatpush1.msra.mxu0 0.0
    %4889 = vmatprep.subr.mxu0 0.0
    %4890 = vmatpush1.msra.mxu0 0.0
    %4891 = vmatprep.mubr.f32.mxu0 0.0
    %4892 = vmatmul.mubr.f32.gmra.mrb[0].mxu0 %v4822
    %v4893 = vpop.f32.mrb[0].mxu0
    %v4894 = vadd.f32 %v4818, %v4893
    %v4895 = vpop.f32.mrb[0].mxu0
    %4896 = vmatprep.mubr.f32.mxu0 0.0
    %4897 = vmatmul.mubr.f32.gmra.mrb[0].mxu0 %v4825
    %v4898 = vpop.f32.mrb[0].mxu0
    %v4899 = vadd.f32 %v4818, %v4898
    %v4900 = vpop.f32.mrb[0].mxu0
    %4901 = vdwg.mxu0
    %v4902 = vadd.f32 %v4709, %v4894
    %v4903 = vadd.f32 %v4710, %v4899
    %v4904 = vsel %vm193, %v4902, 0.0
    %4905 = vadd.xlane.f32.xlu0 %v4904
    %v4906 = vpop.xlane.xlu0 %4905
    %v4907 = vsel %vm193, %v4903, 0.0
    %4908 = vadd.xlane.f32.xlu0 %v4907
    %v4909 = vpop.xlane.xlu0 %4908
    %v4910 = vmul.f32 %v4906, 0.03125
    %v4911 = vmul.f32 %v4909, 0.03125
    %v4912 = vsub.f32 %v4902, %v4910
    %v4913 = vsub.f32 %v4903, %v4911
    %v4914 = vmul.f32 %v4912, %v4912
    %v4915 = vmul.f32 %v4913, %v4913
    %v4916 = vsel %vm193, %v4914, 0.0
    %4917 = vadd.xlane.f32.xlu0 %v4916
    %v4918 = vpop.xlane.xlu0 %4917
    %v4919 = vsel %vm193, %v4915, 0.0
    %4920 = vadd.xlane.f32.xlu0 %v4919
    %v4921 = vpop.xlane.xlu0 %4920
    %v4922 = vmul.f32 %v4918, 0.03125
    %v4923 = vmul.f32 %v4921, 0.03125
    %v4924 = vadd.f32 %v4922, 1e-05
    %v4925 = vadd.f32 %v4923, 1e-05
    %v4926 = vrsqrt.pop %v4924
    %v4927 = vrsqrt.pop %v4925
    %v4928 = vmul.f32 %v4912, %v4926
    %v4929 = vmul.f32 %v4913, %v4927
    %v4930 = vld [vmem:[%s57] sm:$0x1]
    %v4932 = vlaneseq
    %v4933 = vshrl.u32 %v4932, 7
    %v4934 = vsub.s32 0, %v4933
    %v4935 = vrot.slane %v4930, %v4934
    %v4937 = vmul.f32 %v4928, %v4935
    %v4938 = vmul.f32 %v4929, %v4935
    %v4939 = vld [vmem:[%s59] sm:$0x1]
    %v4941 = vlaneseq
    %v4942 = vshrl.u32 %v4941, 7
    %v4943 = vsub.s32 0, %v4942
    %v4944 = vrot.slane %v4939, %v4943
    %v4946 = vadd.f32 %v4937, %v4944
    %v4947 = vadd.f32 %v4938, %v4944
    %4948 = vst.msk [vmem:[#allocation2] sm:$0xff] %vm193, %v4946
    %4949 = vst.msk [vmem:[#allocation2 + $0x8] sm:$0xff] %vm193, %v4947
    // Predicated region
    $region122: #{interactor_forward.1} parent=1 // pred_check
      _
    $region123: #{interactor_forward.1} parent=1 // pred_check_branch
      %4951 = sbr.rel (0) target = $region125
    $region124: #{interactor_forward.1} parent=1 // pred_region
      %s4953 = ssub.s32 256, 256
      %4954 = vsyncadd [#allocation3], %s4953
      %s4955 = sshll.u32 [#allocation2], 4
      %s4956 = int_to_ptr.vmem [resolvable:$true] %s4955
      %4961 = dma.vmem_to_hbm [thread:$0]  %s4956, 256, %s61, [#allocation3], 128, 128, 8
    $region125: #{interactor_forward.1} parent=1 // pred_fallthru
      _
    // Predicated region
    $region126: #{interactor_forward.1} parent=1 // pred_check
      _
    $region127: #{interactor_forward.1} parent=1 // pred_check_branch
      %4963 = sbr.rel (0) target = $region129
    $region128: #{interactor_forward.1} parent=1 // pred_region
      %4964 = dma.done [#allocation3], 256
    $region129: #{interactor_forward.1} parent=1 // pred_fallthru
      _
    %4965 = vsyncpa [#allocation3], 1

</llo_original>
